<compile_context>
chip_gen: v7x
topology: tpu7x:2x2x1
jax: 0.10.0
libtpu: 0.0.40
codegen_flags: <defaults>
</compile_context>

<pallas_src>
import functools

import jax
import jax.numpy as jnp
from jax.experimental import pallas as pl
from jax.experimental.pallas import tpu as pltpu

EXPANSION = 4
LANES = 128


def _round_up(x, m):
    return (x + m - 1) // m * m


def _pad_to(a, shape):
    return jnp.pad(a, [(0, t - s) for s, t in zip(a.shape, shape)])


# ----------------------------------------------------------------------------
# Single-buffering feature probe for grid-invariant operands
# ----------------------------------------------------------------------------
_BUFFERED1_OK = None


def _single_buffer_supported():
    """Probe (outside jit, once) whether pl.Buffered(1) lowers on this backend."""
    global _BUFFERED1_OK
    if _BUFFERED1_OK is None:
        try:
            def _probe_kernel(x_ref, y_ref, o_ref):
                o_ref[...] = x_ref[...] + y_ref[...]

            probe = pl.pallas_call(
                _probe_kernel,
                out_shape=jax.ShapeDtypeStruct((16, 128), jnp.float32),
                grid=(2,),
                in_specs=[
                    pl.BlockSpec((8, 128), lambda i: (i, 0)),
                    pl.BlockSpec((8, 128), lambda i: (0, 0),
                                 pipeline_mode=pl.Buffered(1)),
                ],
                out_specs=pl.BlockSpec((8, 128), lambda i: (i, 0)),
            )
            res = probe(jnp.ones((16, 128), jnp.float32),
                        2.0 * jnp.ones((8, 128), jnp.float32))
            res = jax.block_until_ready(res)
            if not bool(jnp.all(res == 3.0)):
                raise ValueError("Buffered(1) probe produced wrong results")
            _BUFFERED1_OK = True
        except Exception:  # pragma: no cover - fall back to double buffering
            _BUFFERED1_OK = False
    return _BUFFERED1_OK


def _const_spec(shape, index_map):
    """BlockSpec for grid-invariant operands (weights/biases).

    These blocks never change across the grid, so the default 2-deep
    pipelining only wastes VMEM (w2 is 9*Cp*Cp bf16, the downsample weight up
    to Cin*C4p -- several MB on deep ResNet layers).  Request single buffering
    when the backend supports it.
    """
    if _BUFFERED1_OK:
        return pl.BlockSpec(shape, index_map, pipeline_mode=pl.Buffered(1))
    return pl.BlockSpec(shape, index_map)


# ----------------------------------------------------------------------------
# Kernel 1: conv1 (1x1) with folded BN1 + ReLU  ==  relu(a @ w + b)
# ----------------------------------------------------------------------------
def _conv1x1_kernel(a_ref, w_ref, b_ref, o_ref):
    acc = jnp.dot(a_ref[...], w_ref[...], preferred_element_type=jnp.float32)
    o_ref[...] = jnp.maximum(acc + b_ref[...], 0.0).astype(o_ref.dtype)


def conv1x1_bn_relu(a, w, b, *, tm=1024):
    """a: (M, K) bf16, w: (K, C) bf16 (BN scale folded), b: (1, C) f32 -> (M, C) bf16."""
    M, K = a.shape
    C = w.shape[1]
    tm = min(tm, _round_up(M, 8))
    # Note: pl.cdiv tail blocks read rows past M for `a`; those garbage rows
    # never reach HBM (masked on store) and the math here is NaN-safe.
    return pl.pallas_call(
        _conv1x1_kernel,
        out_shape=jax.ShapeDtypeStruct((M, C), jnp.bfloat16),
        grid=(pl.cdiv(M, tm),),
        in_specs=[
            pl.BlockSpec((tm, K), lambda i: (i, 0)),
            _const_spec((K, C), lambda i: (0, 0)),
            _const_spec((1, C), lambda i: (0, 0)),
        ],
        out_specs=pl.BlockSpec((tm, C), lambda i: (i, 0)),
        compiler_params=pltpu.CompilerParams(
            dimension_semantics=("parallel",),
            vmem_limit_bytes=32 * 1024 * 1024,
        ),
    )(a, w, b)


# ----------------------------------------------------------------------------
# Kernel 2: conv2 (3x3, stride) + BN2 + ReLU -> conv3 (1x1) + BN3
#           -> + shortcut (1x1 conv + BN downsample, or identity add) -> ReLU?
#
# The conv2 input arrives as s*s phase planes of the zero-padded conv1 output,
# each flattened to (Hpp*Wpp, Cp) in bf16.  Tap (ky, kx) is a *contiguous*
# slice of one phase plane at static offset (ky//s)*Wpp + (kx//s); accumulator
# rows are indexed q = y*Wpp + x, and columns x >= Wo are garbage sliced off
# after the call (flattened implicit-GEMM trick, no im2col in HBM).
# ----------------------------------------------------------------------------
def _stage23_kernel(xs_ref, r_ref, w2_ref, b2_ref, w3_ref, b3_ref, *rest,
                    stride, Wpp, relu_out, has_downsample):
    if has_downsample:
        wr_ref, br_ref, o_ref = rest
    else:
        (o_ref,) = rest

    s = stride
    Mo = o_ref.shape[1]
    Cp = w2_ref.shape[-1]

    # conv2 as 9 shifted accumulating MXU matmuls.  The bf16 phase plane is
    # unpacked to f32 once, so the statically shifted row windows are sliced on
    # the unpacked (8,128) layout; taps are cast back to bf16 at the dot.
    acc = jnp.zeros((Mo, Cp), jnp.float32)
    for ph_r in range(s):
        for ph_c in range(s):
            plane = xs_ref[0, ph_r, ph_c].astype(jnp.float32)
            for ky in range(ph_r, 3, s):
                for kx in range(ph_c, 3, s):
                    off = (ky // s) * Wpp + (kx // s)
                    patch = plane[off:off + Mo, :].astype(jnp.bfloat16)
                    acc = acc + jnp.dot(patch, w2_ref[ky, kx],
                                        preferred_element_type=jnp.float32)

    # BN2 (folded scale) + ReLU, then conv3 (1x1) + BN3.
    h = jnp.maximum(acc + b2_ref[...], 0.0).astype(jnp.bfloat16)
    out = jnp.dot(h, w3_ref[...], preferred_element_type=jnp.float32) + b3_ref[...]

    if has_downsample:
        # Fused shortcut: downsample 1x1 conv + BN.
        out = out + jnp.dot(r_ref[0], wr_ref[...],
                            preferred_element_type=jnp.float32) + br_ref[...]
    else:
        # Identity shortcut: plain elementwise residual add (no matmul).
        out = out + r_ref[0].astype(jnp.float32)

    if relu_out:
        out = jnp.maximum(out, 0.0)
    o_ref[0] = out.astype(o_ref.dtype)


def bottleneck_stage23(xs, r, w2, b2, w3, b3, wr, br, *, stride, Ho, Wpp,
                       relu_out):
    N = xs.shape[0]
    s = stride
    HWpp = xs.shape[3]
    Cp = xs.shape[-1]
    C4p = w3.shape[-1]
    Mo = Ho * Wpp
    has_down = wr is not None

    kernel = functools.partial(_stage23_kernel, stride=s, Wpp=Wpp,
                               relu_out=relu_out, has_downsample=has_down)
    in_specs = [
        pl.BlockSpec((1, s, s, HWpp, Cp), lambda n: (n, 0, 0, 0, 0)),
        pl.BlockSpec((1, Mo, r.shape[-1]), lambda n: (n, 0, 0)),
        _const_spec(w2.shape, lambda n: (0, 0, 0, 0)),
        _const_spec(b2.shape, lambda n: (0, 0)),
        _const_spec(w3.shape, lambda n: (0, 0)),
        _const_spec(b3.shape, lambda n: (0, 0)),
    ]
    args = [xs, r, w2, b2, w3, b3]
    if has_down:
        in_specs += [_const_spec(wr.shape, lambda n: (0, 0)),
                     _const_spec(br.shape, lambda n: (0, 0))]
        args += [wr, br]

    return pl.pallas_call(
        kernel,
        out_shape=jax.ShapeDtypeStruct((N, Mo, C4p), jnp.bfloat16),
        grid=(N,),
        in_specs=in_specs,
        out_specs=pl.BlockSpec((1, Mo, C4p), lambda n: (n, 0, 0)),
        compiler_params=pltpu.CompilerParams(
            dimension_semantics=("parallel",),
            # 48 MiB: plenty for per-image blocks while leaving headroom for
            # double buffers / compiler temporaries on v7x's 64 MiB per TC.
            vmem_limit_bytes=48 * 1024 * 1024,
        ),
    )(*args)


# ----------------------------------------------------------------------------
# Bottleneck parameters (deterministic init, inference-mode BN folded)
# ----------------------------------------------------------------------------
def make_bottleneck_params(key, in_planes, planes, stride, use_bn_layer=True,
                           eps=1e-5):
    out_planes = EXPANSION * planes
    Cinp = _round_up(in_planes, 8)       # padded contraction width of 1x1 convs
    Cp = _round_up(planes, LANES)
    C4p = _round_up(out_planes, LANES)
    ks = jax.random.split(key, 8)

    def bn_fold(k, c):
        if not use_bn_layer:  # nn.Identity()
            return jnp.ones((c,), jnp.float32), jnp.zeros((c,), jnp.float32)
        k1, k2, k3, k4 = jax.random.split(k, 4)
        gamma = 1.0 + 0.1 * jax.random.normal(k1, (c,), jnp.float32)
        beta = 0.1 * jax.random.normal(k2, (c,), jnp.float32)
        mean = 0.05 * jax.random.normal(k3, (c,), jnp.float32)
        var = 1.0 + 0.1 * jax.random.uniform(k4, (c,), jnp.float32)
        scale = gamma * jax.lax.rsqrt(var + eps)
        return scale, beta - mean * scale

    w1 = 0.2 * jax.random.normal(ks[0], (in_planes, planes), jnp.float32)
    w2 = 0.1 * jax.random.normal(ks[1], (3, 3, planes, planes), jnp.float32)
    w3 = 0.1 * jax.random.normal(ks[2], (planes, out_planes), jnp.float32)
    s1, b1 = bn_fold(ks[3], planes)
    s2, b2 = bn_fold(ks[4], planes)
    s3, b3 = bn_fold(ks[5], out_planes)

    # Fold BN scales into conv weight columns.
    w1f = w1 * s1[None, :]
    w2f = w2 * s2[None, None, None, :]
    w3f = w3 * s3[None, :]

    p = {
        # reference (HWIO) folded weights + f32 biases
        "ref_w1": w1f[None, None], "ref_w2": w2f, "ref_w3": w3f[None, None],
        "b1": b1, "b2": b2, "b3": b3,
        # kernel-side: channel-padded (lane-dense), bf16 weights, f32 biases
        "w1p": _pad_to(w1f, (Cinp, Cp)).astype(jnp.bfloat16),
        "b1p": _pad_to(b1, (Cp,)).reshape(1, Cp),
        "w2p": _pad_to(w2f, (3, 3, Cp, Cp)).astype(jnp.bfloat16),
        "b2p": _pad_to(b2, (Cp,)).reshape(1, Cp),
        "w3p": _pad_to(w3f, (Cp, C4p)).astype(jnp.bfloat16),
        "b3p": _pad_to(b3, (C4p,)).reshape(1, C4p),
    }

    if stride != 1 or in_planes != out_planes:
        wd = 0.2 * jax.random.normal(ks[6], (in_planes, out_planes), jnp.float32)
        sd, bd = bn_fold(ks[7], out_planes)
        wdf = wd * sd[None, :]
        p["ref_wd"] = wdf[None, None]
        p["bd"] = bd
        p["wrp"] = _pad_to(wdf, (Cinp, C4p)).astype(jnp.bfloat16)
        p["brp"] = _pad_to(bd, (C4p,)).reshape(1, C4p)
    # Identity shortcut: no extra params; the stage-2/3 kernel does a plain
    # elementwise residual add (the previous identity-embedding matmul roughly
    # doubled conv3's MXU work on the majority of ResNet blocks).
    return p


# ----------------------------------------------------------------------------
# Bottleneck forward
# ----------------------------------------------------------------------------
def bottleneck_forward(x, p, planes, stride, no_relu=False):
    """x: (N, H, W, in_planes) NHWC f32 -> (N, Ho, Wo, 4*planes) NHWC bf16."""
    N, H, W, Cin = x.shape
    out_planes = EXPANSION * planes
    Cinp = p["w1p"].shape[0]
    Cp = p["w1p"].shape[1]
    C4p = p["w3p"].shape[1]
    s = stride
    Ho = (H - 1) // s + 1
    Wo = (W - 1) // s + 1
    has_down = "wrp" in p

    x16 = x.astype(jnp.bfloat16)
    if Cinp != Cin:
        x16 = jnp.pad(x16, ((0, 0), (0, 0), (0, 0), (0, Cinp - Cin)))

    # --- stage 1: conv1 (1x1) + BN1 + ReLU as a lane-dense fused matmul kernel.
    out1 = conv1x1_bn_relu(x16.reshape(N * H * W, Cinp), p["w1p"], p["b1p"])
    out1 = out1.reshape(N, H, W, Cp)

    # --- phase-decomposed, zero-padded conv1 output, kept in bf16 (half the
    #     HBM bytes of an f32 intermediate; single glue pass, no 9x im2col).
    #     ext = max(ky // s) over the 3x3 taps; each phase plane needs
    #     Ho + ext rows for valid outputs plus 1 row of slack so the flattened
    #     tap window [off : off + Mo] stays in-bounds for the garbage columns.
    ext = 2 // s
    Hpp = Ho + ext + (1 if ext else 0)
    Wpp = _round_up(Wo + ext + 1, 8)
    xp = jnp.pad(out1,
                 ((0, 0), (1, s * Hpp - H - 1), (1, s * Wpp - W - 1), (0, 0)))
    xs = xp.reshape(N, Hpp, s, Wpp, s, Cp).transpose(0, 2, 4, 1, 3, 5)
    xs = xs.reshape(N, s, s, Hpp * Wpp, Cp)

    # --- shortcut source, laid out with the same (Ho, Wpp)-flattened row
    #     stride as the stage-2/3 accumulator.
    Mo = Ho * Wpp
    if has_down:
        rc = x16[:, ::s, ::s, :]
        rc = jnp.pad(rc, ((0, 0), (0, 0), (0, Wpp - Wo), (0, 0)))
        r_in = rc.reshape(N, Mo, Cinp)
        wr, br = p["wrp"], p["brp"]
    else:
        # Identity shortcut (stride == 1, in_planes == 4*planes): channel-pad
        # the bf16 residual and add it elementwise inside the kernel.
        rc = jnp.pad(x16, ((0, 0), (0, 0), (0, Wpp - Wo), (0, C4p - Cinp)))
        r_in = rc.reshape(N, Mo, C4p)
        wr = br = None

    # --- stage 2+3: conv2(3x3,s)+BN2+ReLU -> conv3(1x1)+BN3 -> +shortcut -> ReLU?
    out_full = bottleneck_stage23(
        xs, r_in, p["w2p"], p["b2p"], p["w3p"], p["b3p"], wr, br,
        stride=s, Ho=Ho, Wpp=Wpp, relu_out=not no_relu)

    return out_full.reshape(N, Ho, Wpp, C4p)[:, :, :Wo, :out_planes]


# ----------------------------------------------------------------------------
# Pure-JAX (lax conv) reference mirroring the kernel's bf16/f32 numerics
# ----------------------------------------------------------------------------
def ref_forward(x, p, stride, no_relu=False):
    def conv(h, w_hwio, strd, pad):
        return jax.lax.conv_general_dilated(
            h.astype(jnp.bfloat16), w_hwio.astype(jnp.bfloat16),
            (strd, strd), [(pad, pad), (pad, pad)],
            dimension_numbers=("NHWC", "HWIO", "NHWC"),
            preferred_element_type=jnp.float32)

    out = jnp.maximum(conv(x, p["ref_w1"], 1, 0) + p["b1"], 0.0)
    out = jnp.maximum(conv(out, p["ref_w2"], stride, 1) + p["b2"], 0.0)
    out = conv(out, p["ref_w3"], 1, 0) + p["b3"]
    if "ref_wd" in p:
        res = conv(x, p["ref_wd"], stride, 0) + p["bd"]
    else:
        res = x.astype(jnp.bfloat16).astype(jnp.float32)
    out = out + res
    return out if no_relu else jnp.maximum(out, 0.0)


# ----------------------------------------------------------------------------
if __name__ == "__main__":
    _single_buffer_supported()  # probe once, outside jit

    key = jax.random.PRNGKey(0)
    kx1, kx2, kp1, kp2 = jax.random.split(key, 4)
    fwd = jax.jit(bottleneck_forward, static_argnums=(2, 3, 4))

    # Kernel emits bf16 activations (next block consumes bf16), so compare at
    # bf16-level tolerances against the f32 reference.
    ATOL = RTOL = 2e-2

    # Config 1: stride=2, in_planes != 4*planes -> 1x1-conv + BN downsample path.
    N, H, W = 2, 16, 16
    in_planes, planes, stride = 4, 8, 2
    x = jax.random.normal(kx1, (N, H, W, in_planes), jnp.float32)
    params = make_bottleneck_params(kp1, in_planes, planes, stride)
    out = jax.block_until_ready(fwd(x, params, planes, stride, False))
    ref = ref_forward(x, params, stride, False)
    assert out.shape == (N, 8, 8, EXPANSION * planes), out.shape
    out_f = out.astype(jnp.float32)
    err1 = float(jnp.max(jnp.abs(out_f - ref)))
    assert jnp.allclose(out_f, ref, atol=ATOL, rtol=RTOL), err1

    # Config 2: stride=1, in_planes == 4*planes -> identity shortcut, no_relu=True.
    in2, planes2, stride2 = 32, 8, 1
    x2 = jax.random.normal(kx2, (N, H, W, in2), jnp.float32)
    params2 = make_bottleneck_params(kp2, in2, planes2, stride2)
    out2 = jax.block_until_ready(fwd(x2, params2, planes2, stride2, True))
    ref2 = ref_forward(x2, params2, stride2, True)
    assert out2.shape == (N, H, W, EXPANSION * planes2), out2.shape
    out2_f = out2.astype(jnp.float32)
    err2 = float(jnp.max(jnp.abs(out2_f - ref2)))
    assert jnp.allclose(out2_f, ref2, atol=ATOL, rtol=RTOL), err2

    print("KERNEL_OK")
</pallas_src>

<mosaic_0001>
module attributes {stable_mosaic.version = 11 : i64} {
  func.func @_probe_kernel(%arg0: i32, %arg1: memref<8x128xf32, #tpu.memory_space<vmem>>, %arg2: memref<8x128xf32, #tpu.memory_space<vmem>>, %arg3: memref<8x128xf32, #tpu.memory_space<vmem>>) attributes {dimension_semantics = [#tpu.dimension_semantics<arbitrary>], iteration_bounds = array<i64: 2>, scalar_prefetch = 0 : i64, scratch_operands = 0 : i64, tpu.core_type = #tpu.core_type<tc>, window_params = [{transform_indices = @transform_0, window_bounds = array<i64: 8, 128>}, {pipeline_mode = #tpu.pipeline_mode<synchronous>, transform_indices = @transform_1, window_bounds = array<i64: 8, 128>}, {transform_indices = @transform_2, window_bounds = array<i64: 8, 128>}]} {
    %c0 = arith.constant 0 : index
    %c0_0 = arith.constant 0 : index
    %0 = vector.load %arg1[%c0, %c0_0] : memref<8x128xf32, #tpu.memory_space<vmem>>, vector<8x128xf32>
    %c0_1 = arith.constant 0 : index
    %c0_2 = arith.constant 0 : index
    %1 = vector.load %arg2[%c0_1, %c0_2] : memref<8x128xf32, #tpu.memory_space<vmem>>, vector<8x128xf32>
    %2 = arith.addf %0, %1 : vector<8x128xf32>
    %c0_3 = arith.constant 0 : index
    %c0_4 = arith.constant 0 : index
    %3 = vector.load %arg3[%c0_3, %c0_4] : memref<8x128xf32, #tpu.memory_space<vmem>>, vector<8x128xf32>
    tpu.vector_store %arg3[%c0_3, %c0_4], %2 {strides = array<i32>} : memref<8x128xf32, #tpu.memory_space<vmem>>, vector<8x128xf32>,
    return
  }
  func.func @transform_0(%arg0: i32) -> (i32, i32) {
    %c0_i32 = arith.constant 0 : i32
    %c0_i32_0 = arith.constant 0 : i32
    return %arg0, %c0_i32 : i32, i32
  }
  func.func @transform_1(%arg0: i32) -> (i32, i32) {
    %c0_i32 = arith.constant 0 : i32
    %c0_i32_0 = arith.constant 0 : i32
    %c0_i32_1 = arith.constant 0 : i32
    return %c0_i32, %c0_i32_0 : i32, i32
  }
  func.func @transform_2(%arg0: i32) -> (i32, i32) {
    %c0_i32 = arith.constant 0 : i32
    %c0_i32_0 = arith.constant 0 : i32
    return %arg0, %c0_i32 : i32, i32
  }
}

module attributes {stable_mosaic.version = 11 : i64} {
  func.func @_conv1x1_kernel(%arg0: i32, %arg1: memref<512x8xbf16, #tpu.memory_space<vmem>>, %arg2: memref<8x128xbf16, #tpu.memory_space<vmem>>, %arg3: memref<1x128xf32, #tpu.memory_space<vmem>>, %arg4: memref<512x128xbf16, #tpu.memory_space<vmem>>) attributes {dimension_semantics = [#tpu.dimension_semantics<parallel>], iteration_bounds = array<i64: 1>, scalar_prefetch = 0 : i64, scratch_operands = 0 : i64, tpu.core_type = #tpu.core_type<tc>, window_params = [{transform_indices = @transform_0, window_bounds = array<i64: 512, 8>}, {pipeline_mode = #tpu.pipeline_mode<synchronous>, transform_indices = @transform_1, window_bounds = array<i64: 8, 128>}, {pipeline_mode = #tpu.pipeline_mode<synchronous>, transform_indices = @transform_2, window_bounds = array<i64: 1, 128>}, {transform_indices = @transform_3, window_bounds = array<i64: 512, 128>}]} {
    %c0 = arith.constant 0 : index
    %c0_0 = arith.constant 0 : index
    %0 = vector.load %arg1[%c0, %c0_0] : memref<512x8xbf16, #tpu.memory_space<vmem>>, vector<512x8xbf16>
    %c0_1 = arith.constant 0 : index
    %c0_2 = arith.constant 0 : index
    %1 = vector.load %arg2[%c0_1, %c0_2] : memref<8x128xbf16, #tpu.memory_space<vmem>>, vector<8x128xbf16>
    %cst = arith.constant dense<0.000000e+00> : vector<512x128xf32>
    %2 = tpu.matmul %0, %1, %cst {dimension_numbers = #tpu.dot_dimension_numbers<[1], [0], [0], [1], [0, 0, 1, 1], [], []>} : vector<512x8xbf16>, vector<8x128xbf16>, vector<512x128xf32> -> vector<512x128xf32>
    %c0_3 = arith.constant 0 : index
    %c0_4 = arith.constant 0 : index
    %3 = vector.load %arg3[%c0_3, %c0_4] : memref<1x128xf32, #tpu.memory_space<vmem>>, vector<1x128xf32>
    %4 = vector.broadcast %3 : vector<1x128xf32> to vector<512x128xf32>
    %5 = arith.addf %2, %4 : vector<512x128xf32>
    %cst_5 = arith.constant 0.000000e+00 : f32
    %6 = vector.broadcast %cst_5 : f32 to vector<512x128xf32>
    %7 = arith.maximumf %5, %6 : vector<512x128xf32>
    %8 = arith.truncf %7 : vector<512x128xf32> to vector<512x128xbf16>
    %c0_6 = arith.constant 0 : index
    %c0_7 = arith.constant 0 : index
    %9 = vector.load %arg4[%c0_6, %c0_7] : memref<512x128xbf16, #tpu.memory_space<vmem>>, vector<512x128xbf16>
    tpu.vector_store %arg4[%c0_6, %c0_7], %8 {strides = array<i32>} : memref<512x128xbf16, #tpu.memory_space<vmem>>, vector<512x128xbf16>,
    return
  }
  func.func @transform_0(%arg0: i32) -> (i32, i32) {
    %c0_i32 = arith.constant 0 : i32
    %c0_i32_0 = arith.constant 0 : i32
    return %arg0, %c0_i32 : i32, i32
  }
  func.func @transform_1(%arg0: i32) -> (i32, i32) {
    %c0_i32 = arith.constant 0 : i32
    %c0_i32_0 = arith.constant 0 : i32
    %c0_i32_1 = arith.constant 0 : i32
    return %c0_i32, %c0_i32_0 : i32, i32
  }
  func.func @transform_2(%arg0: i32) -> (i32, i32) {
    %c0_i32 = arith.constant 0 : i32
    %c0_i32_0 = arith.constant 0 : i32
    %c0_i32_1 = arith.constant 0 : i32
    return %c0_i32, %c0_i32_0 : i32, i32
  }
  func.func @transform_3(%arg0: i32) -> (i32, i32) {
    %c0_i32 = arith.constant 0 : i32
    %c0_i32_0 = arith.constant 0 : i32
    return %arg0, %c0_i32 : i32, i32
  }
}

module attributes {stable_mosaic.version = 11 : i64} {
  func.func @_stage23_kernel(%arg0: i32, %arg1: memref<1x2x2x160x128xbf16, #tpu.memory_space<vmem>>, %arg2: memref<1x128x8xbf16, #tpu.memory_space<vmem>>, %arg3: memref<3x3x128x128xbf16, #tpu.memory_space<vmem>>, %arg4: memref<1x128xf32, #tpu.memory_space<vmem>>, %arg5: memref<128x128xbf16, #tpu.memory_space<vmem>>, %arg6: memref<1x128xf32, #tpu.memory_space<vmem>>, %arg7: memref<8x128xbf16, #tpu.memory_space<vmem>>, %arg8: memref<1x128xf32, #tpu.memory_space<vmem>>, %arg9: memref<1x128x128xbf16, #tpu.memory_space<vmem>>) attributes {dimension_semantics = [#tpu.dimension_semantics<parallel>], iteration_bounds = array<i64: 2>, scalar_prefetch = 0 : i64, scratch_operands = 0 : i64, tpu.core_type = #tpu.core_type<tc>, window_params = [{transform_indices = @transform_0, window_bounds = array<i64: 1, 2, 2, 160, 128>}, {transform_indices = @transform_1, window_bounds = array<i64: 1, 128, 8>}, {pipeline_mode = #tpu.pipeline_mode<synchronous>, transform_indices = @transform_2, window_bounds = array<i64: 3, 3, 128, 128>}, {pipeline_mode = #tpu.pipeline_mode<synchronous>, transform_indices = @transform_3, window_bounds = array<i64: 1, 128>}, {pipeline_mode = #tpu.pipeline_mode<synchronous>, transform_indices = @transform_4, window_bounds = array<i64: 128, 128>}, {pipeline_mode = #tpu.pipeline_mode<synchronous>, transform_indices = @transform_5, window_bounds = array<i64: 1, 128>}, {pipeline_mode = #tpu.pipeline_mode<synchronous>, transform_indices = @transform_6, window_bounds = array<i64: 8, 128>}, {pipeline_mode = #tpu.pipeline_mode<synchronous>, transform_indices = @transform_7, window_bounds = array<i64: 1, 128>}, {transform_indices = @transform_8, window_bounds = array<i64: 1, 128, 128>}]} {
    %cst = arith.constant 0.000000e+00 : f32
    %0 = vector.broadcast %cst : f32 to vector<128x128xf32>
    %c0 = arith.constant 0 : index
    %c0_0 = arith.constant 0 : index
    %c0_1 = arith.constant 0 : index
    %c0_2 = arith.constant 0 : index
    %c0_3 = arith.constant 0 : index
    %1 = vector.load %arg1[%c0, %c0_0, %c0_1, %c0_2, %c0_3] : memref<1x2x2x160x128xbf16, #tpu.memory_space<vmem>>, vector<1x1x1x160x128xbf16>
    %2 = vector.shape_cast %1 : vector<1x1x1x160x128xbf16> to vector<160x128xbf16>
    %3 = arith.extf %2 : vector<160x128xbf16> to vector<160x128xf32>
    %4 = vector.extract_strided_slice %3 {offsets = [0, 0], sizes = [128, 128], strides = [1, 1]} : vector<160x128xf32> to vector<128x128xf32>
    %5 = arith.truncf %4 : vector<128x128xf32> to vector<128x128xbf16>
    %c0_4 = arith.constant 0 : index
    %c0_5 = arith.constant 0 : index
    %c0_6 = arith.constant 0 : index
    %c0_7 = arith.constant 0 : index
    %6 = vector.load %arg3[%c0_4, %c0_5, %c0_6, %c0_7] : memref<3x3x128x128xbf16, #tpu.memory_space<vmem>>, vector<1x1x128x128xbf16>
    %7 = vector.shape_cast %6 : vector<1x1x128x128xbf16> to vector<128x128xbf16>
    %cst_8 = arith.constant dense<0.000000e+00> : vector<128x128xf32>
    %8 = tpu.matmul %5, %7, %cst_8 {dimension_numbers = #tpu.dot_dimension_numbers<[1], [0], [0], [1], [0, 0, 1, 1], [], []>} : vector<128x128xbf16>, vector<128x128xbf16>, vector<128x128xf32> -> vector<128x128xf32>
    %9 = arith.addf %0, %8 : vector<128x128xf32>
    %10 = vector.extract_strided_slice %3 {offsets = [1, 0], sizes = [128, 128], strides = [1, 1]} : vector<160x128xf32> to vector<128x128xf32>
    %11 = arith.truncf %10 : vector<128x128xf32> to vector<128x128xbf16>
    %c0_9 = arith.constant 0 : index
    %c2 = arith.constant 2 : index
    %c0_10 = arith.constant 0 : index
    %c0_11 = arith.constant 0 : index
    %12 = vector.load %arg3[%c0_9, %c2, %c0_10, %c0_11] : memref<3x3x128x128xbf16, #tpu.memory_space<vmem>>, vector<1x1x128x128xbf16>
    %13 = vector.shape_cast %12 : vector<1x1x128x128xbf16> to vector<128x128xbf16>
    %cst_12 = arith.constant dense<0.000000e+00> : vector<128x128xf32>
    %14 = tpu.matmul %11, %13, %cst_12 {dimension_numbers = #tpu.dot_dimension_numbers<[1], [0], [0], [1], [0, 0, 1, 1], [], []>} : vector<128x128xbf16>, vector<128x128xbf16>, vector<128x128xf32> -> vector<128x128xf32>
    %15 = arith.addf %9, %14 : vector<128x128xf32>
    %16 = vector.extract_strided_slice %3 {offsets = [16, 0], sizes = [128, 128], strides = [1, 1]} : vector<160x128xf32> to vector<128x128xf32>
    %17 = arith.truncf %16 : vector<128x128xf32> to vector<128x128xbf16>
    %c2_13 = arith.constant 2 : index
    %c0_14 = arith.constant 0 : index
    %c0_15 = arith.constant 0 : index
    %c0_16 = arith.constant 0 : index
    %18 = vector.load %arg3[%c2_13, %c0_14, %c0_15, %c0_16] : memref<3x3x128x128xbf16, #tpu.memory_space<vmem>>, vector<1x1x128x128xbf16>
    %19 = vector.shape_cast %18 : vector<1x1x128x128xbf16> to vector<128x128xbf16>
    %cst_17 = arith.constant dense<0.000000e+00> : vector<128x128xf32>
    %20 = tpu.matmul %17, %19, %cst_17 {dimension_numbers = #tpu.dot_dimension_numbers<[1], [0], [0], [1], [0, 0, 1, 1], [], []>} : vector<128x128xbf16>, vector<128x128xbf16>, vector<128x128xf32> -> vector<128x128xf32>
    %21 = arith.addf %15, %20 : vector<128x128xf32>
    %22 = vector.extract_strided_slice %3 {offsets = [17, 0], sizes = [128, 128], strides = [1, 1]} : vector<160x128xf32> to vector<128x128xf32>
    %23 = arith.truncf %22 : vector<128x128xf32> to vector<128x128xbf16>
    %c2_18 = arith.constant 2 : index
    %c2_19 = arith.constant 2 : index
    %c0_20 = arith.constant 0 : index
    %c0_21 = arith.constant 0 : index
    %24 = vector.load %arg3[%c2_18, %c2_19, %c0_20, %c0_21] : memref<3x3x128x128xbf16, #tpu.memory_space<vmem>>, vector<1x1x128x128xbf16>
    %25 = vector.shape_cast %24 : vector<1x1x128x128xbf16> to vector<128x128xbf16>
    %cst_22 = arith.constant dense<0.000000e+00> : vector<128x128xf32>
    %26 = tpu.matmul %23, %25, %cst_22 {dimension_numbers = #tpu.dot_dimension_numbers<[1], [0], [0], [1], [0, 0, 1, 1], [], []>} : vector<128x128xbf16>, vector<128x128xbf16>, vector<128x128xf32> -> vector<128x128xf32>
    %27 = arith.addf %21, %26 : vector<128x128xf32>
    %c0_23 = arith.constant 0 : index
    %c0_24 = arith.constant 0 : index
    %c1 = arith.constant 1 : index
    %c0_25 = arith.constant 0 : index
    %c0_26 = arith.constant 0 : index
    %28 = vector.load %arg1[%c0_23, %c0_24, %c1, %c0_25, %c0_26] : memref<1x2x2x160x128xbf16, #tpu.memory_space<vmem>>, vector<1x1x1x160x128xbf16>
    %29 = vector.shape_cast %28 : vector<1x1x1x160x128xbf16> to vector<160x128xbf16>
    %30 = arith.extf %29 : vector<160x128xbf16> to vector<160x128xf32>
    %31 = vector.extract_strided_slice %30 {offsets = [0, 0], sizes = [128, 128], strides = [1, 1]} : vector<160x128xf32> to vector<128x128xf32>
    %32 = arith.truncf %31 : vector<128x128xf32> to vector<128x128xbf16>
    %c0_27 = arith.constant 0 : index
    %c1_28 = arith.constant 1 : index
    %c0_29 = arith.constant 0 : index
    %c0_30 = arith.constant 0 : index
    %33 = vector.load %arg3[%c0_27, %c1_28, %c0_29, %c0_30] : memref<3x3x128x128xbf16, #tpu.memory_space<vmem>>, vector<1x1x128x128xbf16>
    %34 = vector.shape_cast %33 : vector<1x1x128x128xbf16> to vector<128x128xbf16>
    %cst_31 = arith.constant dense<0.000000e+00> : vector<128x128xf32>
    %35 = tpu.matmul %32, %34, %cst_31 {dimension_numbers = #tpu.dot_dimension_numbers<[1], [0], [0], [1], [0, 0, 1, 1], [], []>} : vector<128x128xbf16>, vector<128x128xbf16>, vector<128x128xf32> -> vector<128x128xf32>
    %36 = arith.addf %27, %35 : vector<128x128xf32>
    %37 = vector.extract_strided_slice %30 {offsets = [16, 0], sizes = [128, 128], strides = [1, 1]} : vector<160x128xf32> to vector<128x128xf32>
    %38 = arith.truncf %37 : vector<128x128xf32> to vector<128x128xbf16>
    %c2_32 = arith.constant 2 : index
    %c1_33 = arith.constant 1 : index
    %c0_34 = arith.constant 0 : index
    %c0_35 = arith.constant 0 : index
    %39 = vector.load %arg3[%c2_32, %c1_33, %c0_34, %c0_35] : memref<3x3x128x128xbf16, #tpu.memory_space<vmem>>, vector<1x1x128x128xbf16>
    %40 = vector.shape_cast %39 : vector<1x1x128x128xbf16> to vector<128x128xbf16>
    %cst_36 = arith.constant dense<0.000000e+00> : vector<128x128xf32>
    %41 = tpu.matmul %38, %40, %cst_36 {dimension_numbers = #tpu.dot_dimension_numbers<[1], [0], [0], [1], [0, 0, 1, 1], [], []>} : vector<128x128xbf16>, vector<128x128xbf16>, vector<128x128xf32> -> vector<128x128xf32>
    %42 = arith.addf %36, %41 : vector<128x128xf32>
    %c0_37 = arith.constant 0 : index
    %c1_38 = arith.constant 1 : index
    %c0_39 = arith.constant 0 : index
    %c0_40 = arith.constant 0 : index
    %c0_41 = arith.constant 0 : index
    %43 = vector.load %arg1[%c0_37, %c1_38, %c0_39, %c0_40, %c0_41] : memref<1x2x2x160x128xbf16, #tpu.memory_space<vmem>>, vector<1x1x1x160x128xbf16>
    %44 = vector.shape_cast %43 : vector<1x1x1x160x128xbf16> to vector<160x128xbf16>
    %45 = arith.extf %44 : vector<160x128xbf16> to vector<160x128xf32>
    %46 = vector.extract_strided_slice %45 {offsets = [0, 0], sizes = [128, 128], strides = [1, 1]} : vector<160x128xf32> to vector<128x128xf32>
    %47 = arith.truncf %46 : vector<128x128xf32> to vector<128x128xbf16>
    %c1_42 = arith.constant 1 : index
    %c0_43 = arith.constant 0 : index
    %c0_44 = arith.constant 0 : index
    %c0_45 = arith.constant 0 : index
    %48 = vector.load %arg3[%c1_42, %c0_43, %c0_44, %c0_45] : memref<3x3x128x128xbf16, #tpu.memory_space<vmem>>, vector<1x1x128x128xbf16>
    %49 = vector.shape_cast %48 : vector<1x1x128x128xbf16> to vector<128x128xbf16>
    %cst_46 = arith.constant dense<0.000000e+00> : vector<128x128xf32>
    %50 = tpu.matmul %47, %49, %cst_46 {dimension_numbers = #tpu.dot_dimension_numbers<[1], [0], [0], [1], [0, 0, 1, 1], [], []>} : vector<128x128xbf16>, vector<128x128xbf16>, vector<128x128xf32> -> vector<128x128xf32>
    %51 = arith.addf %42, %50 : vector<128x128xf32>
    %52 = vector.extract_strided_slice %45 {offsets = [1, 0], sizes = [128, 128], strides = [1, 1]} : vector<160x128xf32> to vector<128x128xf32>
    %53 = arith.truncf %52 : vector<128x128xf32> to vector<128x128xbf16>
    %c1_47 = arith.constant 1 : index
    %c2_48 = arith.constant 2 : index
    %c0_49 = arith.constant 0 : index
    %c0_50 = arith.constant 0 : index
    %54 = vector.load %arg3[%c1_47, %c2_48, %c0_49, %c0_50] : memref<3x3x128x128xbf16, #tpu.memory_space<vmem>>, vector<1x1x128x128xbf16>
    %55 = vector.shape_cast %54 : vector<1x1x128x128xbf16> to vector<128x128xbf16>
    %cst_51 = arith.constant dense<0.000000e+00> : vector<128x128xf32>
    %56 = tpu.matmul %53, %55, %cst_51 {dimension_numbers = #tpu.dot_dimension_numbers<[1], [0], [0], [1], [0, 0, 1, 1], [], []>} : vector<128x128xbf16>, vector<128x128xbf16>, vector<128x128xf32> -> vector<128x128xf32>
    %57 = arith.addf %51, %56 : vector<128x128xf32>
    %c0_52 = arith.constant 0 : index
    %c1_53 = arith.constant 1 : index
    %c1_54 = arith.constant 1 : index
    %c0_55 = arith.constant 0 : index
    %c0_56 = arith.constant 0 : index
    %58 = vector.load %arg1[%c0_52, %c1_53, %c1_54, %c0_55, %c0_56] : memref<1x2x2x160x128xbf16, #tpu.memory_space<vmem>>, vector<1x1x1x160x128xbf16>
    %59 = vector.shape_cast %58 : vector<1x1x1x160x128xbf16> to vector<160x128xbf16>
    %60 = arith.extf %59 : vector<160x128xbf16> to vector<160x128xf32>
    %61 = vector.extract_strided_slice %60 {offsets = [0, 0], sizes = [128, 128], strides = [1, 1]} : vector<160x128xf32> to vector<128x128xf32>
    %62 = arith.truncf %61 : vector<128x128xf32> to vector<128x128xbf16>
    %c1_57 = arith.constant 1 : index
    %c1_58 = arith.constant 1 : index
    %c0_59 = arith.constant 0 : index
    %c0_60 = arith.constant 0 : index
    %63 = vector.load %arg3[%c1_57, %c1_58, %c0_59, %c0_60] : memref<3x3x128x128xbf16, #tpu.memory_space<vmem>>, vector<1x1x128x128xbf16>
    %64 = vector.shape_cast %63 : vector<1x1x128x128xbf16> to vector<128x128xbf16>
    %cst_61 = arith.constant dense<0.000000e+00> : vector<128x128xf32>
    %65 = tpu.matmul %62, %64, %cst_61 {dimension_numbers = #tpu.dot_dimension_numbers<[1], [0], [0], [1], [0, 0, 1, 1], [], []>} : vector<128x128xbf16>, vector<128x128xbf16>, vector<128x128xf32> -> vector<128x128xf32>
    %66 = arith.addf %57, %65 : vector<128x128xf32>
    %c0_62 = arith.constant 0 : index
    %c0_63 = arith.constant 0 : index
    %67 = vector.load %arg4[%c0_62, %c0_63] : memref<1x128xf32, #tpu.memory_space<vmem>>, vector<1x128xf32>
    %68 = vector.broadcast %67 : vector<1x128xf32> to vector<128x128xf32>
    %69 = arith.addf %66, %68 : vector<128x128xf32>
    %cst_64 = arith.constant 0.000000e+00 : f32
    %70 = vector.broadcast %cst_64 : f32 to vector<128x128xf32>
    %71 = arith.maximumf %69, %70 : vector<128x128xf32>
    %72 = arith.truncf %71 : vector<128x128xf32> to vector<128x128xbf16>
    %c0_65 = arith.constant 0 : index
    %c0_66 = arith.constant 0 : index
    %73 = vector.load %arg5[%c0_65, %c0_66] : memref<128x128xbf16, #tpu.memory_space<vmem>>, vector<128x128xbf16>
    %cst_67 = arith.constant dense<0.000000e+00> : vector<128x128xf32>
    %74 = tpu.matmul %72, %73, %cst_67 {dimension_numbers = #tpu.dot_dimension_numbers<[1], [0], [0], [1], [0, 0, 1, 1], [], []>} : vector<128x128xbf16>, vector<128x128xbf16>, vector<128x128xf32> -> vector<128x128xf32>
    %c0_68 = arith.constant 0 : index
    %c0_69 = arith.constant 0 : index
    %75 = vector.load %arg6[%c0_68, %c0_69] : memref<1x128xf32, #tpu.memory_space<vmem>>, vector<1x128xf32>
    %76 = vector.broadcast %75 : vector<1x128xf32> to vector<128x128xf32>
    %77 = arith.addf %74, %76 : vector<128x128xf32>
    %c0_70 = arith.constant 0 : index
    %c0_71 = arith.constant 0 : index
    %c0_72 = arith.constant 0 : index
    %78 = vector.load %arg2[%c0_70, %c0_71, %c0_72] : memref<1x128x8xbf16, #tpu.memory_space<vmem>>, vector<1x128x8xbf16>
    %79 = vector.shape_cast %78 : vector<1x128x8xbf16> to vector<128x8xbf16>
    %c0_73 = arith.constant 0 : index
    %c0_74 = arith.constant 0 : index
    %80 = vector.load %arg7[%c0_73, %c0_74] : memref<8x128xbf16, #tpu.memory_space<vmem>>, vector<8x128xbf16>
    %cst_75 = arith.constant dense<0.000000e+00> : vector<128x128xf32>
    %81 = tpu.matmul %79, %80, %cst_75 {dimension_numbers = #tpu.dot_dimension_numbers<[1], [0], [0], [1], [0, 0, 1, 1], [], []>} : vector<128x8xbf16>, vector<8x128xbf16>, vector<128x128xf32> -> vector<128x128xf32>
    %82 = arith.addf %77, %81 : vector<128x128xf32>
    %c0_76 = arith.constant 0 : index
    %c0_77 = arith.constant 0 : index
    %83 = vector.load %arg8[%c0_76, %c0_77] : memref<1x128xf32, #tpu.memory_space<vmem>>, vector<1x128xf32>
    %84 = vector.broadcast %83 : vector<1x128xf32> to vector<128x128xf32>
    %85 = arith.addf %82, %84 : vector<128x128xf32>
    %cst_78 = arith.constant 0.000000e+00 : f32
    %86 = vector.broadcast %cst_78 : f32 to vector<128x128xf32>
    %87 = arith.maximumf %85, %86 : vector<128x128xf32>
    %88 = arith.truncf %87 : vector<128x128xf32> to vector<128x128xbf16>
    %c0_79 = arith.constant 0 : index
    %c0_80 = arith.constant 0 : index
    %c0_81 = arith.constant 0 : index
    %89 = vector.load %arg9[%c0_79, %c0_80, %c0_81] : memref<1x128x128xbf16, #tpu.memory_space<vmem>>, vector<1x128x128xbf16>
    %90 = vector.shape_cast %89 : vector<1x128x128xbf16> to vector<128x128xbf16>
    %91 = vector.shape_cast %88 : vector<128x128xbf16> to vector<1x128x128xbf16>
    tpu.vector_store %arg9[%c0_79, %c0_80, %c0_81], %91 {strides = array<i32>} : memref<1x128x128xbf16, #tpu.memory_space<vmem>>, vector<1x128x128xbf16>,
    return
  }
  func.func @transform_0(%arg0: i32) -> (i32, i32, i32, i32, i32) {
    %c0_i32 = arith.constant 0 : i32
    %c0_i32_0 = arith.constant 0 : i32
    %c0_i32_1 = arith.constant 0 : i32
    %c0_i32_2 = arith.constant 0 : i32
    %c0_i32_3 = arith.constant 0 : i32
    return %arg0, %c0_i32, %c0_i32_0, %c0_i32_1, %c0_i32_2 : i32, i32, i32, i32, i32
  }
  func.func @transform_1(%arg0: i32) -> (i32, i32, i32) {
    %c0_i32 = arith.constant 0 : i32
    %c0_i32_0 = arith.constant 0 : i32
    %c0_i32_1 = arith.constant 0 : i32
    return %arg0, %c0_i32, %c0_i32_0 : i32, i32, i32
  }
  func.func @transform_2(%arg0: i32) -> (i32, i32, i32, i32) {
    %c0_i32 = arith.constant 0 : i32
    %c0_i32_0 = arith.constant 0 : i32
    %c0_i32_1 = arith.constant 0 : i32
    %c0_i32_2 = arith.constant 0 : i32
    %c0_i32_3 = arith.constant 0 : i32
    return %c0_i32, %c0_i32_0, %c0_i32_1, %c0_i32_2 : i32, i32, i32, i32
  }
  func.func @transform_3(%arg0: i32) -> (i32, i32) {
    %c0_i32 = arith.constant 0 : i32
    %c0_i32_0 = arith.constant 0 : i32
    %c0_i32_1 = arith.constant 0 : i32
    return %c0_i32, %c0_i32_0 : i32, i32
  }
  func.func @transform_4(%arg0: i32) -> (i32, i32) {
    %c0_i32 = arith.constant 0 : i32
    %c0_i32_0 = arith.constant 0 : i32
    %c0_i32_1 = arith.constant 0 : i32
    return %c0_i32, %c0_i32_0 : i32, i32
  }
  func.func @transform_5(%arg0: i32) -> (i32, i32) {
    %c0_i32 = arith.constant 0 : i32
    %c0_i32_0 = arith.constant 0 : i32
    %c0_i32_1 = arith.constant 0 : i32
    return %c0_i32, %c0_i32_0 : i32, i32
  }
  func.func @transform_6(%arg0: i32) -> (i32, i32) {
    %c0_i32 = arith.constant 0 : i32
    %c0_i32_0 = arith.constant 0 : i32
    %c0_i32_1 = arith.constant 0 : i32
    return %c0_i32, %c0_i32_0 : i32, i32
  }
  func.func @transform_7(%arg0: i32) -> (i32, i32) {
    %c0_i32 = arith.constant 0 : i32
    %c0_i32_0 = arith.constant 0 : i32
    %c0_i32_1 = arith.constant 0 : i32
    return %c0_i32, %c0_i32_0 : i32, i32
  }
  func.func @transform_8(%arg0: i32) -> (i32, i32, i32) {
    %c0_i32 = arith.constant 0 : i32
    %c0_i32_0 = arith.constant 0 : i32
    %c0_i32_1 = arith.constant 0 : i32
    return %arg0, %c0_i32, %c0_i32_0 : i32, i32, i32
  }
}

</mosaic_0001>

<llo_original>
// kernel: tpu_custom_call.1
$region0: #{tpu_custom_call.1}
  #allocation0 [shape = 'u32[]', space=smem, size = 0x4, offset = 0x4, fixed_abs, tag = 'smem constant byte address 0x4 - core index']
  #allocation1 [shape = 'u32[144,128]{1,0:T(1,128)}', space=vmem, size = 0x12000, scoped, tag = 'internal scratch']
  %s0 = inlined_call_operand.hbm [shape: f32[16,128], index: 0, kind: input, shape index: {}]
  %s1 = inlined_call_operand.hbm [shape: f32[8,128], index: 1, kind: input, shape index: {}]
  %s2 = inlined_call_operand.hbm [shape: f32[16,128], index: 2, kind: output, shape index: {}]
  %s3 = sld [smem:[#allocation0]]
  $region49: #{tpu_custom_call.1} parent=0
    _
  %s5 = ssub.s32 1, %s3
  %s6 = scalar_select 0, %s5, %s3
  $region1: #{tpu_custom_call.1} parent=0
    #allocation2 [shape = 'u8[8192]{0}', space=vmem, size = 0x2000, scoped, tag = 'input window, operand 0']
    #allocation3 [shape = 's32[2]{0}', space=sflag, size = 0x8, scoped, tag = 'scoped memory for tpu_custom_call.1']
    #allocation4 [shape = 's32[2]{0}', space=sflag, size = 0x8, scoped, tag = 'scoped memory for tpu_custom_call.1']
    #allocation5 [shape = 'u8[4096]{0}', space=vmem, size = 0x1000, scoped, tag = 'input window, operand 1, single buffered']
    #allocation6 [shape = 's32[1]{0}', space=sflag, size = 0x4, scoped, tag = 'scoped memory for tpu_custom_call.1']
    #allocation7 [shape = 'u8[8192]{0}', space=vmem, size = 0x2000, scoped, tag = 'output window, operand 0']
    %7 = vsyncpa [#allocation3], 0
    %s8 = scalar_lea.sflag [#allocation3], 1
    %9 = vsyncpa %s8, 0
    %10 = vsyncpa [#allocation6], 0
    %11 = vsyncpa [#allocation4], 0
    %s12 = scalar_lea.sflag [#allocation4], 1
    %13 = vsyncpa %s12, 0
    loop: start=0, step=1, limit=4
    $region2: #{tpu_custom_call.1} parent=1 // loop_pre_header
      _
    $region3: #{tpu_custom_call.1} parent=1 // loop_header
      %s15 = sphi 0, %s19
      %p16 = scmp.ge.s32.totalorder %s15, 4
      %s25 = sphi 0, %s27
      %s28 = sphi 0, %s25
      %s29 = sphi 0, %s28
      %s45 = sphi 0, %s29
      %s49 = sphi 0, %s49
      %s51 = sphi 0, %s49
      %s52 = sphi 0, %s51
      %s66 = sphi 0, %s52
      %s72 = sphi 0, %s74
      %s75 = sphi 0, %s72
      %s76 = sphi 0, %s75
      %s92 = sphi 0, %s76
    $region4: #{tpu_custom_call.1} parent=1 // loop_header_branch
      %18 = sbr.rel (%p16) target = $region8
    $region5: #{tpu_custom_call.1} parent=1 // loop_body
      %s20 = ssub.s32 %s15, 1
      %s21 = ssub.s32 %s15, 2
      %s22 = sadd.s32 %s15, 1
      %s23 = ssub.s32 %s15, %s22
      %p24 = scmp.eq.s32.totalorder %s23, 0
      %s26 = sadd.s32 %s25, 1
      %s27 = scalar_select %p24, %s25, %s26
      %p30 = pneg %p24
      %p31 = scmp.eq.s32.totalorder %s15, 1
      %p32 = por %p30, %p31
      %p33 = scmp.ne.s32.totalorder %s25, %s28
      %p34 = scmp.eq.s32.totalorder %s15, 0
      %p35 = por %p33, %p34
      %p36 = scmp.ne.s32.totalorder %s25, %s28
      %p37 = scmp.eq.s32.totalorder %s20, 1
      %p38 = por %p36, %p37
      %p39 = scmp.ne.s32.totalorder %s28, %s29
      %p40 = scmp.eq.s32.totalorder %s20, 0
      %p41 = por %p39, %p40
      %p42 = scmp.ne.s32.totalorder %s28, %s29
      %p43 = scmp.eq.s32.totalorder %s21, 1
      %p44 = por %p42, %p43
      %p46 = scmp.ne.s32.totalorder %s29, %s45
      %p47 = scmp.eq.s32.totalorder %s21, 0
      %p48 = por %p46, %p47
      %s50 = sadd.s32 %s49, 1
      %p53 = scmp.eq.s32.totalorder %s15, 1
      %p54 = scmp.ne.s32.totalorder %s49, %s51
      %p55 = scmp.eq.s32.totalorder %s15, 0
      %p56 = por %p54, %p55
      %p57 = scmp.ne.s32.totalorder %s49, %s51
      %p58 = scmp.eq.s32.totalorder %s20, 1
      %p59 = por %p57, %p58
      %p60 = scmp.ne.s32.totalorder %s51, %s52
      %p61 = scmp.eq.s32.totalorder %s20, 0
      %p62 = por %p60, %p61
      %p63 = scmp.ne.s32.totalorder %s51, %s52
      %p64 = scmp.eq.s32.totalorder %s21, 1
      %p65 = por %p63, %p64
      %p67 = scmp.ne.s32.totalorder %s52, %s66
      %p68 = scmp.eq.s32.totalorder %s21, 0
      %p69 = por %p67, %p68
      %s70 = ssub.s32 %s15, %s22
      %p71 = scmp.eq.s32.totalorder %s70, 0
      %s73 = sadd.s32 %s72, 1
      %s74 = scalar_select %p71, %s72, %s73
      %p77 = pneg %p71
      %p78 = scmp.eq.s32.totalorder %s15, 1
      %p79 = por %p77, %p78
      %p80 = scmp.ne.s32.totalorder %s72, %s75
      %p81 = scmp.eq.s32.totalorder %s15, 0
      %p82 = por %p80, %p81
      %p83 = scmp.ne.s32.totalorder %s72, %s75
      %p84 = scmp.eq.s32.totalorder %s20, 1
      %p85 = por %p83, %p84
      %p86 = scmp.ne.s32.totalorder %s75, %s76
      %p87 = scmp.eq.s32.totalorder %s20, 0
      %p88 = por %p86, %p87
      %p89 = scmp.ne.s32.totalorder %s75, %s76
      %p90 = scmp.eq.s32.totalorder %s21, 1
      %p91 = por %p89, %p90
      %p93 = scmp.ne.s32.totalorder %s76, %s92
      %p94 = scmp.eq.s32.totalorder %s21, 0
      %p95 = por %p93, %p94
      %p96 = scmp.le.s32.totalorder 1, %s15
      %p97 = scmp.lt.s32.totalorder %s15, 3
      %p98 = pnand %p96, %p97
      %p99 = pneg %p98
      // Predicated region
      $region9: #{tpu_custom_call.1} parent=5 // pred_check
        _
      $region10: #{tpu_custom_call.1} parent=5 // pred_check_branch
        %101 = sbr.rel (%p98) target = $region12
      $region11: #{tpu_custom_call.1} parent=5 // pred_region
        %s102 = ssub.s32 %s15, 1
        // Predicated region
        $region13: #{tpu_custom_call.1} parent=11 // pred_check
          %p103 = pneg %p62
        $region14: #{tpu_custom_call.1} parent=11 // pred_check_branch
          %105 = sbr.rel (%p103) target = $region16
        $region15: #{tpu_custom_call.1} parent=11 // pred_region
          %s107 = ssub.s32 128, 128
          %108 = vsyncadd [#allocation6], %s107
          %s110 = sshll.u32 [#allocation5], 4
          %s111 = int_to_ptr.vmem [resolvable:$true] %s110
          %113 = dma.hbm_to_vmem [thread:$0]  %s1, 128, %s111, [#allocation6]
        $region16: #{tpu_custom_call.1} parent=11 // pred_fallthru
          _
      $region12: #{tpu_custom_call.1} parent=5 // pred_fallthru
        _
      %p114 = scmp.lt.s32.totalorder %s15, 2
      // Predicated region
      $region17: #{tpu_custom_call.1} parent=5 // pred_check
        %p115 = pneg %p114
      $region18: #{tpu_custom_call.1} parent=5 // pred_check_branch
        %117 = sbr.rel (%p115) target = $region20
      $region19: #{tpu_custom_call.1} parent=5 // pred_region
        // Predicated region
        $region21: #{tpu_custom_call.1} parent=19 // pred_check
          %p118 = pneg %p35
        $region22: #{tpu_custom_call.1} parent=19 // pred_check_branch
          %120 = sbr.rel (%p118) target = $region24
        $region23: #{tpu_custom_call.1} parent=19 // pred_region
          %s121 = sand.u32 %s25, 1
          %s122 = scalar_lea.sflag [#allocation3], %s121
          %s123 = sand.u32 %s25, 1
          %s124 = smul.addr %s123, 8
          %s125 = scalar_lea.vmem [#allocation2], %s124
          %s127 = ssub.s32 128, 128
          %128 = vsyncadd %s122, %s127
          %s129 = smul.addr %s15, 128
          %s130 = scalar_lea.hbm %s0, %s129
          %s132 = sshll.u32 %s125, 4
          %s133 = int_to_ptr.vmem [resolvable:$true] %s132
          %135 = dma.hbm_to_vmem [thread:$0]  %s130, 128, %s133, %s122
        $region24: #{tpu_custom_call.1} parent=19 // pred_fallthru
          _
      $region20: #{tpu_custom_call.1} parent=5 // pred_fallthru
        _
      %p136 = scmp.le.s32.totalorder 1, %s15
      %p137 = scmp.lt.s32.totalorder %s15, 3
      %p138 = pnand %p136, %p137
      %p139 = pneg %p138
      // Predicated region
      $region25: #{tpu_custom_call.1} parent=5 // pred_check
        _
      $region26: #{tpu_custom_call.1} parent=5 // pred_check_branch
        %141 = sbr.rel (%p138) target = $region28
      $region27: #{tpu_custom_call.1} parent=5 // pred_region
        %s142 = ssub.s32 %s15, 1
        %s143 = sand.u32 %s28, 1
        %s144 = scalar_lea.sflag [#allocation3], %s143
        %s145 = sand.u32 %s28, 1
        %s146 = smul.addr %s145, 8
        %s147 = scalar_lea.vmem [#allocation2], %s146
        // Predicated region
        $region29: #{tpu_custom_call.1} parent=27 // pred_check
          %p148 = pneg %p41
        $region30: #{tpu_custom_call.1} parent=27 // pred_check_branch
          %150 = sbr.rel (%p148) target = $region32
        $region31: #{tpu_custom_call.1} parent=27 // pred_region
          %151 = dma.done %s144, 128
        $region32: #{tpu_custom_call.1} parent=27 // pred_fallthru
          _
        // Predicated region
        $region33: #{tpu_custom_call.1} parent=27 // pred_check
          %p152 = pneg %p62
        $region34: #{tpu_custom_call.1} parent=27 // pred_check_branch
          %154 = sbr.rel (%p152) target = $region36
        $region35: #{tpu_custom_call.1} parent=27 // pred_region
          %155 = dma.done [#allocation6], 128
        $region36: #{tpu_custom_call.1} parent=27 // pred_fallthru
          _
        %s156 = sand.u32 %s28, 1
        %s157 = scalar_lea.sflag [#allocation3], %s156
        %s158 = sand.u32 %s28, 1
        %s159 = smul.addr %s158, 8
        %s160 = scalar_lea.vmem [#allocation2], %s159
        %p161 = pneg %p41
        %p162 = pneg %p38
        %p163 = pneg %p62
        %p164 = pneg %p59
        %p165 = pneg %p88
        %p166 = pneg %p85
        %s167 = sand.u32 %s75, 1
        %s168 = scalar_lea.sflag [#allocation4], %s167
        %s169 = sand.u32 %s75, 1
        %s170 = smul.addr %s169, 8
        %s171 = scalar_lea.vmem [#allocation7], %s170
        %v172 = vld [vmem:[%s147] sm:$0xff]
        %v173 = vld [vmem:[#allocation5] sm:$0xff]
        %v174 = vadd.f32 %v172, %v173
        %175 = vst [vmem:[%s171] sm:$0xff] %v174
        %s176 = sand.u32 %s75, 1
        %s177 = scalar_lea.sflag [#allocation4], %s176
        %s178 = sand.u32 %s75, 1
        %s179 = smul.addr %s178, 8
        %s180 = scalar_lea.vmem [#allocation7], %s179
        // Predicated region
        $region37: #{tpu_custom_call.1} parent=27 // pred_check
          %p181 = pneg %p85
        $region38: #{tpu_custom_call.1} parent=27 // pred_check_branch
          %183 = sbr.rel (%p181) target = $region40
        $region39: #{tpu_custom_call.1} parent=27 // pred_region
          %s185 = ssub.s32 128, 128
          %186 = vsyncadd %s177, %s185
          %s187 = smul.addr %s20, 128
          %s188 = scalar_lea.hbm %s2, %s187
          %s190 = sshll.u32 %s180, 4
          %s191 = int_to_ptr.vmem [resolvable:$true] %s190
          %193 = dma.vmem_to_hbm [thread:$0]  %s191, 128, %s188, %s177
        $region40: #{tpu_custom_call.1} parent=27 // pred_fallthru
          _
      $region28: #{tpu_custom_call.1} parent=5 // pred_fallthru
        _
      %p194 = scmp.le.s32.totalorder 2, %s15
      // Predicated region
      $region41: #{tpu_custom_call.1} parent=5 // pred_check
        %p195 = pneg %p194
      $region42: #{tpu_custom_call.1} parent=5 // pred_check_branch
        %197 = sbr.rel (%p195) target = $region44
      $region43: #{tpu_custom_call.1} parent=5 // pred_region
        %s198 = ssub.s32 %s15, 2
        // Predicated region
        $region45: #{tpu_custom_call.1} parent=43 // pred_check
          %p199 = pneg %p91
        $region46: #{tpu_custom_call.1} parent=43 // pred_check_branch
          %201 = sbr.rel (%p199) target = $region48
        $region47: #{tpu_custom_call.1} parent=43 // pred_region
          %s202 = sand.u32 %s76, 1
          %s203 = scalar_lea.sflag [#allocation4], %s202
          %s204 = sand.u32 %s76, 1
          %s205 = smul.addr %s204, 8
          %s206 = scalar_lea.vmem [#allocation7], %s205
          %207 = dma.done %s203, 128
        $region48: #{tpu_custom_call.1} parent=43 // pred_fallthru
          _
      $region44: #{tpu_custom_call.1} parent=5 // pred_fallthru
        _
    $region6: #{tpu_custom_call.1} parent=1 // loop_footer
      %s19 = sadd.s32 1, %s15
    $region7: #{tpu_custom_call.1} parent=1 // loop_footer_branch
      %14 = sbr.rel target = $region3
    $region8: #{tpu_custom_call.1} parent=1 // loop_exit
      _
    %208 = vsyncpa [#allocation3], 1
    %s209 = scalar_lea.sflag [#allocation3], 1
    %210 = vsyncpa %s209, 1
    %211 = vsyncpa [#allocation6], 1
    %212 = vsyncpa [#allocation4], 1
    %s213 = scalar_lea.sflag [#allocation4], 1
    %214 = vsyncpa %s213, 1

// kernel: bottleneck_forward.2
$region0: #{bottleneck_forward.2}
  #allocation0 [shape = 'u32[]', space=smem, size = 0x4, offset = 0x4, fixed_abs, tag = 'smem constant byte address 0x4 - core index']
  #allocation1 [shape = 'u32[144,128]{1,0:T(1,128)}', space=vmem, size = 0x12000, scoped, tag = 'internal scratch']
  %s0 = inlined_call_operand.vmem [shape: bf16[512,8], index: 0, kind: input, shape index: {}]
  %s1 = inlined_call_operand.vmem [shape: bf16[8,128], index: 1, kind: input, shape index: {}]
  %s2 = inlined_call_operand.vmem [shape: f32[1,128], index: 2, kind: input, shape index: {}]
  %s3 = inlined_call_operand.vmem [shape: bf16[512,128], index: 3, kind: output, shape index: {}]
  %s4 = sld [smem:[#allocation0]]
  $region22: #{bottleneck_forward.2} parent=0
    _
  %s6 = ssub.s32 1, %s4
  %s7 = scalar_select 0, %s6, %s4
  // Predicated region
  $region2: #{bottleneck_forward.2} parent=0 // pred_check
    _
  $region3: #{bottleneck_forward.2} parent=0 // pred_check_branch
    %9 = sbr.rel (0) target = $region5
  $region4: #{bottleneck_forward.2} parent=0 // pred_region
    _
  $region5: #{bottleneck_forward.2} parent=0 // pred_fallthru
    _
  // Predicated region
  $region6: #{bottleneck_forward.2} parent=0 // pred_check
    _
  $region7: #{bottleneck_forward.2} parent=0 // pred_check_branch
    %11 = sbr.rel (0) target = $region9
  $region8: #{bottleneck_forward.2} parent=0 // pred_region
    _
  $region9: #{bottleneck_forward.2} parent=0 // pred_fallthru
    _
  // Predicated region
  $region10: #{bottleneck_forward.2} parent=0 // pred_check
    _
  $region11: #{bottleneck_forward.2} parent=0 // pred_check_branch
    %13 = sbr.rel (0) target = $region13
  $region12: #{bottleneck_forward.2} parent=0 // pred_region
    _
  $region13: #{bottleneck_forward.2} parent=0 // pred_fallthru
    _
  %v15 = vld [vmem:[%s0] sm:$0xf]
  %v16 = vld [vmem:[%s0 + $0x4] sm:$0xf]
  %v17 = vld [vmem:[%s0 + $0x8] sm:$0xf]
  %v18 = vld [vmem:[%s0 + $0xc] sm:$0xf]
  %v19 = vld [vmem:[%s0 + $0x10] sm:$0xf]
  %v20 = vld [vmem:[%s0 + $0x14] sm:$0xf]
  %v21 = vld [vmem:[%s0 + $0x18] sm:$0xf]
  %v22 = vld [vmem:[%s0 + $0x1c] sm:$0xf]
  %v23 = vld [vmem:[%s0 + $0x20] sm:$0xf]
  %v24 = vld [vmem:[%s0 + $0x24] sm:$0xf]
  %v25 = vld [vmem:[%s0 + $0x28] sm:$0xf]
  %v26 = vld [vmem:[%s0 + $0x2c] sm:$0xf]
  %v27 = vld [vmem:[%s0 + $0x30] sm:$0xf]
  %v28 = vld [vmem:[%s0 + $0x34] sm:$0xf]
  %v29 = vld [vmem:[%s0 + $0x38] sm:$0xf]
  %v30 = vld [vmem:[%s0 + $0x3c] sm:$0xf]
  %v31 = vld [vmem:[%s0 + $0x40] sm:$0xf]
  %v32 = vld [vmem:[%s0 + $0x44] sm:$0xf]
  %v33 = vld [vmem:[%s0 + $0x48] sm:$0xf]
  %v34 = vld [vmem:[%s0 + $0x4c] sm:$0xf]
  %v35 = vld [vmem:[%s0 + $0x50] sm:$0xf]
  %v36 = vld [vmem:[%s0 + $0x54] sm:$0xf]
  %v37 = vld [vmem:[%s0 + $0x58] sm:$0xf]
  %v38 = vld [vmem:[%s0 + $0x5c] sm:$0xf]
  %v39 = vld [vmem:[%s0 + $0x60] sm:$0xf]
  %v40 = vld [vmem:[%s0 + $0x64] sm:$0xf]
  %v41 = vld [vmem:[%s0 + $0x68] sm:$0xf]
  %v42 = vld [vmem:[%s0 + $0x6c] sm:$0xf]
  %v43 = vld [vmem:[%s0 + $0x70] sm:$0xf]
  %v44 = vld [vmem:[%s0 + $0x74] sm:$0xf]
  %v45 = vld [vmem:[%s0 + $0x78] sm:$0xf]
  %v46 = vld [vmem:[%s0 + $0x7c] sm:$0xf]
  %v47 = vld [vmem:[%s0 + $0x80] sm:$0xf]
  %v48 = vld [vmem:[%s0 + $0x84] sm:$0xf]
  %v49 = vld [vmem:[%s0 + $0x88] sm:$0xf]
  %v50 = vld [vmem:[%s0 + $0x8c] sm:$0xf]
  %v51 = vld [vmem:[%s0 + $0x90] sm:$0xf]
  %v52 = vld [vmem:[%s0 + $0x94] sm:$0xf]
  %v53 = vld [vmem:[%s0 + $0x98] sm:$0xf]
  %v54 = vld [vmem:[%s0 + $0x9c] sm:$0xf]
  %v55 = vld [vmem:[%s0 + $0xa0] sm:$0xf]
  %v56 = vld [vmem:[%s0 + $0xa4] sm:$0xf]
  %v57 = vld [vmem:[%s0 + $0xa8] sm:$0xf]
  %v58 = vld [vmem:[%s0 + $0xac] sm:$0xf]
  %v59 = vld [vmem:[%s0 + $0xb0] sm:$0xf]
  %v60 = vld [vmem:[%s0 + $0xb4] sm:$0xf]
  %v61 = vld [vmem:[%s0 + $0xb8] sm:$0xf]
  %v62 = vld [vmem:[%s0 + $0xbc] sm:$0xf]
  %v63 = vld [vmem:[%s0 + $0xc0] sm:$0xf]
  %v64 = vld [vmem:[%s0 + $0xc4] sm:$0xf]
  %v65 = vld [vmem:[%s0 + $0xc8] sm:$0xf]
  %v66 = vld [vmem:[%s0 + $0xcc] sm:$0xf]
  %v67 = vld [vmem:[%s0 + $0xd0] sm:$0xf]
  %v68 = vld [vmem:[%s0 + $0xd4] sm:$0xf]
  %v69 = vld [vmem:[%s0 + $0xd8] sm:$0xf]
  %v70 = vld [vmem:[%s0 + $0xdc] sm:$0xf]
  %v71 = vld [vmem:[%s0 + $0xe0] sm:$0xf]
  %v72 = vld [vmem:[%s0 + $0xe4] sm:$0xf]
  %v73 = vld [vmem:[%s0 + $0xe8] sm:$0xf]
  %v74 = vld [vmem:[%s0 + $0xec] sm:$0xf]
  %v75 = vld [vmem:[%s0 + $0xf0] sm:$0xf]
  %v76 = vld [vmem:[%s0 + $0xf4] sm:$0xf]
  %v77 = vld [vmem:[%s0 + $0xf8] sm:$0xf]
  %v78 = vld [vmem:[%s0 + $0xfc] sm:$0xf]
  %v79 = vld [vmem:[%s1] sm:$0xf]
  %v80 = vld [vmem:[%s2] sm:$0x1]
  %v82 = vlaneseq
  %v83 = vshrl.u32 %v82, 7
  %v84 = vsub.s32 0, %v83
  %v85 = vrot.slane %v80, %v84
  %v151 = vunpack.c.l.b16 %v15
  %v152 = vunpack.c.l.b16 %v16
  %v153 = vunpack.c.l.b16 %v17
  %v154 = vunpack.c.l.b16 %v18
  %v155 = vunpack.c.l.b16 %v19
  %v156 = vunpack.c.l.b16 %v20
  %v157 = vunpack.c.l.b16 %v21
  %v158 = vunpack.c.l.b16 %v22
  %v159 = vunpack.c.l.b16 %v23
  %v160 = vunpack.c.l.b16 %v24
  %v161 = vunpack.c.l.b16 %v25
  %v162 = vunpack.c.l.b16 %v26
  %v163 = vunpack.c.l.b16 %v27
  %v164 = vunpack.c.l.b16 %v28
  %v165 = vunpack.c.l.b16 %v29
  %v166 = vunpack.c.l.b16 %v30
  %v167 = vunpack.c.l.b16 %v31
  %v168 = vunpack.c.l.b16 %v32
  %v169 = vunpack.c.l.b16 %v33
  %v170 = vunpack.c.l.b16 %v34
  %v171 = vunpack.c.l.b16 %v35
  %v172 = vunpack.c.l.b16 %v36
  %v173 = vunpack.c.l.b16 %v37
  %v174 = vunpack.c.l.b16 %v38
  %v175 = vunpack.c.l.b16 %v39
  %v176 = vunpack.c.l.b16 %v40
  %v177 = vunpack.c.l.b16 %v41
  %v178 = vunpack.c.l.b16 %v42
  %v179 = vunpack.c.l.b16 %v43
  %v180 = vunpack.c.l.b16 %v44
  %v181 = vunpack.c.l.b16 %v45
  %v182 = vunpack.c.l.b16 %v46
  %v183 = vunpack.c.l.b16 %v47
  %v184 = vunpack.c.l.b16 %v48
  %v185 = vunpack.c.l.b16 %v49
  %v186 = vunpack.c.l.b16 %v50
  %v187 = vunpack.c.l.b16 %v51
  %v188 = vunpack.c.l.b16 %v52
  %v189 = vunpack.c.l.b16 %v53
  %v190 = vunpack.c.l.b16 %v54
  %v191 = vunpack.c.l.b16 %v55
  %v192 = vunpack.c.l.b16 %v56
  %v193 = vunpack.c.l.b16 %v57
  %v194 = vunpack.c.l.b16 %v58
  %v195 = vunpack.c.l.b16 %v59
  %v196 = vunpack.c.l.b16 %v60
  %v197 = vunpack.c.l.b16 %v61
  %v198 = vunpack.c.l.b16 %v62
  %v199 = vunpack.c.l.b16 %v63
  %v200 = vunpack.c.l.b16 %v64
  %v201 = vunpack.c.l.b16 %v65
  %v202 = vunpack.c.l.b16 %v66
  %v203 = vunpack.c.l.b16 %v67
  %v204 = vunpack.c.l.b16 %v68
  %v205 = vunpack.c.l.b16 %v69
  %v206 = vunpack.c.l.b16 %v70
  %v207 = vunpack.c.l.b16 %v71
  %v208 = vunpack.c.l.b16 %v72
  %v209 = vunpack.c.l.b16 %v73
  %v210 = vunpack.c.l.b16 %v74
  %v211 = vunpack.c.l.b16 %v75
  %v212 = vunpack.c.l.b16 %v76
  %v213 = vunpack.c.l.b16 %v77
  %v214 = vunpack.c.l.b16 %v78
  %v215 = vpack.c.b16 %v152, %v151
  %v216 = vpack.c.b16 %v154, %v153
  %v217 = vpack.c.b16 %v156, %v155
  %v218 = vpack.c.b16 %v158, %v157
  %v219 = vpack.c.b16 %v160, %v159
  %v220 = vpack.c.b16 %v162, %v161
  %v221 = vpack.c.b16 %v164, %v163
  %v222 = vpack.c.b16 %v166, %v165
  %v223 = vpack.c.b16 %v168, %v167
  %v224 = vpack.c.b16 %v170, %v169
  %v225 = vpack.c.b16 %v172, %v171
  %v226 = vpack.c.b16 %v174, %v173
  %v227 = vpack.c.b16 %v176, %v175
  %v228 = vpack.c.b16 %v178, %v177
  %v229 = vpack.c.b16 %v180, %v179
  %v230 = vpack.c.b16 %v182, %v181
  %v231 = vpack.c.b16 %v184, %v183
  %v232 = vpack.c.b16 %v186, %v185
  %v233 = vpack.c.b16 %v188, %v187
  %v234 = vpack.c.b16 %v190, %v189
  %v235 = vpack.c.b16 %v192, %v191
  %v236 = vpack.c.b16 %v194, %v193
  %v237 = vpack.c.b16 %v196, %v195
  %v238 = vpack.c.b16 %v198, %v197
  %v239 = vpack.c.b16 %v200, %v199
  %v240 = vpack.c.b16 %v202, %v201
  %v241 = vpack.c.b16 %v204, %v203
  %v242 = vpack.c.b16 %v206, %v205
  %v243 = vpack.c.b16 %v208, %v207
  %v244 = vpack.c.b16 %v210, %v209
  %v245 = vpack.c.b16 %v212, %v211
  %v246 = vpack.c.b16 %v214, %v213
  %vm247 = vcmask 64512
  %v249 = vsel %vm247, %v215, 0
  %v252 = vsel %vm247, %v216, 0
  %v255 = vsel %vm247, %v217, 0
  %v258 = vsel %vm247, %v218, 0
  %v261 = vsel %vm247, %v219, 0
  %v264 = vsel %vm247, %v220, 0
  %v267 = vsel %vm247, %v221, 0
  %v270 = vsel %vm247, %v222, 0
  %v273 = vsel %vm247, %v223, 0
  %v276 = vsel %vm247, %v224, 0
  %v279 = vsel %vm247, %v225, 0
  %v282 = vsel %vm247, %v226, 0
  %v285 = vsel %vm247, %v227, 0
  %v288 = vsel %vm247, %v228, 0
  %v291 = vsel %vm247, %v229, 0
  %v294 = vsel %vm247, %v230, 0
  %v297 = vsel %vm247, %v231, 0
  %v300 = vsel %vm247, %v232, 0
  %v303 = vsel %vm247, %v233, 0
  %v306 = vsel %vm247, %v234, 0
  %v309 = vsel %vm247, %v235, 0
  %v312 = vsel %vm247, %v236, 0
  %v315 = vsel %vm247, %v237, 0
  %v318 = vsel %vm247, %v238, 0
  %v321 = vsel %vm247, %v239, 0
  %v324 = vsel %vm247, %v240, 0
  %v327 = vsel %vm247, %v241, 0
  %v330 = vsel %vm247, %v242, 0
  %v333 = vsel %vm247, %v243, 0
  %v336 = vsel %vm247, %v244, 0
  %v339 = vsel %vm247, %v245, 0
  %v342 = vsel %vm247, %v246, 0
  %vm344 = vcmask 1043456
  %v346 = vsel %vm344, %v79, 0
  %348 = vmatprep.subr.bf16.mxu0 0
  %349 = vmatpush1.bf16.msra.mxu0 %v346
  %350 = vmatprep.subr.bf16.mxu0 0
  %351 = vmatpush1.bf16.msra.mxu0 0
  %352 = vmatprep.subr.bf16.mxu0 0
  %353 = vmatpush1.bf16.msra.mxu0 0
  %354 = vmatprep.subr.bf16.mxu0 0
  %355 = vmatpush1.bf16.msra.mxu0 0
  %356 = vmatprep.subr.bf16.mxu0 0
  %357 = vmatpush1.bf16.msra.mxu0 0
  %358 = vmatprep.subr.bf16.mxu0 0
  %359 = vmatpush1.bf16.msra.mxu0 0
  %360 = vmatprep.subr.bf16.mxu0 0
  %361 = vmatpush1.bf16.msra.mxu0 0
  %362 = vmatprep.subr.bf16.mxu0 0
  %363 = vmatpush1.bf16.msra.mxu0 0
  %364 = vmatprep.subr.bf16.mxu0 0
  %365 = vmatpush1.bf16.msra.mxu0 0
  %366 = vmatprep.subr.bf16.mxu0 0
  %367 = vmatpush1.bf16.msra.mxu0 0
  %368 = vmatprep.subr.bf16.mxu0 0
  %369 = vmatpush1.bf16.msra.mxu0 0
  %370 = vmatprep.subr.bf16.mxu0 0
  %371 = vmatpush1.bf16.msra.mxu0 0
  %372 = vmatprep.subr.bf16.mxu0 0
  %373 = vmatpush1.bf16.msra.mxu0 0
  %374 = vmatprep.subr.bf16.mxu0 0
  %375 = vmatpush1.bf16.msra.mxu0 0
  %376 = vmatprep.subr.bf16.mxu0 0
  %377 = vmatpush1.bf16.msra.mxu0 0
  %378 = vmatprep.subr.bf16.mxu0 0
  %379 = vmatpush1.bf16.msra.mxu0 0
  %380 = vmatprep.mubr.bf16.mxu0 0
  %381 = vmatmul.mubr.bf16.gmra.mrb[0].mxu0 %v249
  %v382 = vpop.f32.mrb[0].mxu0
  %v383 = vadd.f32 %v85, %v382
  %v384 = vpop.f32.mrb[0].mxu0
  %v385 = vpop.f32.mrb[0].mxu0
  %v386 = vadd.f32 %v85, %v385
  %v387 = vpop.f32.mrb[0].mxu0
  %388 = vmatprep.mubr.bf16.mxu0 0
  %389 = vmatmul.mubr.bf16.gmra.mrb[0].mxu0 %v252
  %v390 = vpop.f32.mrb[0].mxu0
  %v391 = vadd.f32 %v85, %v390
  %v392 = vpop.f32.mrb[0].mxu0
  %v393 = vpop.f32.mrb[0].mxu0
  %v394 = vadd.f32 %v85, %v393
  %v395 = vpop.f32.mrb[0].mxu0
  %396 = vmatprep.mubr.bf16.mxu0 0
  %397 = vmatmul.mubr.bf16.gmra.mrb[0].mxu0 %v255
  %v398 = vpop.f32.mrb[0].mxu0
  %v399 = vadd.f32 %v85, %v398
  %v400 = vpop.f32.mrb[0].mxu0
  %v401 = vpop.f32.mrb[0].mxu0
  %v402 = vadd.f32 %v85, %v401
  %v403 = vpop.f32.mrb[0].mxu0
  %404 = vmatprep.mubr.bf16.mxu0 0
  %405 = vmatmul.mubr.bf16.gmra.mrb[0].mxu0 %v258
  %v406 = vpop.f32.mrb[0].mxu0
  %v407 = vadd.f32 %v85, %v406
  %v408 = vpop.f32.mrb[0].mxu0
  %v409 = vpop.f32.mrb[0].mxu0
  %v410 = vadd.f32 %v85, %v409
  %v411 = vpop.f32.mrb[0].mxu0
  %412 = vmatprep.mubr.bf16.mxu0 0
  %413 = vmatmul.mubr.bf16.gmra.mrb[0].mxu0 %v261
  %v414 = vpop.f32.mrb[0].mxu0
  %v415 = vadd.f32 %v85, %v414
  %v416 = vpop.f32.mrb[0].mxu0
  %v417 = vpop.f32.mrb[0].mxu0
  %v418 = vadd.f32 %v85, %v417
  %v419 = vpop.f32.mrb[0].mxu0
  %420 = vmatprep.mubr.bf16.mxu0 0
  %421 = vmatmul.mubr.bf16.gmra.mrb[0].mxu0 %v264
  %v422 = vpop.f32.mrb[0].mxu0
  %v423 = vadd.f32 %v85, %v422
  %v424 = vpop.f32.mrb[0].mxu0
  %v425 = vpop.f32.mrb[0].mxu0
  %v426 = vadd.f32 %v85, %v425
  %v427 = vpop.f32.mrb[0].mxu0
  %428 = vmatprep.mubr.bf16.mxu0 0
  %429 = vmatmul.mubr.bf16.gmra.mrb[0].mxu0 %v267
  %v430 = vpop.f32.mrb[0].mxu0
  %v431 = vadd.f32 %v85, %v430
  %v432 = vpop.f32.mrb[0].mxu0
  %v433 = vpop.f32.mrb[0].mxu0
  %v434 = vadd.f32 %v85, %v433
  %v435 = vpop.f32.mrb[0].mxu0
  %436 = vmatprep.mubr.bf16.mxu0 0
  %437 = vmatmul.mubr.bf16.gmra.mrb[0].mxu0 %v270
  %v438 = vpop.f32.mrb[0].mxu0
  %v439 = vadd.f32 %v85, %v438
  %v440 = vpop.f32.mrb[0].mxu0
  %v441 = vpop.f32.mrb[0].mxu0
  %v442 = vadd.f32 %v85, %v441
  %v443 = vpop.f32.mrb[0].mxu0
  %444 = vmatprep.mubr.bf16.mxu0 0
  %445 = vmatmul.mubr.bf16.gmra.mrb[0].mxu0 %v273
  %v446 = vpop.f32.mrb[0].mxu0
  %v447 = vadd.f32 %v85, %v446
  %v448 = vpop.f32.mrb[0].mxu0
  %v449 = vpop.f32.mrb[0].mxu0
  %v450 = vadd.f32 %v85, %v449
  %v451 = vpop.f32.mrb[0].mxu0
  %452 = vmatprep.mubr.bf16.mxu0 0
  %453 = vmatmul.mubr.bf16.gmra.mrb[0].mxu0 %v276
  %v454 = vpop.f32.mrb[0].mxu0
  %v455 = vadd.f32 %v85, %v454
  %v456 = vpop.f32.mrb[0].mxu0
  %v457 = vpop.f32.mrb[0].mxu0
  %v458 = vadd.f32 %v85, %v457
  %v459 = vpop.f32.mrb[0].mxu0
  %460 = vmatprep.mubr.bf16.mxu0 0
  %461 = vmatmul.mubr.bf16.gmra.mrb[0].mxu0 %v279
  %v462 = vpop.f32.mrb[0].mxu0
  %v463 = vadd.f32 %v85, %v462
  %v464 = vpop.f32.mrb[0].mxu0
  %v465 = vpop.f32.mrb[0].mxu0
  %v466 = vadd.f32 %v85, %v465
  %v467 = vpop.f32.mrb[0].mxu0
  %468 = vmatprep.mubr.bf16.mxu0 0
  %469 = vmatmul.mubr.bf16.gmra.mrb[0].mxu0 %v282
  %v470 = vpop.f32.mrb[0].mxu0
  %v471 = vadd.f32 %v85, %v470
  %v472 = vpop.f32.mrb[0].mxu0
  %v473 = vpop.f32.mrb[0].mxu0
  %v474 = vadd.f32 %v85, %v473
  %v475 = vpop.f32.mrb[0].mxu0
  %476 = vmatprep.mubr.bf16.mxu0 0
  %477 = vmatmul.mubr.bf16.gmra.mrb[0].mxu0 %v285
  %v478 = vpop.f32.mrb[0].mxu0
  %v479 = vadd.f32 %v85, %v478
  %v480 = vpop.f32.mrb[0].mxu0
  %v481 = vpop.f32.mrb[0].mxu0
  %v482 = vadd.f32 %v85, %v481
  %v483 = vpop.f32.mrb[0].mxu0
  %484 = vmatprep.mubr.bf16.mxu0 0
  %485 = vmatmul.mubr.bf16.gmra.mrb[0].mxu0 %v288
  %v486 = vpop.f32.mrb[0].mxu0
  %v487 = vadd.f32 %v85, %v486
  %v488 = vpop.f32.mrb[0].mxu0
  %v489 = vpop.f32.mrb[0].mxu0
  %v490 = vadd.f32 %v85, %v489
  %v491 = vpop.f32.mrb[0].mxu0
  %492 = vmatprep.mubr.bf16.mxu0 0
  %493 = vmatmul.mubr.bf16.gmra.mrb[0].mxu0 %v291
  %v494 = vpop.f32.mrb[0].mxu0
  %v495 = vadd.f32 %v85, %v494
  %v496 = vpop.f32.mrb[0].mxu0
  %v497 = vpop.f32.mrb[0].mxu0
  %v498 = vadd.f32 %v85, %v497
  %v499 = vpop.f32.mrb[0].mxu0
  %500 = vmatprep.mubr.bf16.mxu0 0
  %501 = vmatmul.mubr.bf16.gmra.mrb[0].mxu0 %v294
  %v502 = vpop.f32.mrb[0].mxu0
  %v503 = vadd.f32 %v85, %v502
  %v504 = vpop.f32.mrb[0].mxu0
  %v505 = vpop.f32.mrb[0].mxu0
  %v506 = vadd.f32 %v85, %v505
  %v507 = vpop.f32.mrb[0].mxu0
  %508 = vmatprep.mubr.bf16.mxu0 0
  %509 = vmatmul.mubr.bf16.gmra.mrb[0].mxu0 %v297
  %v510 = vpop.f32.mrb[0].mxu0
  %v511 = vadd.f32 %v85, %v510
  %v512 = vpop.f32.mrb[0].mxu0
  %v513 = vpop.f32.mrb[0].mxu0
  %v514 = vadd.f32 %v85, %v513
  %v515 = vpop.f32.mrb[0].mxu0
  %516 = vmatprep.mubr.bf16.mxu0 0
  %517 = vmatmul.mubr.bf16.gmra.mrb[0].mxu0 %v300
  %v518 = vpop.f32.mrb[0].mxu0
  %v519 = vadd.f32 %v85, %v518
  %v520 = vpop.f32.mrb[0].mxu0
  %v521 = vpop.f32.mrb[0].mxu0
  %v522 = vadd.f32 %v85, %v521
  %v523 = vpop.f32.mrb[0].mxu0
  %524 = vmatprep.mubr.bf16.mxu0 0
  %525 = vmatmul.mubr.bf16.gmra.mrb[0].mxu0 %v303
  %v526 = vpop.f32.mrb[0].mxu0
  %v527 = vadd.f32 %v85, %v526
  %v528 = vpop.f32.mrb[0].mxu0
  %v529 = vpop.f32.mrb[0].mxu0
  %v530 = vadd.f32 %v85, %v529
  %v531 = vpop.f32.mrb[0].mxu0
  %532 = vmatprep.mubr.bf16.mxu0 0
  %533 = vmatmul.mubr.bf16.gmra.mrb[0].mxu0 %v306
  %v534 = vpop.f32.mrb[0].mxu0
  %v535 = vadd.f32 %v85, %v534
  %v536 = vpop.f32.mrb[0].mxu0
  %v537 = vpop.f32.mrb[0].mxu0
  %v538 = vadd.f32 %v85, %v537
  %v539 = vpop.f32.mrb[0].mxu0
  %540 = vmatprep.mubr.bf16.mxu0 0
  %541 = vmatmul.mubr.bf16.gmra.mrb[0].mxu0 %v309
  %v542 = vpop.f32.mrb[0].mxu0
  %v543 = vadd.f32 %v85, %v542
  %v544 = vpop.f32.mrb[0].mxu0
  %v545 = vpop.f32.mrb[0].mxu0
  %v546 = vadd.f32 %v85, %v545
  %v547 = vpop.f32.mrb[0].mxu0
  %548 = vmatprep.mubr.bf16.mxu0 0
  %549 = vmatmul.mubr.bf16.gmra.mrb[0].mxu0 %v312
  %v550 = vpop.f32.mrb[0].mxu0
  %v551 = vadd.f32 %v85, %v550
  %v552 = vpop.f32.mrb[0].mxu0
  %v553 = vpop.f32.mrb[0].mxu0
  %v554 = vadd.f32 %v85, %v553
  %v555 = vpop.f32.mrb[0].mxu0
  %556 = vmatprep.mubr.bf16.mxu0 0
  %557 = vmatmul.mubr.bf16.gmra.mrb[0].mxu0 %v315
  %v558 = vpop.f32.mrb[0].mxu0
  %v559 = vadd.f32 %v85, %v558
  %v560 = vpop.f32.mrb[0].mxu0
  %v561 = vpop.f32.mrb[0].mxu0
  %v562 = vadd.f32 %v85, %v561
  %v563 = vpop.f32.mrb[0].mxu0
  %564 = vmatprep.mubr.bf16.mxu0 0
  %565 = vmatmul.mubr.bf16.gmra.mrb[0].mxu0 %v318
  %v566 = vpop.f32.mrb[0].mxu0
  %v567 = vadd.f32 %v85, %v566
  %v568 = vpop.f32.mrb[0].mxu0
  %v569 = vpop.f32.mrb[0].mxu0
  %v570 = vadd.f32 %v85, %v569
  %v571 = vpop.f32.mrb[0].mxu0
  %572 = vmatprep.mubr.bf16.mxu0 0
  %573 = vmatmul.mubr.bf16.gmra.mrb[0].mxu0 %v321
  %v574 = vpop.f32.mrb[0].mxu0
  %v575 = vadd.f32 %v85, %v574
  %v576 = vpop.f32.mrb[0].mxu0
  %v577 = vpop.f32.mrb[0].mxu0
  %v578 = vadd.f32 %v85, %v577
  %v579 = vpop.f32.mrb[0].mxu0
  %580 = vmatprep.mubr.bf16.mxu0 0
  %581 = vmatmul.mubr.bf16.gmra.mrb[0].mxu0 %v324
  %v582 = vpop.f32.mrb[0].mxu0
  %v583 = vadd.f32 %v85, %v582
  %v584 = vpop.f32.mrb[0].mxu0
  %v585 = vpop.f32.mrb[0].mxu0
  %v586 = vadd.f32 %v85, %v585
  %v587 = vpop.f32.mrb[0].mxu0
  %588 = vmatprep.mubr.bf16.mxu0 0
  %589 = vmatmul.mubr.bf16.gmra.mrb[0].mxu0 %v327
  %v590 = vpop.f32.mrb[0].mxu0
  %v591 = vadd.f32 %v85, %v590
  %v592 = vpop.f32.mrb[0].mxu0
  %v593 = vpop.f32.mrb[0].mxu0
  %v594 = vadd.f32 %v85, %v593
  %v595 = vpop.f32.mrb[0].mxu0
  %596 = vmatprep.mubr.bf16.mxu0 0
  %597 = vmatmul.mubr.bf16.gmra.mrb[0].mxu0 %v330
  %v598 = vpop.f32.mrb[0].mxu0
  %v599 = vadd.f32 %v85, %v598
  %v600 = vpop.f32.mrb[0].mxu0
  %v601 = vpop.f32.mrb[0].mxu0
  %v602 = vadd.f32 %v85, %v601
  %v603 = vpop.f32.mrb[0].mxu0
  %604 = vmatprep.mubr.bf16.mxu0 0
  %605 = vmatmul.mubr.bf16.gmra.mrb[0].mxu0 %v333
  %v606 = vpop.f32.mrb[0].mxu0
  %v607 = vadd.f32 %v85, %v606
  %v608 = vpop.f32.mrb[0].mxu0
  %v609 = vpop.f32.mrb[0].mxu0
  %v610 = vadd.f32 %v85, %v609
  %v611 = vpop.f32.mrb[0].mxu0
  %612 = vmatprep.mubr.bf16.mxu0 0
  %613 = vmatmul.mubr.bf16.gmra.mrb[0].mxu0 %v336
  %v614 = vpop.f32.mrb[0].mxu0
  %v615 = vadd.f32 %v85, %v614
  %v616 = vpop.f32.mrb[0].mxu0
  %v617 = vpop.f32.mrb[0].mxu0
  %v618 = vadd.f32 %v85, %v617
  %v619 = vpop.f32.mrb[0].mxu0
  %620 = vmatprep.mubr.bf16.mxu0 0
  %621 = vmatmul.mubr.bf16.gmra.mrb[0].mxu0 %v339
  %v622 = vpop.f32.mrb[0].mxu0
  %v623 = vadd.f32 %v85, %v622
  %v624 = vpop.f32.mrb[0].mxu0
  %v625 = vpop.f32.mrb[0].mxu0
  %v626 = vadd.f32 %v85, %v625
  %v627 = vpop.f32.mrb[0].mxu0
  %628 = vmatprep.mubr.bf16.mxu0 0
  %629 = vmatmul.mubr.bf16.gmra.mrb[0].mxu0 %v342
  %v630 = vpop.f32.mrb[0].mxu0
  %v631 = vadd.f32 %v85, %v630
  %v632 = vpop.f32.mrb[0].mxu0
  %v633 = vpop.f32.mrb[0].mxu0
  %v634 = vadd.f32 %v85, %v633
  %v635 = vpop.f32.mrb[0].mxu0
  %636 = vdwg.mxu0
  %v637 = vmax.f32 %v383, 0.0
  %v638 = vmax.f32 %v386, 0.0
  %v639 = vmax.f32 %v391, 0.0
  %v640 = vmax.f32 %v394, 0.0
  %v641 = vmax.f32 %v399, 0.0
  %v642 = vmax.f32 %v402, 0.0
  %v643 = vmax.f32 %v407, 0.0
  %v644 = vmax.f32 %v410, 0.0
  %v645 = vmax.f32 %v415, 0.0
  %v646 = vmax.f32 %v418, 0.0
  %v647 = vmax.f32 %v423, 0.0
  %v648 = vmax.f32 %v426, 0.0
  %v649 = vmax.f32 %v431, 0.0
  %v650 = vmax.f32 %v434, 0.0
  %v651 = vmax.f32 %v439, 0.0
  %v652 = vmax.f32 %v442, 0.0
  %v653 = vmax.f32 %v447, 0.0
  %v654 = vmax.f32 %v450, 0.0
  %v655 = vmax.f32 %v455, 0.0
  %v656 = vmax.f32 %v458, 0.0
  %v657 = vmax.f32 %v463, 0.0
  %v658 = vmax.f32 %v466, 0.0
  %v659 = vmax.f32 %v471, 0.0
  %v660 = vmax.f32 %v474, 0.0
  %v661 = vmax.f32 %v479, 0.0
  %v662 = vmax.f32 %v482, 0.0
  %v663 = vmax.f32 %v487, 0.0
  %v664 = vmax.f32 %v490, 0.0
  %v665 = vmax.f32 %v495, 0.0
  %v666 = vmax.f32 %v498, 0.0
  %v667 = vmax.f32 %v503, 0.0
  %v668 = vmax.f32 %v506, 0.0
  %v669 = vmax.f32 %v511, 0.0
  %v670 = vmax.f32 %v514, 0.0
  %v671 = vmax.f32 %v519, 0.0
  %v672 = vmax.f32 %v522, 0.0
  %v673 = vmax.f32 %v527, 0.0
  %v674 = vmax.f32 %v530, 0.0
  %v675 = vmax.f32 %v535, 0.0
  %v676 = vmax.f32 %v538, 0.0
  %v677 = vmax.f32 %v543, 0.0
  %v678 = vmax.f32 %v546, 0.0
  %v679 = vmax.f32 %v551, 0.0
  %v680 = vmax.f32 %v554, 0.0
  %v681 = vmax.f32 %v559, 0.0
  %v682 = vmax.f32 %v562, 0.0
  %v683 = vmax.f32 %v567, 0.0
  %v684 = vmax.f32 %v570, 0.0
  %v685 = vmax.f32 %v575, 0.0
  %v686 = vmax.f32 %v578, 0.0
  %v687 = vmax.f32 %v583, 0.0
  %v688 = vmax.f32 %v586, 0.0
  %v689 = vmax.f32 %v591, 0.0
  %v690 = vmax.f32 %v594, 0.0
  %v691 = vmax.f32 %v599, 0.0
  %v692 = vmax.f32 %v602, 0.0
  %v693 = vmax.f32 %v607, 0.0
  %v694 = vmax.f32 %v610, 0.0
  %v695 = vmax.f32 %v615, 0.0
  %v696 = vmax.f32 %v618, 0.0
  %v697 = vmax.f32 %v623, 0.0
  %v698 = vmax.f32 %v626, 0.0
  %v699 = vmax.f32 %v631, 0.0
  %v700 = vmax.f32 %v634, 0.0
  %v701 = vpack.c.bf16 %v638, %v637
  %v702 = vpack.c.bf16 %v640, %v639
  %v703 = vpack.c.bf16 %v642, %v641
  %v704 = vpack.c.bf16 %v644, %v643
  %v705 = vpack.c.bf16 %v646, %v645
  %v706 = vpack.c.bf16 %v648, %v647
  %v707 = vpack.c.bf16 %v650, %v649
  %v708 = vpack.c.bf16 %v652, %v651
  %v709 = vpack.c.bf16 %v654, %v653
  %v710 = vpack.c.bf16 %v656, %v655
  %v711 = vpack.c.bf16 %v658, %v657
  %v712 = vpack.c.bf16 %v660, %v659
  %v713 = vpack.c.bf16 %v662, %v661
  %v714 = vpack.c.bf16 %v664, %v663
  %v715 = vpack.c.bf16 %v666, %v665
  %v716 = vpack.c.bf16 %v668, %v667
  %v717 = vpack.c.bf16 %v670, %v669
  %v718 = vpack.c.bf16 %v672, %v671
  %v719 = vpack.c.bf16 %v674, %v673
  %v720 = vpack.c.bf16 %v676, %v675
  %v721 = vpack.c.bf16 %v678, %v677
  %v722 = vpack.c.bf16 %v680, %v679
  %v723 = vpack.c.bf16 %v682, %v681
  %v724 = vpack.c.bf16 %v684, %v683
  %v725 = vpack.c.bf16 %v686, %v685
  %v726 = vpack.c.bf16 %v688, %v687
  %v727 = vpack.c.bf16 %v690, %v689
  %v728 = vpack.c.bf16 %v692, %v691
  %v729 = vpack.c.bf16 %v694, %v693
  %v730 = vpack.c.bf16 %v696, %v695
  %v731 = vpack.c.bf16 %v698, %v697
  %v732 = vpack.c.bf16 %v700, %v699
  %v765 = vunpack.c.l.b16 %v701
  %v766 = vunpack.c.h.b16 %v701
  %v767 = vunpack.c.l.b16 %v702
  %v768 = vunpack.c.h.b16 %v702
  %v769 = vunpack.c.l.b16 %v703
  %v770 = vunpack.c.h.b16 %v703
  %v771 = vunpack.c.l.b16 %v704
  %v772 = vunpack.c.h.b16 %v704
  %v773 = vunpack.c.l.b16 %v705
  %v774 = vunpack.c.h.b16 %v705
  %v775 = vunpack.c.l.b16 %v706
  %v776 = vunpack.c.h.b16 %v706
  %v777 = vunpack.c.l.b16 %v707
  %v778 = vunpack.c.h.b16 %v707
  %v779 = vunpack.c.l.b16 %v708
  %v780 = vunpack.c.h.b16 %v708
  %v781 = vunpack.c.l.b16 %v709
  %v782 = vunpack.c.h.b16 %v709
  %v783 = vunpack.c.l.b16 %v710
  %v784 = vunpack.c.h.b16 %v710
  %v785 = vunpack.c.l.b16 %v711
  %v786 = vunpack.c.h.b16 %v711
  %v787 = vunpack.c.l.b16 %v712
  %v788 = vunpack.c.h.b16 %v712
  %v789 = vunpack.c.l.b16 %v713
  %v790 = vunpack.c.h.b16 %v713
  %v791 = vunpack.c.l.b16 %v714
  %v792 = vunpack.c.h.b16 %v714
  %v793 = vunpack.c.l.b16 %v715
  %v794 = vunpack.c.h.b16 %v715
  %v795 = vunpack.c.l.b16 %v716
  %v796 = vunpack.c.h.b16 %v716
  %v797 = vunpack.c.l.b16 %v717
  %v798 = vunpack.c.h.b16 %v717
  %v799 = vunpack.c.l.b16 %v718
  %v800 = vunpack.c.h.b16 %v718
  %v801 = vunpack.c.l.b16 %v719
  %v802 = vunpack.c.h.b16 %v719
  %v803 = vunpack.c.l.b16 %v720
  %v804 = vunpack.c.h.b16 %v720
  %v805 = vunpack.c.l.b16 %v721
  %v806 = vunpack.c.h.b16 %v721
  %v807 = vunpack.c.l.b16 %v722
  %v808 = vunpack.c.h.b16 %v722
  %v809 = vunpack.c.l.b16 %v723
  %v810 = vunpack.c.h.b16 %v723
  %v811 = vunpack.c.l.b16 %v724
  %v812 = vunpack.c.h.b16 %v724
  %v813 = vunpack.c.l.b16 %v725
  %v814 = vunpack.c.h.b16 %v725
  %v815 = vunpack.c.l.b16 %v726
  %v816 = vunpack.c.h.b16 %v726
  %v817 = vunpack.c.l.b16 %v727
  %v818 = vunpack.c.h.b16 %v727
  %v819 = vunpack.c.l.b16 %v728
  %v820 = vunpack.c.h.b16 %v728
  %v821 = vunpack.c.l.b16 %v729
  %v822 = vunpack.c.h.b16 %v729
  %v823 = vunpack.c.l.b16 %v730
  %v824 = vunpack.c.h.b16 %v730
  %v825 = vunpack.c.l.b16 %v731
  %v826 = vunpack.c.h.b16 %v731
  %v827 = vunpack.c.l.b16 %v732
  %v828 = vunpack.c.h.b16 %v732
  %v829 = vpack.c.b16 %v765, %v765
  %v830 = vpack.c.b16 %v766, %v766
  %v831 = vpack.c.b16 %v767, %v767
  %v832 = vpack.c.b16 %v768, %v768
  %v833 = vpack.c.b16 %v769, %v769
  %v834 = vpack.c.b16 %v770, %v770
  %v835 = vpack.c.b16 %v771, %v771
  %v836 = vpack.c.b16 %v772, %v772
  %v837 = vpack.c.b16 %v773, %v773
  %v838 = vpack.c.b16 %v774, %v774
  %v839 = vpack.c.b16 %v775, %v775
  %v840 = vpack.c.b16 %v776, %v776
  %v841 = vpack.c.b16 %v777, %v777
  %v842 = vpack.c.b16 %v778, %v778
  %v843 = vpack.c.b16 %v779, %v779
  %v844 = vpack.c.b16 %v780, %v780
  %v845 = vpack.c.b16 %v781, %v781
  %v846 = vpack.c.b16 %v782, %v782
  %v847 = vpack.c.b16 %v783, %v783
  %v848 = vpack.c.b16 %v784, %v784
  %v849 = vpack.c.b16 %v785, %v785
  %v850 = vpack.c.b16 %v786, %v786
  %v851 = vpack.c.b16 %v787, %v787
  %v852 = vpack.c.b16 %v788, %v788
  %v853 = vpack.c.b16 %v789, %v789
  %v854 = vpack.c.b16 %v790, %v790
  %v855 = vpack.c.b16 %v791, %v791
  %v856 = vpack.c.b16 %v792, %v792
  %v857 = vpack.c.b16 %v793, %v793
  %v858 = vpack.c.b16 %v794, %v794
  %v859 = vpack.c.b16 %v795, %v795
  %v860 = vpack.c.b16 %v796, %v796
  %v861 = vpack.c.b16 %v797, %v797
  %v862 = vpack.c.b16 %v798, %v798
  %v863 = vpack.c.b16 %v799, %v799
  %v864 = vpack.c.b16 %v800, %v800
  %v865 = vpack.c.b16 %v801, %v801
  %v866 = vpack.c.b16 %v802, %v802
  %v867 = vpack.c.b16 %v803, %v803
  %v868 = vpack.c.b16 %v804, %v804
  %v869 = vpack.c.b16 %v805, %v805
  %v870 = vpack.c.b16 %v806, %v806
  %v871 = vpack.c.b16 %v807, %v807
  %v872 = vpack.c.b16 %v808, %v808
  %v873 = vpack.c.b16 %v809, %v809
  %v874 = vpack.c.b16 %v810, %v810
  %v875 = vpack.c.b16 %v811, %v811
  %v876 = vpack.c.b16 %v812, %v812
  %v877 = vpack.c.b16 %v813, %v813
  %v878 = vpack.c.b16 %v814, %v814
  %v879 = vpack.c.b16 %v815, %v815
  %v880 = vpack.c.b16 %v816, %v816
  %v881 = vpack.c.b16 %v817, %v817
  %v882 = vpack.c.b16 %v818, %v818
  %v883 = vpack.c.b16 %v819, %v819
  %v884 = vpack.c.b16 %v820, %v820
  %v885 = vpack.c.b16 %v821, %v821
  %v886 = vpack.c.b16 %v822, %v822
  %v887 = vpack.c.b16 %v823, %v823
  %v888 = vpack.c.b16 %v824, %v824
  %v889 = vpack.c.b16 %v825, %v825
  %v890 = vpack.c.b16 %v826, %v826
  %v891 = vpack.c.b16 %v827, %v827
  %v892 = vpack.c.b16 %v828, %v828
  %957 = vst [vmem:[%s3] sm:$0xf] %v829
  %958 = vst [vmem:[%s3 + $0x4] sm:$0xf] %v830
  %959 = vst [vmem:[%s3 + $0x8] sm:$0xf] %v831
  %960 = vst [vmem:[%s3 + $0xc] sm:$0xf] %v832
  %961 = vst [vmem:[%s3 + $0x10] sm:$0xf] %v833
  %962 = vst [vmem:[%s3 + $0x14] sm:$0xf] %v834
  %963 = vst [vmem:[%s3 + $0x18] sm:$0xf] %v835
  %964 = vst [vmem:[%s3 + $0x1c] sm:$0xf] %v836
  %965 = vst [vmem:[%s3 + $0x20] sm:$0xf] %v837
  %966 = vst [vmem:[%s3 + $0x24] sm:$0xf] %v838
  %967 = vst [vmem:[%s3 + $0x28] sm:$0xf] %v839
  %968 = vst [vmem:[%s3 + $0x2c] sm:$0xf] %v840
  %969 = vst [vmem:[%s3 + $0x30] sm:$0xf] %v841
  %970 = vst [vmem:[%s3 + $0x34] sm:$0xf] %v842
  %971 = vst [vmem:[%s3 + $0x38] sm:$0xf] %v843
  %972 = vst [vmem:[%s3 + $0x3c] sm:$0xf] %v844
  %973 = vst [vmem:[%s3 + $0x40] sm:$0xf] %v845
  %974 = vst [vmem:[%s3 + $0x44] sm:$0xf] %v846
  %975 = vst [vmem:[%s3 + $0x48] sm:$0xf] %v847
  %976 = vst [vmem:[%s3 + $0x4c] sm:$0xf] %v848
  %977 = vst [vmem:[%s3 + $0x50] sm:$0xf] %v849
  %978 = vst [vmem:[%s3 + $0x54] sm:$0xf] %v850
  %979 = vst [vmem:[%s3 + $0x58] sm:$0xf] %v851
  %980 = vst [vmem:[%s3 + $0x5c] sm:$0xf] %v852
  %981 = vst [vmem:[%s3 + $0x60] sm:$0xf] %v853
  %982 = vst [vmem:[%s3 + $0x64] sm:$0xf] %v854
  %983 = vst [vmem:[%s3 + $0x68] sm:$0xf] %v855
  %984 = vst [vmem:[%s3 + $0x6c] sm:$0xf] %v856
  %985 = vst [vmem:[%s3 + $0x70] sm:$0xf] %v857
  %986 = vst [vmem:[%s3 + $0x74] sm:$0xf] %v858
  %987 = vst [vmem:[%s3 + $0x78] sm:$0xf] %v859
  %988 = vst [vmem:[%s3 + $0x7c] sm:$0xf] %v860
  %989 = vst [vmem:[%s3 + $0x80] sm:$0xf] %v861
  %990 = vst [vmem:[%s3 + $0x84] sm:$0xf] %v862
  %991 = vst [vmem:[%s3 + $0x88] sm:$0xf] %v863
  %992 = vst [vmem:[%s3 + $0x8c] sm:$0xf] %v864
  %993 = vst [vmem:[%s3 + $0x90] sm:$0xf] %v865
  %994 = vst [vmem:[%s3 + $0x94] sm:$0xf] %v866
  %995 = vst [vmem:[%s3 + $0x98] sm:$0xf] %v867
  %996 = vst [vmem:[%s3 + $0x9c] sm:$0xf] %v868
  %997 = vst [vmem:[%s3 + $0xa0] sm:$0xf] %v869
  %998 = vst [vmem:[%s3 + $0xa4] sm:$0xf] %v870
  %999 = vst [vmem:[%s3 + $0xa8] sm:$0xf] %v871
  %1000 = vst [vmem:[%s3 + $0xac] sm:$0xf] %v872
  %1001 = vst [vmem:[%s3 + $0xb0] sm:$0xf] %v873
  %1002 = vst [vmem:[%s3 + $0xb4] sm:$0xf] %v874
  %1003 = vst [vmem:[%s3 + $0xb8] sm:$0xf] %v875
  %1004 = vst [vmem:[%s3 + $0xbc] sm:$0xf] %v876
  %1005 = vst [vmem:[%s3 + $0xc0] sm:$0xf] %v877
  %1006 = vst [vmem:[%s3 + $0xc4] sm:$0xf] %v878
  %1007 = vst [vmem:[%s3 + $0xc8] sm:$0xf] %v879
  %1008 = vst [vmem:[%s3 + $0xcc] sm:$0xf] %v880
  %1009 = vst [vmem:[%s3 + $0xd0] sm:$0xf] %v881
  %1010 = vst [vmem:[%s3 + $0xd4] sm:$0xf] %v882
  %1011 = vst [vmem:[%s3 + $0xd8] sm:$0xf] %v883
  %1012 = vst [vmem:[%s3 + $0xdc] sm:$0xf] %v884
  %1013 = vst [vmem:[%s3 + $0xe0] sm:$0xf] %v885
  %1014 = vst [vmem:[%s3 + $0xe4] sm:$0xf] %v886
  %1015 = vst [vmem:[%s3 + $0xe8] sm:$0xf] %v887
  %1016 = vst [vmem:[%s3 + $0xec] sm:$0xf] %v888
  %1017 = vst [vmem:[%s3 + $0xf0] sm:$0xf] %v889
  %1018 = vst [vmem:[%s3 + $0xf4] sm:$0xf] %v890
  %1019 = vst [vmem:[%s3 + $0xf8] sm:$0xf] %v891
  %1020 = vst [vmem:[%s3 + $0xfc] sm:$0xf] %v892
  // Predicated region
  $region14: #{bottleneck_forward.2} parent=0 // pred_check
    _
  $region15: #{bottleneck_forward.2} parent=0 // pred_check_branch
    %1022 = sbr.rel (0) target = $region17
  $region16: #{bottleneck_forward.2} parent=0 // pred_region
    _
  $region17: #{bottleneck_forward.2} parent=0 // pred_fallthru
    _
  // Predicated region
  $region18: #{bottleneck_forward.2} parent=0 // pred_check
    _
  $region19: #{bottleneck_forward.2} parent=0 // pred_check_branch
    %1024 = sbr.rel (0) target = $region21
  $region20: #{bottleneck_forward.2} parent=0 // pred_region
    _
  $region21: #{bottleneck_forward.2} parent=0 // pred_fallthru
    _

// kernel: bottleneck_forward.3
$region0: #{bottleneck_forward.3}
  #allocation0 [shape = 'u32[]', space=smem, size = 0x4, offset = 0x4, fixed_abs, tag = 'smem constant byte address 0x4 - core index']
  #allocation1 [shape = 'u32[144,128]{1,0:T(1,128)}', space=vmem, size = 0x12000, scoped, tag = 'internal scratch']
  %s0 = inlined_call_operand.vmem [shape: bf16[2,2,2,160,128], index: 0, kind: input, shape index: {}]
  %s1 = inlined_call_operand.vmem [shape: bf16[2,128,8], index: 1, kind: input, shape index: {}]
  %s2 = inlined_call_operand.vmem [shape: bf16[3,3,128,128], index: 2, kind: input, shape index: {}]
  %s3 = inlined_call_operand.vmem [shape: f32[1,128], index: 3, kind: input, shape index: {}]
  %s4 = inlined_call_operand.vmem [shape: bf16[128,128], index: 4, kind: input, shape index: {}]
  %s5 = inlined_call_operand.vmem [shape: f32[1,128], index: 5, kind: input, shape index: {}]
  %s6 = inlined_call_operand.vmem [shape: bf16[8,128], index: 6, kind: input, shape index: {}]
  %s7 = inlined_call_operand.vmem [shape: f32[1,128], index: 7, kind: input, shape index: {}]
  %s8 = inlined_call_operand.vmem [shape: bf16[2,128,128], index: 8, kind: output, shape index: {}]
  %s9 = sld [smem:[#allocation0]]
  $region65: #{bottleneck_forward.3} parent=0
    _
  %s11 = ssub.s32 1, %s9
  %s12 = scalar_select 0, %s11, %s9
  loop: start=0, step=1, limit=4
  $region2: #{bottleneck_forward.3} parent=0 // loop_pre_header
    _
  $region3: #{bottleneck_forward.3} parent=0 // loop_header
    %s14 = sphi 0, %s18
    %p15 = scmp.ge.s32.totalorder %s14, 4
    %s24 = sphi 0, %s26
    %s27 = sphi 0, %s24
    %s28 = sphi 0, %s27
    %s44 = sphi 0, %s28
    %s50 = sphi 0, %s52
    %s53 = sphi 0, %s50
    %s54 = sphi 0, %s53
    %s70 = sphi 0, %s54
    %s74 = sphi 0, %s74
    %s76 = sphi 0, %s74
    %s77 = sphi 0, %s76
    %s91 = sphi 0, %s77
    %s95 = sphi 0, %s95
    %s97 = sphi 0, %s95
    %s98 = sphi 0, %s97
    %s112 = sphi 0, %s98
    %s116 = sphi 0, %s116
    %s118 = sphi 0, %s116
    %s119 = sphi 0, %s118
    %s133 = sphi 0, %s119
    %s137 = sphi 0, %s137
    %s139 = sphi 0, %s137
    %s140 = sphi 0, %s139
    %s154 = sphi 0, %s140
    %s158 = sphi 0, %s158
    %s160 = sphi 0, %s158
    %s161 = sphi 0, %s160
    %s175 = sphi 0, %s161
    %s179 = sphi 0, %s179
    %s181 = sphi 0, %s179
    %s182 = sphi 0, %s181
    %s196 = sphi 0, %s182
    %s202 = sphi 0, %s204
    %s205 = sphi 0, %s202
    %s206 = sphi 0, %s205
    %s222 = sphi 0, %s206
  $region4: #{bottleneck_forward.3} parent=0 // loop_header_branch
    %17 = sbr.rel (%p15) target = $region8
  $region5: #{bottleneck_forward.3} parent=0 // loop_body
    %s19 = ssub.s32 %s14, 1
    %s20 = ssub.s32 %s14, 2
    %s21 = sadd.s32 %s14, 1
    %s22 = ssub.s32 %s14, %s21
    %p23 = scmp.eq.s32.totalorder %s22, 0
    %s25 = sadd.s32 %s24, 1
    %s26 = scalar_select %p23, %s24, %s25
    %p29 = pneg %p23
    %p30 = scmp.eq.s32.totalorder %s14, 1
    %p31 = por %p29, %p30
    %p32 = scmp.ne.s32.totalorder %s24, %s27
    %p33 = scmp.eq.s32.totalorder %s14, 0
    %p34 = por %p32, %p33
    %p35 = scmp.ne.s32.totalorder %s24, %s27
    %p36 = scmp.eq.s32.totalorder %s19, 1
    %p37 = por %p35, %p36
    %p38 = scmp.ne.s32.totalorder %s27, %s28
    %p39 = scmp.eq.s32.totalorder %s19, 0
    %p40 = por %p38, %p39
    %p41 = scmp.ne.s32.totalorder %s27, %s28
    %p42 = scmp.eq.s32.totalorder %s20, 1
    %p43 = por %p41, %p42
    %p45 = scmp.ne.s32.totalorder %s28, %s44
    %p46 = scmp.eq.s32.totalorder %s20, 0
    %p47 = por %p45, %p46
    %s48 = ssub.s32 %s14, %s21
    %p49 = scmp.eq.s32.totalorder %s48, 0
    %s51 = sadd.s32 %s50, 1
    %s52 = scalar_select %p49, %s50, %s51
    %p55 = pneg %p49
    %p56 = scmp.eq.s32.totalorder %s14, 1
    %p57 = por %p55, %p56
    %p58 = scmp.ne.s32.totalorder %s50, %s53
    %p59 = scmp.eq.s32.totalorder %s14, 0
    %p60 = por %p58, %p59
    %p61 = scmp.ne.s32.totalorder %s50, %s53
    %p62 = scmp.eq.s32.totalorder %s19, 1
    %p63 = por %p61, %p62
    %p64 = scmp.ne.s32.totalorder %s53, %s54
    %p65 = scmp.eq.s32.totalorder %s19, 0
    %p66 = por %p64, %p65
    %p67 = scmp.ne.s32.totalorder %s53, %s54
    %p68 = scmp.eq.s32.totalorder %s20, 1
    %p69 = por %p67, %p68
    %p71 = scmp.ne.s32.totalorder %s54, %s70
    %p72 = scmp.eq.s32.totalorder %s20, 0
    %p73 = por %p71, %p72
    %s75 = sadd.s32 %s74, 1
    %p78 = scmp.eq.s32.totalorder %s14, 1
    %p79 = scmp.ne.s32.totalorder %s74, %s76
    %p80 = scmp.eq.s32.totalorder %s14, 0
    %p81 = por %p79, %p80
    %p82 = scmp.ne.s32.totalorder %s74, %s76
    %p83 = scmp.eq.s32.totalorder %s19, 1
    %p84 = por %p82, %p83
    %p85 = scmp.ne.s32.totalorder %s76, %s77
    %p86 = scmp.eq.s32.totalorder %s19, 0
    %p87 = por %p85, %p86
    %p88 = scmp.ne.s32.totalorder %s76, %s77
    %p89 = scmp.eq.s32.totalorder %s20, 1
    %p90 = por %p88, %p89
    %p92 = scmp.ne.s32.totalorder %s77, %s91
    %p93 = scmp.eq.s32.totalorder %s20, 0
    %p94 = por %p92, %p93
    %s96 = sadd.s32 %s95, 1
    %p99 = scmp.eq.s32.totalorder %s14, 1
    %p100 = scmp.ne.s32.totalorder %s95, %s97
    %p101 = scmp.eq.s32.totalorder %s14, 0
    %p102 = por %p100, %p101
    %p103 = scmp.ne.s32.totalorder %s95, %s97
    %p104 = scmp.eq.s32.totalorder %s19, 1
    %p105 = por %p103, %p104
    %p106 = scmp.ne.s32.totalorder %s97, %s98
    %p107 = scmp.eq.s32.totalorder %s19, 0
    %p108 = por %p106, %p107
    %p109 = scmp.ne.s32.totalorder %s97, %s98
    %p110 = scmp.eq.s32.totalorder %s20, 1
    %p111 = por %p109, %p110
    %p113 = scmp.ne.s32.totalorder %s98, %s112
    %p114 = scmp.eq.s32.totalorder %s20, 0
    %p115 = por %p113, %p114
    %s117 = sadd.s32 %s116, 1
    %p120 = scmp.eq.s32.totalorder %s14, 1
    %p121 = scmp.ne.s32.totalorder %s116, %s118
    %p122 = scmp.eq.s32.totalorder %s14, 0
    %p123 = por %p121, %p122
    %p124 = scmp.ne.s32.totalorder %s116, %s118
    %p125 = scmp.eq.s32.totalorder %s19, 1
    %p126 = por %p124, %p125
    %p127 = scmp.ne.s32.totalorder %s118, %s119
    %p128 = scmp.eq.s32.totalorder %s19, 0
    %p129 = por %p127, %p128
    %p130 = scmp.ne.s32.totalorder %s118, %s119
    %p131 = scmp.eq.s32.totalorder %s20, 1
    %p132 = por %p130, %p131
    %p134 = scmp.ne.s32.totalorder %s119, %s133
    %p135 = scmp.eq.s32.totalorder %s20, 0
    %p136 = por %p134, %p135
    %s138 = sadd.s32 %s137, 1
    %p141 = scmp.eq.s32.totalorder %s14, 1
    %p142 = scmp.ne.s32.totalorder %s137, %s139
    %p143 = scmp.eq.s32.totalorder %s14, 0
    %p144 = por %p142, %p143
    %p145 = scmp.ne.s32.totalorder %s137, %s139
    %p146 = scmp.eq.s32.totalorder %s19, 1
    %p147 = por %p145, %p146
    %p148 = scmp.ne.s32.totalorder %s139, %s140
    %p149 = scmp.eq.s32.totalorder %s19, 0
    %p150 = por %p148, %p149
    %p151 = scmp.ne.s32.totalorder %s139, %s140
    %p152 = scmp.eq.s32.totalorder %s20, 1
    %p153 = por %p151, %p152
    %p155 = scmp.ne.s32.totalorder %s140, %s154
    %p156 = scmp.eq.s32.totalorder %s20, 0
    %p157 = por %p155, %p156
    %s159 = sadd.s32 %s158, 1
    %p162 = scmp.eq.s32.totalorder %s14, 1
    %p163 = scmp.ne.s32.totalorder %s158, %s160
    %p164 = scmp.eq.s32.totalorder %s14, 0
    %p165 = por %p163, %p164
    %p166 = scmp.ne.s32.totalorder %s158, %s160
    %p167 = scmp.eq.s32.totalorder %s19, 1
    %p168 = por %p166, %p167
    %p169 = scmp.ne.s32.totalorder %s160, %s161
    %p170 = scmp.eq.s32.totalorder %s19, 0
    %p171 = por %p169, %p170
    %p172 = scmp.ne.s32.totalorder %s160, %s161
    %p173 = scmp.eq.s32.totalorder %s20, 1
    %p174 = por %p172, %p173
    %p176 = scmp.ne.s32.totalorder %s161, %s175
    %p177 = scmp.eq.s32.totalorder %s20, 0
    %p178 = por %p176, %p177
    %s180 = sadd.s32 %s179, 1
    %p183 = scmp.eq.s32.totalorder %s14, 1
    %p184 = scmp.ne.s32.totalorder %s179, %s181
    %p185 = scmp.eq.s32.totalorder %s14, 0
    %p186 = por %p184, %p185
    %p187 = scmp.ne.s32.totalorder %s179, %s181
    %p188 = scmp.eq.s32.totalorder %s19, 1
    %p189 = por %p187, %p188
    %p190 = scmp.ne.s32.totalorder %s181, %s182
    %p191 = scmp.eq.s32.totalorder %s19, 0
    %p192 = por %p190, %p191
    %p193 = scmp.ne.s32.totalorder %s181, %s182
    %p194 = scmp.eq.s32.totalorder %s20, 1
    %p195 = por %p193, %p194
    %p197 = scmp.ne.s32.totalorder %s182, %s196
    %p198 = scmp.eq.s32.totalorder %s20, 0
    %p199 = por %p197, %p198
    %s200 = ssub.s32 %s14, %s21
    %p201 = scmp.eq.s32.totalorder %s200, 0
    %s203 = sadd.s32 %s202, 1
    %s204 = scalar_select %p201, %s202, %s203
    %p207 = pneg %p201
    %p208 = scmp.eq.s32.totalorder %s14, 1
    %p209 = por %p207, %p208
    %p210 = scmp.ne.s32.totalorder %s202, %s205
    %p211 = scmp.eq.s32.totalorder %s14, 0
    %p212 = por %p210, %p211
    %p213 = scmp.ne.s32.totalorder %s202, %s205
    %p214 = scmp.eq.s32.totalorder %s19, 1
    %p215 = por %p213, %p214
    %p216 = scmp.ne.s32.totalorder %s205, %s206
    %p217 = scmp.eq.s32.totalorder %s19, 0
    %p218 = por %p216, %p217
    %p219 = scmp.ne.s32.totalorder %s205, %s206
    %p220 = scmp.eq.s32.totalorder %s20, 1
    %p221 = por %p219, %p220
    %p223 = scmp.ne.s32.totalorder %s206, %s222
    %p224 = scmp.eq.s32.totalorder %s20, 0
    %p225 = por %p223, %p224
    %p226 = scmp.le.s32.totalorder 1, %s14
    %p227 = scmp.lt.s32.totalorder %s14, 3
    %p228 = pnand %p226, %p227
    %p229 = pneg %p228
    // Predicated region
    $region9: #{bottleneck_forward.3} parent=5 // pred_check
      _
    $region10: #{bottleneck_forward.3} parent=5 // pred_check_branch
      %231 = sbr.rel (%p228) target = $region12
    $region11: #{bottleneck_forward.3} parent=5 // pred_region
      %s232 = ssub.s32 %s14, 1
      // Predicated region
      $region13: #{bottleneck_forward.3} parent=11 // pred_check
        %p233 = pneg %p87
      $region14: #{bottleneck_forward.3} parent=11 // pred_check_branch
        %235 = sbr.rel (%p233) target = $region16
      $region15: #{bottleneck_forward.3} parent=11 // pred_region
        _
      $region16: #{bottleneck_forward.3} parent=11 // pred_fallthru
        _
      // Predicated region
      $region17: #{bottleneck_forward.3} parent=11 // pred_check
        %p236 = pneg %p108
      $region18: #{bottleneck_forward.3} parent=11 // pred_check_branch
        %238 = sbr.rel (%p236) target = $region20
      $region19: #{bottleneck_forward.3} parent=11 // pred_region
        _
      $region20: #{bottleneck_forward.3} parent=11 // pred_fallthru
        _
      // Predicated region
      $region21: #{bottleneck_forward.3} parent=11 // pred_check
        %p239 = pneg %p129
      $region22: #{bottleneck_forward.3} parent=11 // pred_check_branch
        %241 = sbr.rel (%p239) target = $region24
      $region23: #{bottleneck_forward.3} parent=11 // pred_region
        _
      $region24: #{bottleneck_forward.3} parent=11 // pred_fallthru
        _
      // Predicated region
      $region25: #{bottleneck_forward.3} parent=11 // pred_check
        %p242 = pneg %p150
      $region26: #{bottleneck_forward.3} parent=11 // pred_check_branch
        %244 = sbr.rel (%p242) target = $region28
      $region27: #{bottleneck_forward.3} parent=11 // pred_region
        _
      $region28: #{bottleneck_forward.3} parent=11 // pred_fallthru
        _
      // Predicated region
      $region29: #{bottleneck_forward.3} parent=11 // pred_check
        %p245 = pneg %p171
      $region30: #{bottleneck_forward.3} parent=11 // pred_check_branch
        %247 = sbr.rel (%p245) target = $region32
      $region31: #{bottleneck_forward.3} parent=11 // pred_region
        _
      $region32: #{bottleneck_forward.3} parent=11 // pred_fallthru
        _
      // Predicated region
      $region33: #{bottleneck_forward.3} parent=11 // pred_check
        %p248 = pneg %p192
      $region34: #{bottleneck_forward.3} parent=11 // pred_check_branch
        %250 = sbr.rel (%p248) target = $region36
      $region35: #{bottleneck_forward.3} parent=11 // pred_region
        _
      $region36: #{bottleneck_forward.3} parent=11 // pred_fallthru
        _
    $region12: #{bottleneck_forward.3} parent=5 // pred_fallthru
      _
    %p251 = scmp.lt.s32.totalorder %s14, 2
    // Predicated region
    $region37: #{bottleneck_forward.3} parent=5 // pred_check
      %p252 = pneg %p251
    $region38: #{bottleneck_forward.3} parent=5 // pred_check_branch
      %254 = sbr.rel (%p252) target = $region40
    $region39: #{bottleneck_forward.3} parent=5 // pred_region
      // Predicated region
      $region41: #{bottleneck_forward.3} parent=39 // pred_check
        %p255 = pneg %p34
      $region42: #{bottleneck_forward.3} parent=39 // pred_check_branch
        %257 = sbr.rel (%p255) target = $region44
      $region43: #{bottleneck_forward.3} parent=39 // pred_region
        %p258 = scmp.lt.s32.totalorder %s14, 1
        %s259 = scalar_select %p258, %s14, 1
        %s260 = smul.addr %s259, 80
        %s261 = smul.addr %s260, 4
        %s262 = scalar_lea.vmem %s0, %s261
      $region44: #{bottleneck_forward.3} parent=39 // pred_fallthru
        _
      // Predicated region
      $region45: #{bottleneck_forward.3} parent=39 // pred_check
        %p263 = pneg %p60
      $region46: #{bottleneck_forward.3} parent=39 // pred_check_branch
        %265 = sbr.rel (%p263) target = $region48
      $region47: #{bottleneck_forward.3} parent=39 // pred_region
        %p266 = scmp.lt.s32.totalorder %s14, 1
        %s267 = scalar_select %p266, %s14, 1
        %s268 = smul.addr %s267, 16
        %s269 = smul.addr %s268, 4
        %s270 = scalar_lea.vmem %s1, %s269
      $region48: #{bottleneck_forward.3} parent=39 // pred_fallthru
        _
    $region40: #{bottleneck_forward.3} parent=5 // pred_fallthru
      _
    %p271 = scmp.le.s32.totalorder 1, %s14
    %p272 = scmp.lt.s32.totalorder %s14, 3
    %p273 = pnand %p271, %p272
    %p274 = pneg %p273
    // Predicated region
    $region49: #{bottleneck_forward.3} parent=5 // pred_check
      _
    $region50: #{bottleneck_forward.3} parent=5 // pred_check_branch
      %276 = sbr.rel (%p273) target = $region52
    $region51: #{bottleneck_forward.3} parent=5 // pred_region
      %s277 = ssub.s32 %s14, 1
      %p278 = scmp.lt.s32.totalorder %s19, 1
      %s279 = scalar_select %p278, %s19, 1
      %s280 = smul.addr %s279, 80
      %s281 = smul.addr %s280, 4
      %s282 = scalar_lea.vmem %s0, %s281
      %p283 = pneg %p40
      %p284 = pneg %p37
      %p285 = scmp.lt.s32.totalorder %s19, 1
      %s286 = scalar_select %p285, %s19, 1
      %s287 = smul.addr %s286, 16
      %s288 = smul.addr %s287, 4
      %s289 = scalar_lea.vmem %s1, %s288
      %p290 = pneg %p66
      %p291 = pneg %p63
      %p292 = pneg %p87
      %p293 = pneg %p84
      %p294 = pneg %p108
      %p295 = pneg %p105
      %p296 = pneg %p129
      %p297 = pneg %p126
      %p298 = pneg %p150
      %p299 = pneg %p147
      %p300 = pneg %p171
      %p301 = pneg %p168
      %p302 = pneg %p192
      %p303 = pneg %p189
      %p304 = pneg %p218
      %p305 = pneg %p215
      %p306 = scmp.lt.s32.totalorder %s19, 1
      %s307 = scalar_select %p306, %s19, 1
      %s308 = smul.addr %s307, 16
      %s309 = smul.addr %s308, 4
      %s310 = scalar_lea.vmem %s8, %s309
      %p311 = scmp.lt.s32.totalorder %s19, 1
      %s312 = scalar_select %p311, %s19, 1
      %s313 = smul.addr %s312, 80
      %s314 = smul.addr %s313, 4
      %s315 = scalar_lea.vmem %s0, %s314
      %p316 = scmp.lt.s32.totalorder %s19, 1
      %s317 = scalar_select %p316, %s19, 1
      %s318 = smul.addr %s317, 16
      %s319 = smul.addr %s318, 4
      %s320 = scalar_lea.vmem %s1, %s319
      %p321 = scmp.lt.s32.totalorder %s19, 1
      %s322 = scalar_select %p321, %s19, 1
      %s323 = smul.addr %s322, 16
      %s324 = smul.addr %s323, 4
      %s325 = scalar_lea.vmem %s8, %s324
      %v327 = vld [vmem:[%s315] sm:$0xf]
      %v328 = vld [vmem:[%s315 + $0x4] sm:$0xf]
      %v329 = vld [vmem:[%s315 + $0x8] sm:$0xf]
      %v330 = vld [vmem:[%s315 + $0xc] sm:$0xf]
      %v331 = vld [vmem:[%s315 + $0x10] sm:$0xf]
      %v332 = vld [vmem:[%s315 + $0x14] sm:$0xf]
      %v333 = vld [vmem:[%s315 + $0x18] sm:$0xf]
      %v334 = vld [vmem:[%s315 + $0x1c] sm:$0xf]
      %v335 = vld [vmem:[%s315 + $0x20] sm:$0xf]
      %v336 = vld [vmem:[%s315 + $0x24] sm:$0xf]
      %v337 = vld [vmem:[%s315 + $0x28] sm:$0xf]
      %v338 = vld [vmem:[%s315 + $0x2c] sm:$0xf]
      %v339 = vld [vmem:[%s315 + $0x30] sm:$0xf]
      %v340 = vld [vmem:[%s315 + $0x34] sm:$0xf]
      %v341 = vld [vmem:[%s315 + $0x38] sm:$0xf]
      %v342 = vld [vmem:[%s315 + $0x3c] sm:$0xf]
      %v343 = vld [vmem:[%s315 + $0x40] sm:$0xf]
      %v344 = vld [vmem:[%s315 + $0x44] sm:$0xf]
      %v345 = vld [vmem:[%s315 + $0x48] sm:$0xf]
      %v346 = vunpack.c.l.bf16 %v327
      %v347 = vunpack.c.l.bf16 %v328
      %v348 = vunpack.c.l.bf16 %v329
      %v349 = vunpack.c.l.bf16 %v330
      %v350 = vunpack.c.l.bf16 %v331
      %v351 = vunpack.c.l.bf16 %v332
      %v352 = vunpack.c.l.bf16 %v333
      %v353 = vunpack.c.l.bf16 %v334
      %v354 = vunpack.c.l.bf16 %v335
      %v355 = vunpack.c.l.bf16 %v336
      %v356 = vunpack.c.l.bf16 %v337
      %v357 = vunpack.c.l.bf16 %v338
      %v358 = vunpack.c.l.bf16 %v339
      %v359 = vunpack.c.l.bf16 %v340
      %v360 = vunpack.c.l.bf16 %v341
      %v361 = vunpack.c.l.bf16 %v342
      %v362 = vunpack.c.l.bf16 %v343
      %v363 = vunpack.c.l.bf16 %v344
      %v364 = vunpack.c.l.bf16 %v345
      %v365 = vpack.c.bf16 %v347, %v346
      %v366 = vpack.c.bf16 %v349, %v348
      %v367 = vpack.c.bf16 %v351, %v350
      %v368 = vpack.c.bf16 %v353, %v352
      %v369 = vpack.c.bf16 %v355, %v354
      %v370 = vpack.c.bf16 %v357, %v356
      %v371 = vpack.c.bf16 %v359, %v358
      %v372 = vpack.c.bf16 %v361, %v360
      %v373 = vld [vmem:[%s2] sm:$0xf]
      %v374 = vld [vmem:[%s2 + $0x4] sm:$0xf]
      %v375 = vld [vmem:[%s2 + $0x8] sm:$0xf]
      %v376 = vld [vmem:[%s2 + $0xc] sm:$0xf]
      %v377 = vld [vmem:[%s2 + $0x10] sm:$0xf]
      %v378 = vld [vmem:[%s2 + $0x14] sm:$0xf]
      %v379 = vld [vmem:[%s2 + $0x18] sm:$0xf]
      %v380 = vld [vmem:[%s2 + $0x1c] sm:$0xf]
      %v381 = vld [vmem:[%s2 + $0x20] sm:$0xf]
      %v382 = vld [vmem:[%s2 + $0x24] sm:$0xf]
      %v383 = vld [vmem:[%s2 + $0x28] sm:$0xf]
      %v384 = vld [vmem:[%s2 + $0x2c] sm:$0xf]
      %v385 = vld [vmem:[%s2 + $0x30] sm:$0xf]
      %v386 = vld [vmem:[%s2 + $0x34] sm:$0xf]
      %v387 = vld [vmem:[%s2 + $0x38] sm:$0xf]
      %v388 = vld [vmem:[%s2 + $0x3c] sm:$0xf]
      %v389 = vpack.c.bf16 %v362, %v362
      %s390 = scalar_lea.vmem %s2, 128
      %v391 = vld [vmem:[%s390] sm:$0xf]
      %v392 = vld [vmem:[%s390 + $0x4] sm:$0xf]
      %v393 = vld [vmem:[%s390 + $0x8] sm:$0xf]
      %v394 = vld [vmem:[%s390 + $0xc] sm:$0xf]
      %v395 = vld [vmem:[%s390 + $0x10] sm:$0xf]
      %v396 = vld [vmem:[%s390 + $0x14] sm:$0xf]
      %v397 = vld [vmem:[%s390 + $0x18] sm:$0xf]
      %v398 = vld [vmem:[%s390 + $0x1c] sm:$0xf]
      %v399 = vld [vmem:[%s390 + $0x20] sm:$0xf]
      %v400 = vld [vmem:[%s390 + $0x24] sm:$0xf]
      %v401 = vld [vmem:[%s390 + $0x28] sm:$0xf]
      %v402 = vld [vmem:[%s390 + $0x2c] sm:$0xf]
      %v403 = vld [vmem:[%s390 + $0x30] sm:$0xf]
      %v404 = vld [vmem:[%s390 + $0x34] sm:$0xf]
      %v405 = vld [vmem:[%s390 + $0x38] sm:$0xf]
      %v406 = vld [vmem:[%s390 + $0x3c] sm:$0xf]
      %vm407 = vsmask.f32 7424
      %v409 = vshrl.u32 %v365, 16
      %v411 = vshll.u32 %v365, 16
      %v413 = vrot.slane %v411, 1
      %v414 = vor.u32 %v409, %v413
      %v416 = vshll.u32 %v366, 16
      %v418 = vrot.slane %v416, 1
      %v419 = vsel %vm407, %v414, %v418
      %v420 = vshrl.u32 %v366, 16
      %v422 = vor.u32 %v420, %v418
      %v424 = vshll.u32 %v367, 16
      %v426 = vrot.slane %v424, 1
      %v427 = vsel %vm407, %v422, %v426
      %v428 = vshrl.u32 %v367, 16
      %v430 = vor.u32 %v428, %v426
      %v432 = vshll.u32 %v368, 16
      %v434 = vrot.slane %v432, 1
      %v435 = vsel %vm407, %v430, %v434
      %v436 = vshrl.u32 %v368, 16
      %v438 = vor.u32 %v436, %v434
      %v440 = vshll.u32 %v369, 16
      %v442 = vrot.slane %v440, 1
      %v443 = vsel %vm407, %v438, %v442
      %v444 = vshrl.u32 %v369, 16
      %v446 = vor.u32 %v444, %v442
      %v448 = vshll.u32 %v370, 16
      %v450 = vrot.slane %v448, 1
      %v451 = vsel %vm407, %v446, %v450
      %v452 = vshrl.u32 %v370, 16
      %v454 = vor.u32 %v452, %v450
      %v456 = vshll.u32 %v371, 16
      %v458 = vrot.slane %v456, 1
      %v459 = vsel %vm407, %v454, %v458
      %v460 = vshrl.u32 %v371, 16
      %v462 = vor.u32 %v460, %v458
      %v464 = vshll.u32 %v372, 16
      %v466 = vrot.slane %v464, 1
      %v467 = vsel %vm407, %v462, %v466
      %v468 = vshrl.u32 %v372, 16
      %v470 = vor.u32 %v468, %v466
      %v472 = vshll.u32 %v389, 16
      %v474 = vrot.slane %v472, 1
      %v475 = vsel %vm407, %v470, %v474
      %v500 = vunpack.c.l.b16 %v391
      %v501 = vunpack.c.l.b16 %v392
      %v502 = vunpack.c.l.b16 %v393
      %v503 = vunpack.c.l.b16 %v394
      %v504 = vunpack.c.l.b16 %v395
      %v505 = vunpack.c.l.b16 %v396
      %v506 = vunpack.c.l.b16 %v397
      %v507 = vunpack.c.l.b16 %v398
      %v508 = vunpack.c.l.b16 %v399
      %v509 = vunpack.c.l.b16 %v400
      %v510 = vunpack.c.l.b16 %v401
      %v511 = vunpack.c.l.b16 %v402
      %v512 = vunpack.c.l.b16 %v403
      %v513 = vunpack.c.l.b16 %v404
      %v514 = vunpack.c.l.b16 %v405
      %v515 = vunpack.c.l.b16 %v406
      %v516 = vpack.c.b16 %v501, %v500
      %v517 = vpack.c.b16 %v503, %v502
      %v518 = vpack.c.b16 %v505, %v504
      %v519 = vpack.c.b16 %v507, %v506
      %v520 = vpack.c.b16 %v509, %v508
      %v521 = vpack.c.b16 %v511, %v510
      %v522 = vpack.c.b16 %v513, %v512
      %v523 = vpack.c.b16 %v515, %v514
      %532 = vmatprep.subr.bf16.mxu0 0
      %533 = vmatpush1.bf16.msra.mxu0 %v516
      %534 = vmatprep.subr.bf16.mxu0 0
      %535 = vmatpush1.bf16.msra.mxu0 %v517
      %536 = vmatprep.subr.bf16.mxu0 0
      %537 = vmatpush1.bf16.msra.mxu0 %v518
      %538 = vmatprep.subr.bf16.mxu0 0
      %539 = vmatpush1.bf16.msra.mxu0 %v519
      %540 = vmatprep.subr.bf16.mxu0 0
      %541 = vmatpush1.bf16.msra.mxu0 %v520
      %542 = vmatprep.subr.bf16.mxu0 0
      %543 = vmatpush1.bf16.msra.mxu0 %v521
      %544 = vmatprep.subr.bf16.mxu0 0
      %545 = vmatpush1.bf16.msra.mxu0 %v522
      %546 = vmatprep.subr.bf16.mxu0 0
      %547 = vmatpush1.bf16.msra.mxu0 %v523
      %548 = vmatprep.subr.bf16.mxu0 0
      %549 = vmatpush1.bf16.msra.mxu0 0
      %550 = vmatprep.subr.bf16.mxu0 0
      %551 = vmatpush1.bf16.msra.mxu0 0
      %552 = vmatprep.subr.bf16.mxu0 0
      %553 = vmatpush1.bf16.msra.mxu0 0
      %554 = vmatprep.subr.bf16.mxu0 0
      %555 = vmatpush1.bf16.msra.mxu0 0
      %556 = vmatprep.subr.bf16.mxu0 0
      %557 = vmatpush1.bf16.msra.mxu0 0
      %558 = vmatprep.subr.bf16.mxu0 0
      %559 = vmatpush1.bf16.msra.mxu0 0
      %560 = vmatprep.subr.bf16.mxu0 0
      %561 = vmatpush1.bf16.msra.mxu0 0
      %562 = vmatprep.subr.bf16.mxu0 0
      %563 = vmatpush1.bf16.msra.mxu0 0
      %564 = vmatprep.mubr.bf16.mxu0 0
      %565 = vmatmul.mubr.bf16.gmra.mrb[0].mxu0 %v419
      %v566 = vpop.f32.mrb[0].mxu0
      %v567 = vadd.f32 0.0, %v566
      %v568 = vpop.f32.mrb[0].mxu0
      %v569 = vpop.f32.mrb[0].mxu0
      %v570 = vadd.f32 0.0, %v569
      %v571 = vpop.f32.mrb[0].mxu0
      %572 = vmatprep.mubr.bf16.mxu0 0
      %573 = vmatmul.mubr.bf16.gmra.mrb[0].mxu0 %v427
      %v574 = vpop.f32.mrb[0].mxu0
      %v575 = vadd.f32 0.0, %v574
      %v576 = vpop.f32.mrb[0].mxu0
      %v577 = vpop.f32.mrb[0].mxu0
      %v578 = vadd.f32 0.0, %v577
      %v579 = vpop.f32.mrb[0].mxu0
      %580 = vmatprep.mubr.bf16.mxu0 0
      %581 = vmatmul.mubr.bf16.gmra.mrb[0].mxu0 %v435
      %v582 = vpop.f32.mrb[0].mxu0
      %v583 = vadd.f32 0.0, %v582
      %v584 = vpop.f32.mrb[0].mxu0
      %v585 = vpop.f32.mrb[0].mxu0
      %v586 = vadd.f32 0.0, %v585
      %v587 = vpop.f32.mrb[0].mxu0
      %588 = vmatprep.mubr.bf16.mxu0 0
      %589 = vmatmul.mubr.bf16.gmra.mrb[0].mxu0 %v443
      %v590 = vpop.f32.mrb[0].mxu0
      %v591 = vadd.f32 0.0, %v590
      %v592 = vpop.f32.mrb[0].mxu0
      %v593 = vpop.f32.mrb[0].mxu0
      %v594 = vadd.f32 0.0, %v593
      %v595 = vpop.f32.mrb[0].mxu0
      %596 = vmatprep.mubr.bf16.mxu0 0
      %597 = vmatmul.mubr.bf16.gmra.mrb[0].mxu0 %v451
      %v598 = vpop.f32.mrb[0].mxu0
      %v599 = vadd.f32 0.0, %v598
      %v600 = vpop.f32.mrb[0].mxu0
      %v601 = vpop.f32.mrb[0].mxu0
      %v602 = vadd.f32 0.0, %v601
      %v603 = vpop.f32.mrb[0].mxu0
      %604 = vmatprep.mubr.bf16.mxu0 0
      %605 = vmatmul.mubr.bf16.gmra.mrb[0].mxu0 %v459
      %v606 = vpop.f32.mrb[0].mxu0
      %v607 = vadd.f32 0.0, %v606
      %v608 = vpop.f32.mrb[0].mxu0
      %v609 = vpop.f32.mrb[0].mxu0
      %v610 = vadd.f32 0.0, %v609
      %v611 = vpop.f32.mrb[0].mxu0
      %612 = vmatprep.mubr.bf16.mxu0 0
      %613 = vmatmul.mubr.bf16.gmra.mrb[0].mxu0 %v467
      %v614 = vpop.f32.mrb[0].mxu0
      %v615 = vadd.f32 0.0, %v614
      %v616 = vpop.f32.mrb[0].mxu0
      %v617 = vpop.f32.mrb[0].mxu0
      %v618 = vadd.f32 0.0, %v617
      %v619 = vpop.f32.mrb[0].mxu0
      %620 = vmatprep.mubr.bf16.mxu0 0
      %621 = vmatmul.mubr.bf16.gmra.mrb[0].mxu0 %v475
      %v622 = vpop.f32.mrb[0].mxu0
      %v623 = vadd.f32 0.0, %v622
      %v624 = vpop.f32.mrb[0].mxu0
      %v625 = vpop.f32.mrb[0].mxu0
      %v626 = vadd.f32 0.0, %v625
      %v627 = vpop.f32.mrb[0].mxu0
      %628 = vdwg.mxu0
      %v645 = vunpack.c.l.b16 %v373
      %v646 = vunpack.c.l.b16 %v374
      %v647 = vunpack.c.l.b16 %v375
      %v648 = vunpack.c.l.b16 %v376
      %v649 = vunpack.c.l.b16 %v377
      %v650 = vunpack.c.l.b16 %v378
      %v651 = vunpack.c.l.b16 %v379
      %v652 = vunpack.c.l.b16 %v380
      %v653 = vunpack.c.l.b16 %v381
      %v654 = vunpack.c.l.b16 %v382
      %v655 = vunpack.c.l.b16 %v383
      %v656 = vunpack.c.l.b16 %v384
      %v657 = vunpack.c.l.b16 %v385
      %v658 = vunpack.c.l.b16 %v386
      %v659 = vunpack.c.l.b16 %v387
      %v660 = vunpack.c.l.b16 %v388
      %v661 = vpack.c.b16 %v646, %v645
      %v662 = vpack.c.b16 %v648, %v647
      %v663 = vpack.c.b16 %v650, %v649
      %v664 = vpack.c.b16 %v652, %v651
      %v665 = vpack.c.b16 %v654, %v653
      %v666 = vpack.c.b16 %v656, %v655
      %v667 = vpack.c.b16 %v658, %v657
      %v668 = vpack.c.b16 %v660, %v659
      %677 = vmatprep.subr.bf16.mxu0 0
      %678 = vmatpush1.bf16.msra.mxu0 %v661
      %679 = vmatprep.subr.bf16.mxu0 0
      %680 = vmatpush1.bf16.msra.mxu0 %v662
      %681 = vmatprep.subr.bf16.mxu0 0
      %682 = vmatpush1.bf16.msra.mxu0 %v663
      %683 = vmatprep.subr.bf16.mxu0 0
      %684 = vmatpush1.bf16.msra.mxu0 %v664
      %685 = vmatprep.subr.bf16.mxu0 0
      %686 = vmatpush1.bf16.msra.mxu0 %v665
      %687 = vmatprep.subr.bf16.mxu0 0
      %688 = vmatpush1.bf16.msra.mxu0 %v666
      %689 = vmatprep.subr.bf16.mxu0 0
      %690 = vmatpush1.bf16.msra.mxu0 %v667
      %691 = vmatprep.subr.bf16.mxu0 0
      %692 = vmatpush1.bf16.msra.mxu0 %v668
      %693 = vmatprep.subr.bf16.mxu0 0
      %694 = vmatpush1.bf16.msra.mxu0 0
      %695 = vmatprep.subr.bf16.mxu0 0
      %696 = vmatpush1.bf16.msra.mxu0 0
      %697 = vmatprep.subr.bf16.mxu0 0
      %698 = vmatpush1.bf16.msra.mxu0 0
      %699 = vmatprep.subr.bf16.mxu0 0
      %700 = vmatpush1.bf16.msra.mxu0 0
      %701 = vmatprep.subr.bf16.mxu0 0
      %702 = vmatpush1.bf16.msra.mxu0 0
      %703 = vmatprep.subr.bf16.mxu0 0
      %704 = vmatpush1.bf16.msra.mxu0 0
      %705 = vmatprep.subr.bf16.mxu0 0
      %706 = vmatpush1.bf16.msra.mxu0 0
      %707 = vmatprep.subr.bf16.mxu0 0
      %708 = vmatpush1.bf16.msra.mxu0 0
      %709 = vmatprep.mubr.bf16.mxu0 0
      %710 = vmatmul.mubr.bf16.gmra.mrb[0].mxu0 %v365
      %v711 = vpop.f32.mrb[0].mxu0
      %v712 = vadd.f32 %v567, %v711
      %v713 = vpop.f32.mrb[0].mxu0
      %v714 = vpop.f32.mrb[0].mxu0
      %v715 = vadd.f32 %v570, %v714
      %v716 = vpop.f32.mrb[0].mxu0
      %717 = vmatprep.mubr.bf16.mxu0 0
      %718 = vmatmul.mubr.bf16.gmra.mrb[0].mxu0 %v366
      %v719 = vpop.f32.mrb[0].mxu0
      %v720 = vadd.f32 %v575, %v719
      %v721 = vpop.f32.mrb[0].mxu0
      %v722 = vpop.f32.mrb[0].mxu0
      %v723 = vadd.f32 %v578, %v722
      %v724 = vpop.f32.mrb[0].mxu0
      %725 = vmatprep.mubr.bf16.mxu0 0
      %726 = vmatmul.mubr.bf16.gmra.mrb[0].mxu0 %v367
      %v727 = vpop.f32.mrb[0].mxu0
      %v728 = vadd.f32 %v583, %v727
      %v729 = vpop.f32.mrb[0].mxu0
      %v730 = vpop.f32.mrb[0].mxu0
      %v731 = vadd.f32 %v586, %v730
      %v732 = vpop.f32.mrb[0].mxu0
      %733 = vmatprep.mubr.bf16.mxu0 0
      %734 = vmatmul.mubr.bf16.gmra.mrb[0].mxu0 %v368
      %v735 = vpop.f32.mrb[0].mxu0
      %v736 = vadd.f32 %v591, %v735
      %v737 = vpop.f32.mrb[0].mxu0
      %v738 = vpop.f32.mrb[0].mxu0
      %v739 = vadd.f32 %v594, %v738
      %v740 = vpop.f32.mrb[0].mxu0
      %741 = vmatprep.mubr.bf16.mxu0 0
      %742 = vmatmul.mubr.bf16.gmra.mrb[0].mxu0 %v369
      %v743 = vpop.f32.mrb[0].mxu0
      %v744 = vadd.f32 %v599, %v743
      %v745 = vpop.f32.mrb[0].mxu0
      %v746 = vpop.f32.mrb[0].mxu0
      %v747 = vadd.f32 %v602, %v746
      %v748 = vpop.f32.mrb[0].mxu0
      %749 = vmatprep.mubr.bf16.mxu0 0
      %750 = vmatmul.mubr.bf16.gmra.mrb[0].mxu0 %v370
      %v751 = vpop.f32.mrb[0].mxu0
      %v752 = vadd.f32 %v607, %v751
      %v753 = vpop.f32.mrb[0].mxu0
      %v754 = vpop.f32.mrb[0].mxu0
      %v755 = vadd.f32 %v610, %v754
      %v756 = vpop.f32.mrb[0].mxu0
      %757 = vmatprep.mubr.bf16.mxu0 0
      %758 = vmatmul.mubr.bf16.gmra.mrb[0].mxu0 %v371
      %v759 = vpop.f32.mrb[0].mxu0
      %v760 = vadd.f32 %v615, %v759
      %v761 = vpop.f32.mrb[0].mxu0
      %v762 = vpop.f32.mrb[0].mxu0
      %v763 = vadd.f32 %v618, %v762
      %v764 = vpop.f32.mrb[0].mxu0
      %765 = vmatprep.mubr.bf16.mxu0 0
      %766 = vmatmul.mubr.bf16.gmra.mrb[0].mxu0 %v372
      %v767 = vpop.f32.mrb[0].mxu0
      %v768 = vadd.f32 %v623, %v767
      %v769 = vpop.f32.mrb[0].mxu0
      %v770 = vpop.f32.mrb[0].mxu0
      %v771 = vadd.f32 %v626, %v770
      %v772 = vpop.f32.mrb[0].mxu0
      %773 = vdwg.mxu0
      %v774 = vpack.c.bf16 %v363, %v362
      %s775 = scalar_lea.vmem %s2, 384
      %v776 = vld [vmem:[%s775] sm:$0xf]
      %v777 = vld [vmem:[%s775 + $0x4] sm:$0xf]
      %v778 = vld [vmem:[%s775 + $0x8] sm:$0xf]
      %v779 = vld [vmem:[%s775 + $0xc] sm:$0xf]
      %v780 = vld [vmem:[%s775 + $0x10] sm:$0xf]
      %v781 = vld [vmem:[%s775 + $0x14] sm:$0xf]
      %v782 = vld [vmem:[%s775 + $0x18] sm:$0xf]
      %v783 = vld [vmem:[%s775 + $0x1c] sm:$0xf]
      %v784 = vld [vmem:[%s775 + $0x20] sm:$0xf]
      %v785 = vld [vmem:[%s775 + $0x24] sm:$0xf]
      %v786 = vld [vmem:[%s775 + $0x28] sm:$0xf]
      %v787 = vld [vmem:[%s775 + $0x2c] sm:$0xf]
      %v788 = vld [vmem:[%s775 + $0x30] sm:$0xf]
      %v789 = vld [vmem:[%s775 + $0x34] sm:$0xf]
      %v790 = vld [vmem:[%s775 + $0x38] sm:$0xf]
      %v791 = vld [vmem:[%s775 + $0x3c] sm:$0xf]
      %v808 = vunpack.c.l.b16 %v776
      %v809 = vunpack.c.l.b16 %v777
      %v810 = vunpack.c.l.b16 %v778
      %v811 = vunpack.c.l.b16 %v779
      %v812 = vunpack.c.l.b16 %v780
      %v813 = vunpack.c.l.b16 %v781
      %v814 = vunpack.c.l.b16 %v782
      %v815 = vunpack.c.l.b16 %v783
      %v816 = vunpack.c.l.b16 %v784
      %v817 = vunpack.c.l.b16 %v785
      %v818 = vunpack.c.l.b16 %v786
      %v819 = vunpack.c.l.b16 %v787
      %v820 = vunpack.c.l.b16 %v788
      %v821 = vunpack.c.l.b16 %v789
      %v822 = vunpack.c.l.b16 %v790
      %v823 = vunpack.c.l.b16 %v791
      %v824 = vpack.c.b16 %v809, %v808
      %v825 = vpack.c.b16 %v811, %v810
      %v826 = vpack.c.b16 %v813, %v812
      %v827 = vpack.c.b16 %v815, %v814
      %v828 = vpack.c.b16 %v817, %v816
      %v829 = vpack.c.b16 %v819, %v818
      %v830 = vpack.c.b16 %v821, %v820
      %v831 = vpack.c.b16 %v823, %v822
      %840 = vmatprep.subr.bf16.mxu0 0
      %841 = vmatpush1.bf16.msra.mxu0 %v824
      %842 = vmatprep.subr.bf16.mxu0 0
      %843 = vmatpush1.bf16.msra.mxu0 %v825
      %844 = vmatprep.subr.bf16.mxu0 0
      %845 = vmatpush1.bf16.msra.mxu0 %v826
      %846 = vmatprep.subr.bf16.mxu0 0
      %847 = vmatpush1.bf16.msra.mxu0 %v827
      %848 = vmatprep.subr.bf16.mxu0 0
      %849 = vmatpush1.bf16.msra.mxu0 %v828
      %850 = vmatprep.subr.bf16.mxu0 0
      %851 = vmatpush1.bf16.msra.mxu0 %v829
      %852 = vmatprep.subr.bf16.mxu0 0
      %853 = vmatpush1.bf16.msra.mxu0 %v830
      %854 = vmatprep.subr.bf16.mxu0 0
      %855 = vmatpush1.bf16.msra.mxu0 %v831
      %856 = vmatprep.subr.bf16.mxu0 0
      %857 = vmatpush1.bf16.msra.mxu0 0
      %858 = vmatprep.subr.bf16.mxu0 0
      %859 = vmatpush1.bf16.msra.mxu0 0
      %860 = vmatprep.subr.bf16.mxu0 0
      %861 = vmatpush1.bf16.msra.mxu0 0
      %862 = vmatprep.subr.bf16.mxu0 0
      %863 = vmatpush1.bf16.msra.mxu0 0
      %864 = vmatprep.subr.bf16.mxu0 0
      %865 = vmatpush1.bf16.msra.mxu0 0
      %866 = vmatprep.subr.bf16.mxu0 0
      %867 = vmatpush1.bf16.msra.mxu0 0
      %868 = vmatprep.subr.bf16.mxu0 0
      %869 = vmatpush1.bf16.msra.mxu0 0
      %870 = vmatprep.subr.bf16.mxu0 0
      %871 = vmatpush1.bf16.msra.mxu0 0
      %872 = vmatprep.mubr.bf16.mxu0 0
      %873 = vmatmul.mubr.bf16.gmra.mrb[0].mxu0 %v366
      %v874 = vpop.f32.mrb[0].mxu0
      %v875 = vadd.f32 0.0, %v874
      %v876 = vpop.f32.mrb[0].mxu0
      %v877 = vpop.f32.mrb[0].mxu0
      %v878 = vadd.f32 0.0, %v877
      %v879 = vpop.f32.mrb[0].mxu0
      %880 = vmatprep.mubr.bf16.mxu0 0
      %881 = vmatmul.mubr.bf16.gmra.mrb[0].mxu0 %v367
      %v882 = vpop.f32.mrb[0].mxu0
      %v883 = vadd.f32 0.0, %v882
      %v884 = vpop.f32.mrb[0].mxu0
      %v885 = vpop.f32.mrb[0].mxu0
      %v886 = vadd.f32 0.0, %v885
      %v887 = vpop.f32.mrb[0].mxu0
      %888 = vmatprep.mubr.bf16.mxu0 0
      %889 = vmatmul.mubr.bf16.gmra.mrb[0].mxu0 %v368
      %v890 = vpop.f32.mrb[0].mxu0
      %v891 = vadd.f32 0.0, %v890
      %v892 = vpop.f32.mrb[0].mxu0
      %v893 = vpop.f32.mrb[0].mxu0
      %v894 = vadd.f32 0.0, %v893
      %v895 = vpop.f32.mrb[0].mxu0
      %896 = vmatprep.mubr.bf16.mxu0 0
      %897 = vmatmul.mubr.bf16.gmra.mrb[0].mxu0 %v369
      %v898 = vpop.f32.mrb[0].mxu0
      %v899 = vadd.f32 0.0, %v898
      %v900 = vpop.f32.mrb[0].mxu0
      %v901 = vpop.f32.mrb[0].mxu0
      %v902 = vadd.f32 0.0, %v901
      %v903 = vpop.f32.mrb[0].mxu0
      %904 = vmatprep.mubr.bf16.mxu0 0
      %905 = vmatmul.mubr.bf16.gmra.mrb[0].mxu0 %v370
      %v906 = vpop.f32.mrb[0].mxu0
      %v907 = vadd.f32 0.0, %v906
      %v908 = vpop.f32.mrb[0].mxu0
      %v909 = vpop.f32.mrb[0].mxu0
      %v910 = vadd.f32 0.0, %v909
      %v911 = vpop.f32.mrb[0].mxu0
      %912 = vmatprep.mubr.bf16.mxu0 0
      %913 = vmatmul.mubr.bf16.gmra.mrb[0].mxu0 %v371
      %v914 = vpop.f32.mrb[0].mxu0
      %v915 = vadd.f32 0.0, %v914
      %v916 = vpop.f32.mrb[0].mxu0
      %v917 = vpop.f32.mrb[0].mxu0
      %v918 = vadd.f32 0.0, %v917
      %v919 = vpop.f32.mrb[0].mxu0
      %920 = vmatprep.mubr.bf16.mxu0 0
      %921 = vmatmul.mubr.bf16.gmra.mrb[0].mxu0 %v372
      %v922 = vpop.f32.mrb[0].mxu0
      %v923 = vadd.f32 0.0, %v922
      %v924 = vpop.f32.mrb[0].mxu0
      %v925 = vpop.f32.mrb[0].mxu0
      %v926 = vadd.f32 0.0, %v925
      %v927 = vpop.f32.mrb[0].mxu0
      %928 = vmatprep.mubr.bf16.mxu0 0
      %929 = vmatmul.mubr.bf16.gmra.mrb[0].mxu0 %v774
      %v930 = vpop.f32.mrb[0].mxu0
      %v931 = vadd.f32 0.0, %v930
      %v932 = vpop.f32.mrb[0].mxu0
      %v933 = vpop.f32.mrb[0].mxu0
      %v934 = vadd.f32 0.0, %v933
      %v935 = vpop.f32.mrb[0].mxu0
      %936 = vdwg.mxu0
      %v937 = vadd.f32 %v712, %v875
      %v938 = vadd.f32 %v715, %v878
      %v939 = vadd.f32 %v720, %v883
      %v940 = vadd.f32 %v723, %v886
      %v941 = vadd.f32 %v728, %v891
      %v942 = vadd.f32 %v731, %v894
      %v943 = vadd.f32 %v736, %v899
      %v944 = vadd.f32 %v739, %v902
      %v945 = vadd.f32 %v744, %v907
      %v946 = vadd.f32 %v747, %v910
      %v947 = vadd.f32 %v752, %v915
      %v948 = vadd.f32 %v755, %v918
      %v949 = vadd.f32 %v760, %v923
      %v950 = vadd.f32 %v763, %v926
      %v951 = vadd.f32 %v768, %v931
      %v952 = vadd.f32 %v771, %v934
      %v953 = vpack.c.bf16 %v364, %v364
      %s954 = scalar_lea.vmem %s2, 512
      %v955 = vld [vmem:[%s954] sm:$0xf]
      %v956 = vld [vmem:[%s954 + $0x4] sm:$0xf]
      %v957 = vld [vmem:[%s954 + $0x8] sm:$0xf]
      %v958 = vld [vmem:[%s954 + $0xc] sm:$0xf]
      %v959 = vld [vmem:[%s954 + $0x10] sm:$0xf]
      %v960 = vld [vmem:[%s954 + $0x14] sm:$0xf]
      %v961 = vld [vmem:[%s954 + $0x18] sm:$0xf]
      %v962 = vld [vmem:[%s954 + $0x1c] sm:$0xf]
      %v963 = vld [vmem:[%s954 + $0x20] sm:$0xf]
      %v964 = vld [vmem:[%s954 + $0x24] sm:$0xf]
      %v965 = vld [vmem:[%s954 + $0x28] sm:$0xf]
      %v966 = vld [vmem:[%s954 + $0x2c] sm:$0xf]
      %v967 = vld [vmem:[%s954 + $0x30] sm:$0xf]
      %v968 = vld [vmem:[%s954 + $0x34] sm:$0xf]
      %v969 = vld [vmem:[%s954 + $0x38] sm:$0xf]
      %v970 = vld [vmem:[%s954 + $0x3c] sm:$0xf]
      %v972 = vshll.u32 %v774, 16
      %v974 = vrot.slane %v972, 1
      %v975 = vsel %vm407, %v470, %v974
      %v976 = vshrl.u32 %v774, 16
      %v978 = vor.u32 %v976, %v974
      %v980 = vshll.u32 %v953, 16
      %v982 = vrot.slane %v980, 1
      %v983 = vsel %vm407, %v978, %v982
      %v1002 = vunpack.c.l.b16 %v955
      %v1003 = vunpack.c.l.b16 %v956
      %v1004 = vunpack.c.l.b16 %v957
      %v1005 = vunpack.c.l.b16 %v958
      %v1006 = vunpack.c.l.b16 %v959
      %v1007 = vunpack.c.l.b16 %v960
      %v1008 = vunpack.c.l.b16 %v961
      %v1009 = vunpack.c.l.b16 %v962
      %v1010 = vunpack.c.l.b16 %v963
      %v1011 = vunpack.c.l.b16 %v964
      %v1012 = vunpack.c.l.b16 %v965
      %v1013 = vunpack.c.l.b16 %v966
      %v1014 = vunpack.c.l.b16 %v967
      %v1015 = vunpack.c.l.b16 %v968
      %v1016 = vunpack.c.l.b16 %v969
      %v1017 = vunpack.c.l.b16 %v970
      %v1018 = vpack.c.b16 %v1003, %v1002
      %v1019 = vpack.c.b16 %v1005, %v1004
      %v1020 = vpack.c.b16 %v1007, %v1006
      %v1021 = vpack.c.b16 %v1009, %v1008
      %v1022 = vpack.c.b16 %v1011, %v1010
      %v1023 = vpack.c.b16 %v1013, %v1012
      %v1024 = vpack.c.b16 %v1015, %v1014
      %v1025 = vpack.c.b16 %v1017, %v1016
      %1034 = vmatprep.subr.bf16.mxu0 0
      %1035 = vmatpush1.bf16.msra.mxu0 %v1018
      %1036 = vmatprep.subr.bf16.mxu0 0
      %1037 = vmatpush1.bf16.msra.mxu0 %v1019
      %1038 = vmatprep.subr.bf16.mxu0 0
      %1039 = vmatpush1.bf16.msra.mxu0 %v1020
      %1040 = vmatprep.subr.bf16.mxu0 0
      %1041 = vmatpush1.bf16.msra.mxu0 %v1021
      %1042 = vmatprep.subr.bf16.mxu0 0
      %1043 = vmatpush1.bf16.msra.mxu0 %v1022
      %1044 = vmatprep.subr.bf16.mxu0 0
      %1045 = vmatpush1.bf16.msra.mxu0 %v1023
      %1046 = vmatprep.subr.bf16.mxu0 0
      %1047 = vmatpush1.bf16.msra.mxu0 %v1024
      %1048 = vmatprep.subr.bf16.mxu0 0
      %1049 = vmatpush1.bf16.msra.mxu0 %v1025
      %1050 = vmatprep.subr.bf16.mxu0 0
      %1051 = vmatpush1.bf16.msra.mxu0 0
      %1052 = vmatprep.subr.bf16.mxu0 0
      %1053 = vmatpush1.bf16.msra.mxu0 0
      %1054 = vmatprep.subr.bf16.mxu0 0
      %1055 = vmatpush1.bf16.msra.mxu0 0
      %1056 = vmatprep.subr.bf16.mxu0 0
      %1057 = vmatpush1.bf16.msra.mxu0 0
      %1058 = vmatprep.subr.bf16.mxu0 0
      %1059 = vmatpush1.bf16.msra.mxu0 0
      %1060 = vmatprep.subr.bf16.mxu0 0
      %1061 = vmatpush1.bf16.msra.mxu0 0
      %1062 = vmatprep.subr.bf16.mxu0 0
      %1063 = vmatpush1.bf16.msra.mxu0 0
      %1064 = vmatprep.subr.bf16.mxu0 0
      %1065 = vmatpush1.bf16.msra.mxu0 0
      %1066 = vmatprep.mubr.bf16.mxu0 0
      %1067 = vmatmul.mubr.bf16.gmra.mrb[0].mxu0 %v427
      %v1068 = vpop.f32.mrb[0].mxu0
      %v1069 = vadd.f32 0.0, %v1068
      %v1070 = vpop.f32.mrb[0].mxu0
      %v1071 = vpop.f32.mrb[0].mxu0
      %v1072 = vadd.f32 0.0, %v1071
      %v1073 = vpop.f32.mrb[0].mxu0
      %1074 = vmatprep.mubr.bf16.mxu0 0
      %1075 = vmatmul.mubr.bf16.gmra.mrb[0].mxu0 %v435
      %v1076 = vpop.f32.mrb[0].mxu0
      %v1077 = vadd.f32 0.0, %v1076
      %v1078 = vpop.f32.mrb[0].mxu0
      %v1079 = vpop.f32.mrb[0].mxu0
      %v1080 = vadd.f32 0.0, %v1079
      %v1081 = vpop.f32.mrb[0].mxu0
      %1082 = vmatprep.mubr.bf16.mxu0 0
      %1083 = vmatmul.mubr.bf16.gmra.mrb[0].mxu0 %v443
      %v1084 = vpop.f32.mrb[0].mxu0
      %v1085 = vadd.f32 0.0, %v1084
      %v1086 = vpop.f32.mrb[0].mxu0
      %v1087 = vpop.f32.mrb[0].mxu0
      %v1088 = vadd.f32 0.0, %v1087
      %v1089 = vpop.f32.mrb[0].mxu0
      %1090 = vmatprep.mubr.bf16.mxu0 0
      %1091 = vmatmul.mubr.bf16.gmra.mrb[0].mxu0 %v451
      %v1092 = vpop.f32.mrb[0].mxu0
      %v1093 = vadd.f32 0.0, %v1092
      %v1094 = vpop.f32.mrb[0].mxu0
      %v1095 = vpop.f32.mrb[0].mxu0
      %v1096 = vadd.f32 0.0, %v1095
      %v1097 = vpop.f32.mrb[0].mxu0
      %1098 = vmatprep.mubr.bf16.mxu0 0
      %1099 = vmatmul.mubr.bf16.gmra.mrb[0].mxu0 %v459
      %v1100 = vpop.f32.mrb[0].mxu0
      %v1101 = vadd.f32 0.0, %v1100
      %v1102 = vpop.f32.mrb[0].mxu0
      %v1103 = vpop.f32.mrb[0].mxu0
      %v1104 = vadd.f32 0.0, %v1103
      %v1105 = vpop.f32.mrb[0].mxu0
      %1106 = vmatprep.mubr.bf16.mxu0 0
      %1107 = vmatmul.mubr.bf16.gmra.mrb[0].mxu0 %v467
      %v1108 = vpop.f32.mrb[0].mxu0
      %v1109 = vadd.f32 0.0, %v1108
      %v1110 = vpop.f32.mrb[0].mxu0
      %v1111 = vpop.f32.mrb[0].mxu0
      %v1112 = vadd.f32 0.0, %v1111
      %v1113 = vpop.f32.mrb[0].mxu0
      %1114 = vmatprep.mubr.bf16.mxu0 0
      %1115 = vmatmul.mubr.bf16.gmra.mrb[0].mxu0 %v975
      %v1116 = vpop.f32.mrb[0].mxu0
      %v1117 = vadd.f32 0.0, %v1116
      %v1118 = vpop.f32.mrb[0].mxu0
      %v1119 = vpop.f32.mrb[0].mxu0
      %v1120 = vadd.f32 0.0, %v1119
      %v1121 = vpop.f32.mrb[0].mxu0
      %1122 = vmatprep.mubr.bf16.mxu0 0
      %1123 = vmatmul.mubr.bf16.gmra.mrb[0].mxu0 %v983
      %v1124 = vpop.f32.mrb[0].mxu0
      %v1125 = vadd.f32 0.0, %v1124
      %v1126 = vpop.f32.mrb[0].mxu0
      %v1127 = vpop.f32.mrb[0].mxu0
      %v1128 = vadd.f32 0.0, %v1127
      %v1129 = vpop.f32.mrb[0].mxu0
      %1130 = vdwg.mxu0
      %v1131 = vadd.f32 %v937, %v1069
      %v1132 = vadd.f32 %v938, %v1072
      %v1133 = vadd.f32 %v939, %v1077
      %v1134 = vadd.f32 %v940, %v1080
      %v1135 = vadd.f32 %v941, %v1085
      %v1136 = vadd.f32 %v942, %v1088
      %v1137 = vadd.f32 %v943, %v1093
      %v1138 = vadd.f32 %v944, %v1096
      %v1139 = vadd.f32 %v945, %v1101
      %v1140 = vadd.f32 %v946, %v1104
      %v1141 = vadd.f32 %v947, %v1109
      %v1142 = vadd.f32 %v948, %v1112
      %v1143 = vadd.f32 %v949, %v1117
      %v1144 = vadd.f32 %v950, %v1120
      %v1145 = vadd.f32 %v951, %v1125
      %v1146 = vadd.f32 %v952, %v1128
      %s1147 = scalar_lea.vmem %s315, 80
      %v1148 = vld [vmem:[%s1147] sm:$0xf]
      %v1149 = vld [vmem:[%s1147 + $0x4] sm:$0xf]
      %v1150 = vld [vmem:[%s1147 + $0x8] sm:$0xf]
      %v1151 = vld [vmem:[%s1147 + $0xc] sm:$0xf]
      %v1152 = vld [vmem:[%s1147 + $0x10] sm:$0xf]
      %v1153 = vld [vmem:[%s1147 + $0x14] sm:$0xf]
      %v1154 = vld [vmem:[%s1147 + $0x18] sm:$0xf]
      %v1155 = vld [vmem:[%s1147 + $0x1c] sm:$0xf]
      %v1156 = vld [vmem:[%s1147 + $0x20] sm:$0xf]
      %v1157 = vld [vmem:[%s1147 + $0x24] sm:$0xf]
      %v1158 = vld [vmem:[%s1147 + $0x28] sm:$0xf]
      %v1159 = vld [vmem:[%s1147 + $0x2c] sm:$0xf]
      %v1160 = vld [vmem:[%s1147 + $0x30] sm:$0xf]
      %v1161 = vld [vmem:[%s1147 + $0x34] sm:$0xf]
      %v1162 = vld [vmem:[%s1147 + $0x38] sm:$0xf]
      %v1163 = vld [vmem:[%s1147 + $0x3c] sm:$0xf]
      %v1164 = vld [vmem:[%s1147 + $0x40] sm:$0xf]
      %v1165 = vld [vmem:[%s1147 + $0x44] sm:$0xf]
      %v1166 = vunpack.c.l.bf16 %v1148
      %v1167 = vunpack.c.l.bf16 %v1149
      %v1168 = vunpack.c.l.bf16 %v1150
      %v1169 = vunpack.c.l.bf16 %v1151
      %v1170 = vunpack.c.l.bf16 %v1152
      %v1171 = vunpack.c.l.bf16 %v1153
      %v1172 = vunpack.c.l.bf16 %v1154
      %v1173 = vunpack.c.l.bf16 %v1155
      %v1174 = vunpack.c.l.bf16 %v1156
      %v1175 = vunpack.c.l.bf16 %v1157
      %v1176 = vunpack.c.l.bf16 %v1158
      %v1177 = vunpack.c.l.bf16 %v1159
      %v1178 = vunpack.c.l.bf16 %v1160
      %v1179 = vunpack.c.l.bf16 %v1161
      %v1180 = vunpack.c.l.bf16 %v1162
      %v1181 = vunpack.c.l.bf16 %v1163
      %v1182 = vunpack.c.l.bf16 %v1164
      %v1183 = vunpack.c.l.bf16 %v1165
      %v1184 = vpack.c.bf16 %v1167, %v1166
      %v1185 = vpack.c.bf16 %v1169, %v1168
      %v1186 = vpack.c.bf16 %v1171, %v1170
      %v1187 = vpack.c.bf16 %v1173, %v1172
      %v1188 = vpack.c.bf16 %v1175, %v1174
      %v1189 = vpack.c.bf16 %v1177, %v1176
      %v1190 = vpack.c.bf16 %v1179, %v1178
      %v1191 = vpack.c.bf16 %v1181, %v1180
      %s1192 = scalar_lea.vmem %s2, 64
      %v1193 = vld [vmem:[%s1192] sm:$0xf]
      %v1194 = vld [vmem:[%s1192 + $0x4] sm:$0xf]
      %v1195 = vld [vmem:[%s1192 + $0x8] sm:$0xf]
      %v1196 = vld [vmem:[%s1192 + $0xc] sm:$0xf]
      %v1197 = vld [vmem:[%s1192 + $0x10] sm:$0xf]
      %v1198 = vld [vmem:[%s1192 + $0x14] sm:$0xf]
      %v1199 = vld [vmem:[%s1192 + $0x18] sm:$0xf]
      %v1200 = vld [vmem:[%s1192 + $0x1c] sm:$0xf]
      %v1201 = vld [vmem:[%s1192 + $0x20] sm:$0xf]
      %v1202 = vld [vmem:[%s1192 + $0x24] sm:$0xf]
      %v1203 = vld [vmem:[%s1192 + $0x28] sm:$0xf]
      %v1204 = vld [vmem:[%s1192 + $0x2c] sm:$0xf]
      %v1205 = vld [vmem:[%s1192 + $0x30] sm:$0xf]
      %v1206 = vld [vmem:[%s1192 + $0x34] sm:$0xf]
      %v1207 = vld [vmem:[%s1192 + $0x38] sm:$0xf]
      %v1208 = vld [vmem:[%s1192 + $0x3c] sm:$0xf]
      %v1225 = vunpack.c.l.b16 %v1193
      %v1226 = vunpack.c.l.b16 %v1194
      %v1227 = vunpack.c.l.b16 %v1195
      %v1228 = vunpack.c.l.b16 %v1196
      %v1229 = vunpack.c.l.b16 %v1197
      %v1230 = vunpack.c.l.b16 %v1198
      %v1231 = vunpack.c.l.b16 %v1199
      %v1232 = vunpack.c.l.b16 %v1200
      %v1233 = vunpack.c.l.b16 %v1201
      %v1234 = vunpack.c.l.b16 %v1202
      %v1235 = vunpack.c.l.b16 %v1203
      %v1236 = vunpack.c.l.b16 %v1204
      %v1237 = vunpack.c.l.b16 %v1205
      %v1238 = vunpack.c.l.b16 %v1206
      %v1239 = vunpack.c.l.b16 %v1207
      %v1240 = vunpack.c.l.b16 %v1208
      %v1241 = vpack.c.b16 %v1226, %v1225
      %v1242 = vpack.c.b16 %v1228, %v1227
      %v1243 = vpack.c.b16 %v1230, %v1229
      %v1244 = vpack.c.b16 %v1232, %v1231
      %v1245 = vpack.c.b16 %v1234, %v1233
      %v1246 = vpack.c.b16 %v1236, %v1235
      %v1247 = vpack.c.b16 %v1238, %v1237
      %v1248 = vpack.c.b16 %v1240, %v1239
      %1257 = vmatprep.subr.bf16.mxu0 0
      %1258 = vmatpush1.bf16.msra.mxu0 %v1241
      %1259 = vmatprep.subr.bf16.mxu0 0
      %1260 = vmatpush1.bf16.msra.mxu0 %v1242
      %1261 = vmatprep.subr.bf16.mxu0 0
      %1262 = vmatpush1.bf16.msra.mxu0 %v1243
      %1263 = vmatprep.subr.bf16.mxu0 0
      %1264 = vmatpush1.bf16.msra.mxu0 %v1244
      %1265 = vmatprep.subr.bf16.mxu0 0
      %1266 = vmatpush1.bf16.msra.mxu0 %v1245
      %1267 = vmatprep.subr.bf16.mxu0 0
      %1268 = vmatpush1.bf16.msra.mxu0 %v1246
      %1269 = vmatprep.subr.bf16.mxu0 0
      %1270 = vmatpush1.bf16.msra.mxu0 %v1247
      %1271 = vmatprep.subr.bf16.mxu0 0
      %1272 = vmatpush1.bf16.msra.mxu0 %v1248
      %1273 = vmatprep.subr.bf16.mxu0 0
      %1274 = vmatpush1.bf16.msra.mxu0 0
      %1275 = vmatprep.subr.bf16.mxu0 0
      %1276 = vmatpush1.bf16.msra.mxu0 0
      %1277 = vmatprep.subr.bf16.mxu0 0
      %1278 = vmatpush1.bf16.msra.mxu0 0
      %1279 = vmatprep.subr.bf16.mxu0 0
      %1280 = vmatpush1.bf16.msra.mxu0 0
      %1281 = vmatprep.subr.bf16.mxu0 0
      %1282 = vmatpush1.bf16.msra.mxu0 0
      %1283 = vmatprep.subr.bf16.mxu0 0
      %1284 = vmatpush1.bf16.msra.mxu0 0
      %1285 = vmatprep.subr.bf16.mxu0 0
      %1286 = vmatpush1.bf16.msra.mxu0 0
      %1287 = vmatprep.subr.bf16.mxu0 0
      %1288 = vmatpush1.bf16.msra.mxu0 0
      %1289 = vmatprep.mubr.bf16.mxu0 0
      %1290 = vmatmul.mubr.bf16.gmra.mrb[0].mxu0 %v1184
      %v1291 = vpop.f32.mrb[0].mxu0
      %v1292 = vadd.f32 0.0, %v1291
      %v1293 = vpop.f32.mrb[0].mxu0
      %v1294 = vpop.f32.mrb[0].mxu0
      %v1295 = vadd.f32 0.0, %v1294
      %v1296 = vpop.f32.mrb[0].mxu0
      %1297 = vmatprep.mubr.bf16.mxu0 0
      %1298 = vmatmul.mubr.bf16.gmra.mrb[0].mxu0 %v1185
      %v1299 = vpop.f32.mrb[0].mxu0
      %v1300 = vadd.f32 0.0, %v1299
      %v1301 = vpop.f32.mrb[0].mxu0
      %v1302 = vpop.f32.mrb[0].mxu0
      %v1303 = vadd.f32 0.0, %v1302
      %v1304 = vpop.f32.mrb[0].mxu0
      %1305 = vmatprep.mubr.bf16.mxu0 0
      %1306 = vmatmul.mubr.bf16.gmra.mrb[0].mxu0 %v1186
      %v1307 = vpop.f32.mrb[0].mxu0
      %v1308 = vadd.f32 0.0, %v1307
      %v1309 = vpop.f32.mrb[0].mxu0
      %v1310 = vpop.f32.mrb[0].mxu0
      %v1311 = vadd.f32 0.0, %v1310
      %v1312 = vpop.f32.mrb[0].mxu0
      %1313 = vmatprep.mubr.bf16.mxu0 0
      %1314 = vmatmul.mubr.bf16.gmra.mrb[0].mxu0 %v1187
      %v1315 = vpop.f32.mrb[0].mxu0
      %v1316 = vadd.f32 0.0, %v1315
      %v1317 = vpop.f32.mrb[0].mxu0
      %v1318 = vpop.f32.mrb[0].mxu0
      %v1319 = vadd.f32 0.0, %v1318
      %v1320 = vpop.f32.mrb[0].mxu0
      %1321 = vmatprep.mubr.bf16.mxu0 0
      %1322 = vmatmul.mubr.bf16.gmra.mrb[0].mxu0 %v1188
      %v1323 = vpop.f32.mrb[0].mxu0
      %v1324 = vadd.f32 0.0, %v1323
      %v1325 = vpop.f32.mrb[0].mxu0
      %v1326 = vpop.f32.mrb[0].mxu0
      %v1327 = vadd.f32 0.0, %v1326
      %v1328 = vpop.f32.mrb[0].mxu0
      %1329 = vmatprep.mubr.bf16.mxu0 0
      %1330 = vmatmul.mubr.bf16.gmra.mrb[0].mxu0 %v1189
      %v1331 = vpop.f32.mrb[0].mxu0
      %v1332 = vadd.f32 0.0, %v1331
      %v1333 = vpop.f32.mrb[0].mxu0
      %v1334 = vpop.f32.mrb[0].mxu0
      %v1335 = vadd.f32 0.0, %v1334
      %v1336 = vpop.f32.mrb[0].mxu0
      %1337 = vmatprep.mubr.bf16.mxu0 0
      %1338 = vmatmul.mubr.bf16.gmra.mrb[0].mxu0 %v1190
      %v1339 = vpop.f32.mrb[0].mxu0
      %v1340 = vadd.f32 0.0, %v1339
      %v1341 = vpop.f32.mrb[0].mxu0
      %v1342 = vpop.f32.mrb[0].mxu0
      %v1343 = vadd.f32 0.0, %v1342
      %v1344 = vpop.f32.mrb[0].mxu0
      %1345 = vmatprep.mubr.bf16.mxu0 0
      %1346 = vmatmul.mubr.bf16.gmra.mrb[0].mxu0 %v1191
      %v1347 = vpop.f32.mrb[0].mxu0
      %v1348 = vadd.f32 0.0, %v1347
      %v1349 = vpop.f32.mrb[0].mxu0
      %v1350 = vpop.f32.mrb[0].mxu0
      %v1351 = vadd.f32 0.0, %v1350
      %v1352 = vpop.f32.mrb[0].mxu0
      %1353 = vdwg.mxu0
      %v1354 = vadd.f32 %v1131, %v1292
      %v1355 = vadd.f32 %v1132, %v1295
      %v1356 = vadd.f32 %v1133, %v1300
      %v1357 = vadd.f32 %v1134, %v1303
      %v1358 = vadd.f32 %v1135, %v1308
      %v1359 = vadd.f32 %v1136, %v1311
      %v1360 = vadd.f32 %v1137, %v1316
      %v1361 = vadd.f32 %v1138, %v1319
      %v1362 = vadd.f32 %v1139, %v1324
      %v1363 = vadd.f32 %v1140, %v1327
      %v1364 = vadd.f32 %v1141, %v1332
      %v1365 = vadd.f32 %v1142, %v1335
      %v1366 = vadd.f32 %v1143, %v1340
      %v1367 = vadd.f32 %v1144, %v1343
      %v1368 = vadd.f32 %v1145, %v1348
      %v1369 = vadd.f32 %v1146, %v1351
      %v1370 = vpack.c.bf16 %v1183, %v1182
      %s1371 = scalar_lea.vmem %s2, 448
      %v1372 = vld [vmem:[%s1371] sm:$0xf]
      %v1373 = vld [vmem:[%s1371 + $0x4] sm:$0xf]
      %v1374 = vld [vmem:[%s1371 + $0x8] sm:$0xf]
      %v1375 = vld [vmem:[%s1371 + $0xc] sm:$0xf]
      %v1376 = vld [vmem:[%s1371 + $0x10] sm:$0xf]
      %v1377 = vld [vmem:[%s1371 + $0x14] sm:$0xf]
      %v1378 = vld [vmem:[%s1371 + $0x18] sm:$0xf]
      %v1379 = vld [vmem:[%s1371 + $0x1c] sm:$0xf]
      %v1380 = vld [vmem:[%s1371 + $0x20] sm:$0xf]
      %v1381 = vld [vmem:[%s1371 + $0x24] sm:$0xf]
      %v1382 = vld [vmem:[%s1371 + $0x28] sm:$0xf]
      %v1383 = vld [vmem:[%s1371 + $0x2c] sm:$0xf]
      %v1384 = vld [vmem:[%s1371 + $0x30] sm:$0xf]
      %v1385 = vld [vmem:[%s1371 + $0x34] sm:$0xf]
      %v1386 = vld [vmem:[%s1371 + $0x38] sm:$0xf]
      %v1387 = vld [vmem:[%s1371 + $0x3c] sm:$0xf]
      %v1404 = vunpack.c.l.b16 %v1372
      %v1405 = vunpack.c.l.b16 %v1373
      %v1406 = vunpack.c.l.b16 %v1374
      %v1407 = vunpack.c.l.b16 %v1375
      %v1408 = vunpack.c.l.b16 %v1376
      %v1409 = vunpack.c.l.b16 %v1377
      %v1410 = vunpack.c.l.b16 %v1378
      %v1411 = vunpack.c.l.b16 %v1379
      %v1412 = vunpack.c.l.b16 %v1380
      %v1413 = vunpack.c.l.b16 %v1381
      %v1414 = vunpack.c.l.b16 %v1382
      %v1415 = vunpack.c.l.b16 %v1383
      %v1416 = vunpack.c.l.b16 %v1384
      %v1417 = vunpack.c.l.b16 %v1385
      %v1418 = vunpack.c.l.b16 %v1386
      %v1419 = vunpack.c.l.b16 %v1387
      %v1420 = vpack.c.b16 %v1405, %v1404
      %v1421 = vpack.c.b16 %v1407, %v1406
      %v1422 = vpack.c.b16 %v1409, %v1408
      %v1423 = vpack.c.b16 %v1411, %v1410
      %v1424 = vpack.c.b16 %v1413, %v1412
      %v1425 = vpack.c.b16 %v1415, %v1414
      %v1426 = vpack.c.b16 %v1417, %v1416
      %v1427 = vpack.c.b16 %v1419, %v1418
      %1436 = vmatprep.subr.bf16.mxu0 0
      %1437 = vmatpush1.bf16.msra.mxu0 %v1420
      %1438 = vmatprep.subr.bf16.mxu0 0
      %1439 = vmatpush1.bf16.msra.mxu0 %v1421
      %1440 = vmatprep.subr.bf16.mxu0 0
      %1441 = vmatpush1.bf16.msra.mxu0 %v1422
      %1442 = vmatprep.subr.bf16.mxu0 0
      %1443 = vmatpush1.bf16.msra.mxu0 %v1423
      %1444 = vmatprep.subr.bf16.mxu0 0
      %1445 = vmatpush1.bf16.msra.mxu0 %v1424
      %1446 = vmatprep.subr.bf16.mxu0 0
      %1447 = vmatpush1.bf16.msra.mxu0 %v1425
      %1448 = vmatprep.subr.bf16.mxu0 0
      %1449 = vmatpush1.bf16.msra.mxu0 %v1426
      %1450 = vmatprep.subr.bf16.mxu0 0
      %1451 = vmatpush1.bf16.msra.mxu0 %v1427
      %1452 = vmatprep.subr.bf16.mxu0 0
      %1453 = vmatpush1.bf16.msra.mxu0 0
      %1454 = vmatprep.subr.bf16.mxu0 0
      %1455 = vmatpush1.bf16.msra.mxu0 0
      %1456 = vmatprep.subr.bf16.mxu0 0
      %1457 = vmatpush1.bf16.msra.mxu0 0
      %1458 = vmatprep.subr.bf16.mxu0 0
      %1459 = vmatpush1.bf16.msra.mxu0 0
      %1460 = vmatprep.subr.bf16.mxu0 0
      %1461 = vmatpush1.bf16.msra.mxu0 0
      %1462 = vmatprep.subr.bf16.mxu0 0
      %1463 = vmatpush1.bf16.msra.mxu0 0
      %1464 = vmatprep.subr.bf16.mxu0 0
      %1465 = vmatpush1.bf16.msra.mxu0 0
      %1466 = vmatprep.subr.bf16.mxu0 0
      %1467 = vmatpush1.bf16.msra.mxu0 0
      %1468 = vmatprep.mubr.bf16.mxu0 0
      %1469 = vmatmul.mubr.bf16.gmra.mrb[0].mxu0 %v1185
      %v1470 = vpop.f32.mrb[0].mxu0
      %v1471 = vadd.f32 0.0, %v1470
      %v1472 = vpop.f32.mrb[0].mxu0
      %v1473 = vpop.f32.mrb[0].mxu0
      %v1474 = vadd.f32 0.0, %v1473
      %v1475 = vpop.f32.mrb[0].mxu0
      %1476 = vmatprep.mubr.bf16.mxu0 0
      %1477 = vmatmul.mubr.bf16.gmra.mrb[0].mxu0 %v1186
      %v1478 = vpop.f32.mrb[0].mxu0
      %v1479 = vadd.f32 0.0, %v1478
      %v1480 = vpop.f32.mrb[0].mxu0
      %v1481 = vpop.f32.mrb[0].mxu0
      %v1482 = vadd.f32 0.0, %v1481
      %v1483 = vpop.f32.mrb[0].mxu0
      %1484 = vmatprep.mubr.bf16.mxu0 0
      %1485 = vmatmul.mubr.bf16.gmra.mrb[0].mxu0 %v1187
      %v1486 = vpop.f32.mrb[0].mxu0
      %v1487 = vadd.f32 0.0, %v1486
      %v1488 = vpop.f32.mrb[0].mxu0
      %v1489 = vpop.f32.mrb[0].mxu0
      %v1490 = vadd.f32 0.0, %v1489
      %v1491 = vpop.f32.mrb[0].mxu0
      %1492 = vmatprep.mubr.bf16.mxu0 0
      %1493 = vmatmul.mubr.bf16.gmra.mrb[0].mxu0 %v1188
      %v1494 = vpop.f32.mrb[0].mxu0
      %v1495 = vadd.f32 0.0, %v1494
      %v1496 = vpop.f32.mrb[0].mxu0
      %v1497 = vpop.f32.mrb[0].mxu0
      %v1498 = vadd.f32 0.0, %v1497
      %v1499 = vpop.f32.mrb[0].mxu0
      %1500 = vmatprep.mubr.bf16.mxu0 0
      %1501 = vmatmul.mubr.bf16.gmra.mrb[0].mxu0 %v1189
      %v1502 = vpop.f32.mrb[0].mxu0
      %v1503 = vadd.f32 0.0, %v1502
      %v1504 = vpop.f32.mrb[0].mxu0
      %v1505 = vpop.f32.mrb[0].mxu0
      %v1506 = vadd.f32 0.0, %v1505
      %v1507 = vpop.f32.mrb[0].mxu0
      %1508 = vmatprep.mubr.bf16.mxu0 0
      %1509 = vmatmul.mubr.bf16.gmra.mrb[0].mxu0 %v1190
      %v1510 = vpop.f32.mrb[0].mxu0
      %v1511 = vadd.f32 0.0, %v1510
      %v1512 = vpop.f32.mrb[0].mxu0
      %v1513 = vpop.f32.mrb[0].mxu0
      %v1514 = vadd.f32 0.0, %v1513
      %v1515 = vpop.f32.mrb[0].mxu0
      %1516 = vmatprep.mubr.bf16.mxu0 0
      %1517 = vmatmul.mubr.bf16.gmra.mrb[0].mxu0 %v1191
      %v1518 = vpop.f32.mrb[0].mxu0
      %v1519 = vadd.f32 0.0, %v1518
      %v1520 = vpop.f32.mrb[0].mxu0
      %v1521 = vpop.f32.mrb[0].mxu0
      %v1522 = vadd.f32 0.0, %v1521
      %v1523 = vpop.f32.mrb[0].mxu0
      %1524 = vmatprep.mubr.bf16.mxu0 0
      %1525 = vmatmul.mubr.bf16.gmra.mrb[0].mxu0 %v1370
      %v1526 = vpop.f32.mrb[0].mxu0
      %v1527 = vadd.f32 0.0, %v1526
      %v1528 = vpop.f32.mrb[0].mxu0
      %v1529 = vpop.f32.mrb[0].mxu0
      %v1530 = vadd.f32 0.0, %v1529
      %v1531 = vpop.f32.mrb[0].mxu0
      %1532 = vdwg.mxu0
      %v1533 = vadd.f32 %v1354, %v1471
      %v1534 = vadd.f32 %v1355, %v1474
      %v1535 = vadd.f32 %v1356, %v1479
      %v1536 = vadd.f32 %v1357, %v1482
      %v1537 = vadd.f32 %v1358, %v1487
      %v1538 = vadd.f32 %v1359, %v1490
      %v1539 = vadd.f32 %v1360, %v1495
      %v1540 = vadd.f32 %v1361, %v1498
      %v1541 = vadd.f32 %v1362, %v1503
      %v1542 = vadd.f32 %v1363, %v1506
      %v1543 = vadd.f32 %v1364, %v1511
      %v1544 = vadd.f32 %v1365, %v1514
      %v1545 = vadd.f32 %v1366, %v1519
      %v1546 = vadd.f32 %v1367, %v1522
      %v1547 = vadd.f32 %v1368, %v1527
      %v1548 = vadd.f32 %v1369, %v1530
      %s1549 = scalar_lea.vmem %s315, 160
      %v1550 = vld [vmem:[%s1549] sm:$0xf]
      %v1551 = vld [vmem:[%s1549 + $0x4] sm:$0xf]
      %v1552 = vld [vmem:[%s1549 + $0x8] sm:$0xf]
      %v1553 = vld [vmem:[%s1549 + $0xc] sm:$0xf]
      %v1554 = vld [vmem:[%s1549 + $0x10] sm:$0xf]
      %v1555 = vld [vmem:[%s1549 + $0x14] sm:$0xf]
      %v1556 = vld [vmem:[%s1549 + $0x18] sm:$0xf]
      %v1557 = vld [vmem:[%s1549 + $0x1c] sm:$0xf]
      %v1558 = vld [vmem:[%s1549 + $0x20] sm:$0xf]
      %v1559 = vld [vmem:[%s1549 + $0x24] sm:$0xf]
      %v1560 = vld [vmem:[%s1549 + $0x28] sm:$0xf]
      %v1561 = vld [vmem:[%s1549 + $0x2c] sm:$0xf]
      %v1562 = vld [vmem:[%s1549 + $0x30] sm:$0xf]
      %v1563 = vld [vmem:[%s1549 + $0x34] sm:$0xf]
      %v1564 = vld [vmem:[%s1549 + $0x38] sm:$0xf]
      %v1565 = vld [vmem:[%s1549 + $0x3c] sm:$0xf]
      %v1566 = vld [vmem:[%s1549 + $0x40] sm:$0xf]
      %v1567 = vunpack.c.l.bf16 %v1550
      %v1568 = vunpack.c.l.bf16 %v1551
      %v1569 = vunpack.c.l.bf16 %v1552
      %v1570 = vunpack.c.l.bf16 %v1553
      %v1571 = vunpack.c.l.bf16 %v1554
      %v1572 = vunpack.c.l.bf16 %v1555
      %v1573 = vunpack.c.l.bf16 %v1556
      %v1574 = vunpack.c.l.bf16 %v1557
      %v1575 = vunpack.c.l.bf16 %v1558
      %v1576 = vunpack.c.l.bf16 %v1559
      %v1577 = vunpack.c.l.bf16 %v1560
      %v1578 = vunpack.c.l.bf16 %v1561
      %v1579 = vunpack.c.l.bf16 %v1562
      %v1580 = vunpack.c.l.bf16 %v1563
      %v1581 = vunpack.c.l.bf16 %v1564
      %v1582 = vunpack.c.l.bf16 %v1565
      %v1583 = vunpack.c.l.bf16 %v1566
      %v1584 = vpack.c.bf16 %v1568, %v1567
      %v1585 = vpack.c.bf16 %v1570, %v1569
      %v1586 = vpack.c.bf16 %v1572, %v1571
      %v1587 = vpack.c.bf16 %v1574, %v1573
      %v1588 = vpack.c.bf16 %v1576, %v1575
      %v1589 = vpack.c.bf16 %v1578, %v1577
      %v1590 = vpack.c.bf16 %v1580, %v1579
      %v1591 = vpack.c.bf16 %v1582, %v1581
      %s1592 = scalar_lea.vmem %s2, 192
      %v1593 = vld [vmem:[%s1592] sm:$0xf]
      %v1594 = vld [vmem:[%s1592 + $0x4] sm:$0xf]
      %v1595 = vld [vmem:[%s1592 + $0x8] sm:$0xf]
      %v1596 = vld [vmem:[%s1592 + $0xc] sm:$0xf]
      %v1597 = vld [vmem:[%s1592 + $0x10] sm:$0xf]
      %v1598 = vld [vmem:[%s1592 + $0x14] sm:$0xf]
      %v1599 = vld [vmem:[%s1592 + $0x18] sm:$0xf]
      %v1600 = vld [vmem:[%s1592 + $0x1c] sm:$0xf]
      %v1601 = vld [vmem:[%s1592 + $0x20] sm:$0xf]
      %v1602 = vld [vmem:[%s1592 + $0x24] sm:$0xf]
      %v1603 = vld [vmem:[%s1592 + $0x28] sm:$0xf]
      %v1604 = vld [vmem:[%s1592 + $0x2c] sm:$0xf]
      %v1605 = vld [vmem:[%s1592 + $0x30] sm:$0xf]
      %v1606 = vld [vmem:[%s1592 + $0x34] sm:$0xf]
      %v1607 = vld [vmem:[%s1592 + $0x38] sm:$0xf]
      %v1608 = vld [vmem:[%s1592 + $0x3c] sm:$0xf]
      %v1625 = vunpack.c.l.b16 %v1593
      %v1626 = vunpack.c.l.b16 %v1594
      %v1627 = vunpack.c.l.b16 %v1595
      %v1628 = vunpack.c.l.b16 %v1596
      %v1629 = vunpack.c.l.b16 %v1597
      %v1630 = vunpack.c.l.b16 %v1598
      %v1631 = vunpack.c.l.b16 %v1599
      %v1632 = vunpack.c.l.b16 %v1600
      %v1633 = vunpack.c.l.b16 %v1601
      %v1634 = vunpack.c.l.b16 %v1602
      %v1635 = vunpack.c.l.b16 %v1603
      %v1636 = vunpack.c.l.b16 %v1604
      %v1637 = vunpack.c.l.b16 %v1605
      %v1638 = vunpack.c.l.b16 %v1606
      %v1639 = vunpack.c.l.b16 %v1607
      %v1640 = vunpack.c.l.b16 %v1608
      %v1641 = vpack.c.b16 %v1626, %v1625
      %v1642 = vpack.c.b16 %v1628, %v1627
      %v1643 = vpack.c.b16 %v1630, %v1629
      %v1644 = vpack.c.b16 %v1632, %v1631
      %v1645 = vpack.c.b16 %v1634, %v1633
      %v1646 = vpack.c.b16 %v1636, %v1635
      %v1647 = vpack.c.b16 %v1638, %v1637
      %v1648 = vpack.c.b16 %v1640, %v1639
      %1657 = vmatprep.subr.bf16.mxu0 0
      %1658 = vmatpush1.bf16.msra.mxu0 %v1641
      %1659 = vmatprep.subr.bf16.mxu0 0
      %1660 = vmatpush1.bf16.msra.mxu0 %v1642
      %1661 = vmatprep.subr.bf16.mxu0 0
      %1662 = vmatpush1.bf16.msra.mxu0 %v1643
      %1663 = vmatprep.subr.bf16.mxu0 0
      %1664 = vmatpush1.bf16.msra.mxu0 %v1644
      %1665 = vmatprep.subr.bf16.mxu0 0
      %1666 = vmatpush1.bf16.msra.mxu0 %v1645
      %1667 = vmatprep.subr.bf16.mxu0 0
      %1668 = vmatpush1.bf16.msra.mxu0 %v1646
      %1669 = vmatprep.subr.bf16.mxu0 0
      %1670 = vmatpush1.bf16.msra.mxu0 %v1647
      %1671 = vmatprep.subr.bf16.mxu0 0
      %1672 = vmatpush1.bf16.msra.mxu0 %v1648
      %1673 = vmatprep.subr.bf16.mxu0 0
      %1674 = vmatpush1.bf16.msra.mxu0 0
      %1675 = vmatprep.subr.bf16.mxu0 0
      %1676 = vmatpush1.bf16.msra.mxu0 0
      %1677 = vmatprep.subr.bf16.mxu0 0
      %1678 = vmatpush1.bf16.msra.mxu0 0
      %1679 = vmatprep.subr.bf16.mxu0 0
      %1680 = vmatpush1.bf16.msra.mxu0 0
      %1681 = vmatprep.subr.bf16.mxu0 0
      %1682 = vmatpush1.bf16.msra.mxu0 0
      %1683 = vmatprep.subr.bf16.mxu0 0
      %1684 = vmatpush1.bf16.msra.mxu0 0
      %1685 = vmatprep.subr.bf16.mxu0 0
      %1686 = vmatpush1.bf16.msra.mxu0 0
      %1687 = vmatprep.subr.bf16.mxu0 0
      %1688 = vmatpush1.bf16.msra.mxu0 0
      %1689 = vmatprep.mubr.bf16.mxu0 0
      %1690 = vmatmul.mubr.bf16.gmra.mrb[0].mxu0 %v1584
      %v1691 = vpop.f32.mrb[0].mxu0
      %v1692 = vadd.f32 0.0, %v1691
      %v1693 = vpop.f32.mrb[0].mxu0
      %v1694 = vpop.f32.mrb[0].mxu0
      %v1695 = vadd.f32 0.0, %v1694
      %v1696 = vpop.f32.mrb[0].mxu0
      %1697 = vmatprep.mubr.bf16.mxu0 0
      %1698 = vmatmul.mubr.bf16.gmra.mrb[0].mxu0 %v1585
      %v1699 = vpop.f32.mrb[0].mxu0
      %v1700 = vadd.f32 0.0, %v1699
      %v1701 = vpop.f32.mrb[0].mxu0
      %v1702 = vpop.f32.mrb[0].mxu0
      %v1703 = vadd.f32 0.0, %v1702
      %v1704 = vpop.f32.mrb[0].mxu0
      %1705 = vmatprep.mubr.bf16.mxu0 0
      %1706 = vmatmul.mubr.bf16.gmra.mrb[0].mxu0 %v1586
      %v1707 = vpop.f32.mrb[0].mxu0
      %v1708 = vadd.f32 0.0, %v1707
      %v1709 = vpop.f32.mrb[0].mxu0
      %v1710 = vpop.f32.mrb[0].mxu0
      %v1711 = vadd.f32 0.0, %v1710
      %v1712 = vpop.f32.mrb[0].mxu0
      %1713 = vmatprep.mubr.bf16.mxu0 0
      %1714 = vmatmul.mubr.bf16.gmra.mrb[0].mxu0 %v1587
      %v1715 = vpop.f32.mrb[0].mxu0
      %v1716 = vadd.f32 0.0, %v1715
      %v1717 = vpop.f32.mrb[0].mxu0
      %v1718 = vpop.f32.mrb[0].mxu0
      %v1719 = vadd.f32 0.0, %v1718
      %v1720 = vpop.f32.mrb[0].mxu0
      %1721 = vmatprep.mubr.bf16.mxu0 0
      %1722 = vmatmul.mubr.bf16.gmra.mrb[0].mxu0 %v1588
      %v1723 = vpop.f32.mrb[0].mxu0
      %v1724 = vadd.f32 0.0, %v1723
      %v1725 = vpop.f32.mrb[0].mxu0
      %v1726 = vpop.f32.mrb[0].mxu0
      %v1727 = vadd.f32 0.0, %v1726
      %v1728 = vpop.f32.mrb[0].mxu0
      %1729 = vmatprep.mubr.bf16.mxu0 0
      %1730 = vmatmul.mubr.bf16.gmra.mrb[0].mxu0 %v1589
      %v1731 = vpop.f32.mrb[0].mxu0
      %v1732 = vadd.f32 0.0, %v1731
      %v1733 = vpop.f32.mrb[0].mxu0
      %v1734 = vpop.f32.mrb[0].mxu0
      %v1735 = vadd.f32 0.0, %v1734
      %v1736 = vpop.f32.mrb[0].mxu0
      %1737 = vmatprep.mubr.bf16.mxu0 0
      %1738 = vmatmul.mubr.bf16.gmra.mrb[0].mxu0 %v1590
      %v1739 = vpop.f32.mrb[0].mxu0
      %v1740 = vadd.f32 0.0, %v1739
      %v1741 = vpop.f32.mrb[0].mxu0
      %v1742 = vpop.f32.mrb[0].mxu0
      %v1743 = vadd.f32 0.0, %v1742
      %v1744 = vpop.f32.mrb[0].mxu0
      %1745 = vmatprep.mubr.bf16.mxu0 0
      %1746 = vmatmul.mubr.bf16.gmra.mrb[0].mxu0 %v1591
      %v1747 = vpop.f32.mrb[0].mxu0
      %v1748 = vadd.f32 0.0, %v1747
      %v1749 = vpop.f32.mrb[0].mxu0
      %v1750 = vpop.f32.mrb[0].mxu0
      %v1751 = vadd.f32 0.0, %v1750
      %v1752 = vpop.f32.mrb[0].mxu0
      %1753 = vdwg.mxu0
      %v1754 = vadd.f32 %v1533, %v1692
      %v1755 = vadd.f32 %v1534, %v1695
      %v1756 = vadd.f32 %v1535, %v1700
      %v1757 = vadd.f32 %v1536, %v1703
      %v1758 = vadd.f32 %v1537, %v1708
      %v1759 = vadd.f32 %v1538, %v1711
      %v1760 = vadd.f32 %v1539, %v1716
      %v1761 = vadd.f32 %v1540, %v1719
      %v1762 = vadd.f32 %v1541, %v1724
      %v1763 = vadd.f32 %v1542, %v1727
      %v1764 = vadd.f32 %v1543, %v1732
      %v1765 = vadd.f32 %v1544, %v1735
      %v1766 = vadd.f32 %v1545, %v1740
      %v1767 = vadd.f32 %v1546, %v1743
      %v1768 = vadd.f32 %v1547, %v1748
      %v1769 = vadd.f32 %v1548, %v1751
      %v1770 = vpack.c.bf16 %v1583, %v1583
      %s1771 = scalar_lea.vmem %s2, 320
      %v1772 = vld [vmem:[%s1771] sm:$0xf]
      %v1773 = vld [vmem:[%s1771 + $0x4] sm:$0xf]
      %v1774 = vld [vmem:[%s1771 + $0x8] sm:$0xf]
      %v1775 = vld [vmem:[%s1771 + $0xc] sm:$0xf]
      %v1776 = vld [vmem:[%s1771 + $0x10] sm:$0xf]
      %v1777 = vld [vmem:[%s1771 + $0x14] sm:$0xf]
      %v1778 = vld [vmem:[%s1771 + $0x18] sm:$0xf]
      %v1779 = vld [vmem:[%s1771 + $0x1c] sm:$0xf]
      %v1780 = vld [vmem:[%s1771 + $0x20] sm:$0xf]
      %v1781 = vld [vmem:[%s1771 + $0x24] sm:$0xf]
      %v1782 = vld [vmem:[%s1771 + $0x28] sm:$0xf]
      %v1783 = vld [vmem:[%s1771 + $0x2c] sm:$0xf]
      %v1784 = vld [vmem:[%s1771 + $0x30] sm:$0xf]
      %v1785 = vld [vmem:[%s1771 + $0x34] sm:$0xf]
      %v1786 = vld [vmem:[%s1771 + $0x38] sm:$0xf]
      %v1787 = vld [vmem:[%s1771 + $0x3c] sm:$0xf]
      %v1789 = vshrl.u32 %v1584, 16
      %v1791 = vshll.u32 %v1584, 16
      %v1793 = vrot.slane %v1791, 1
      %v1794 = vor.u32 %v1789, %v1793
      %v1796 = vshll.u32 %v1585, 16
      %v1798 = vrot.slane %v1796, 1
      %v1799 = vsel %vm407, %v1794, %v1798
      %v1800 = vshrl.u32 %v1585, 16
      %v1802 = vor.u32 %v1800, %v1798
      %v1804 = vshll.u32 %v1586, 16
      %v1806 = vrot.slane %v1804, 1
      %v1807 = vsel %vm407, %v1802, %v1806
      %v1808 = vshrl.u32 %v1586, 16
      %v1810 = vor.u32 %v1808, %v1806
      %v1812 = vshll.u32 %v1587, 16
      %v1814 = vrot.slane %v1812, 1
      %v1815 = vsel %vm407, %v1810, %v1814
      %v1816 = vshrl.u32 %v1587, 16
      %v1818 = vor.u32 %v1816, %v1814
      %v1820 = vshll.u32 %v1588, 16
      %v1822 = vrot.slane %v1820, 1
      %v1823 = vsel %vm407, %v1818, %v1822
      %v1824 = vshrl.u32 %v1588, 16
      %v1826 = vor.u32 %v1824, %v1822
      %v1828 = vshll.u32 %v1589, 16
      %v1830 = vrot.slane %v1828, 1
      %v1831 = vsel %vm407, %v1826, %v1830
      %v1832 = vshrl.u32 %v1589, 16
      %v1834 = vor.u32 %v1832, %v1830
      %v1836 = vshll.u32 %v1590, 16
      %v1838 = vrot.slane %v1836, 1
      %v1839 = vsel %vm407, %v1834, %v1838
      %v1840 = vshrl.u32 %v1590, 16
      %v1842 = vor.u32 %v1840, %v1838
      %v1844 = vshll.u32 %v1591, 16
      %v1846 = vrot.slane %v1844, 1
      %v1847 = vsel %vm407, %v1842, %v1846
      %v1848 = vshrl.u32 %v1591, 16
      %v1850 = vor.u32 %v1848, %v1846
      %v1852 = vshll.u32 %v1770, 16
      %v1854 = vrot.slane %v1852, 1
      %v1855 = vsel %vm407, %v1850, %v1854
      %v1880 = vunpack.c.l.b16 %v1772
      %v1881 = vunpack.c.l.b16 %v1773
      %v1882 = vunpack.c.l.b16 %v1774
      %v1883 = vunpack.c.l.b16 %v1775
      %v1884 = vunpack.c.l.b16 %v1776
      %v1885 = vunpack.c.l.b16 %v1777
      %v1886 = vunpack.c.l.b16 %v1778
      %v1887 = vunpack.c.l.b16 %v1779
      %v1888 = vunpack.c.l.b16 %v1780
      %v1889 = vunpack.c.l.b16 %v1781
      %v1890 = vunpack.c.l.b16 %v1782
      %v1891 = vunpack.c.l.b16 %v1783
      %v1892 = vunpack.c.l.b16 %v1784
      %v1893 = vunpack.c.l.b16 %v1785
      %v1894 = vunpack.c.l.b16 %v1786
      %v1895 = vunpack.c.l.b16 %v1787
      %v1896 = vpack.c.b16 %v1881, %v1880
      %v1897 = vpack.c.b16 %v1883, %v1882
      %v1898 = vpack.c.b16 %v1885, %v1884
      %v1899 = vpack.c.b16 %v1887, %v1886
      %v1900 = vpack.c.b16 %v1889, %v1888
      %v1901 = vpack.c.b16 %v1891, %v1890
      %v1902 = vpack.c.b16 %v1893, %v1892
      %v1903 = vpack.c.b16 %v1895, %v1894
      %1912 = vmatprep.subr.bf16.mxu0 0
      %1913 = vmatpush1.bf16.msra.mxu0 %v1896
      %1914 = vmatprep.subr.bf16.mxu0 0
      %1915 = vmatpush1.bf16.msra.mxu0 %v1897
      %1916 = vmatprep.subr.bf16.mxu0 0
      %1917 = vmatpush1.bf16.msra.mxu0 %v1898
      %1918 = vmatprep.subr.bf16.mxu0 0
      %1919 = vmatpush1.bf16.msra.mxu0 %v1899
      %1920 = vmatprep.subr.bf16.mxu0 0
      %1921 = vmatpush1.bf16.msra.mxu0 %v1900
      %1922 = vmatprep.subr.bf16.mxu0 0
      %1923 = vmatpush1.bf16.msra.mxu0 %v1901
      %1924 = vmatprep.subr.bf16.mxu0 0
      %1925 = vmatpush1.bf16.msra.mxu0 %v1902
      %1926 = vmatprep.subr.bf16.mxu0 0
      %1927 = vmatpush1.bf16.msra.mxu0 %v1903
      %1928 = vmatprep.subr.bf16.mxu0 0
      %1929 = vmatpush1.bf16.msra.mxu0 0
      %1930 = vmatprep.subr.bf16.mxu0 0
      %1931 = vmatpush1.bf16.msra.mxu0 0
      %1932 = vmatprep.subr.bf16.mxu0 0
      %1933 = vmatpush1.bf16.msra.mxu0 0
      %1934 = vmatprep.subr.bf16.mxu0 0
      %1935 = vmatpush1.bf16.msra.mxu0 0
      %1936 = vmatprep.subr.bf16.mxu0 0
      %1937 = vmatpush1.bf16.msra.mxu0 0
      %1938 = vmatprep.subr.bf16.mxu0 0
      %1939 = vmatpush1.bf16.msra.mxu0 0
      %1940 = vmatprep.subr.bf16.mxu0 0
      %1941 = vmatpush1.bf16.msra.mxu0 0
      %1942 = vmatprep.subr.bf16.mxu0 0
      %1943 = vmatpush1.bf16.msra.mxu0 0
      %1944 = vmatprep.mubr.bf16.mxu0 0
      %1945 = vmatmul.mubr.bf16.gmra.mrb[0].mxu0 %v1799
      %v1946 = vpop.f32.mrb[0].mxu0
      %v1947 = vadd.f32 0.0, %v1946
      %v1948 = vpop.f32.mrb[0].mxu0
      %v1949 = vpop.f32.mrb[0].mxu0
      %v1950 = vadd.f32 0.0, %v1949
      %v1951 = vpop.f32.mrb[0].mxu0
      %1952 = vmatprep.mubr.bf16.mxu0 0
      %1953 = vmatmul.mubr.bf16.gmra.mrb[0].mxu0 %v1807
      %v1954 = vpop.f32.mrb[0].mxu0
      %v1955 = vadd.f32 0.0, %v1954
      %v1956 = vpop.f32.mrb[0].mxu0
      %v1957 = vpop.f32.mrb[0].mxu0
      %v1958 = vadd.f32 0.0, %v1957
      %v1959 = vpop.f32.mrb[0].mxu0
      %1960 = vmatprep.mubr.bf16.mxu0 0
      %1961 = vmatmul.mubr.bf16.gmra.mrb[0].mxu0 %v1815
      %v1962 = vpop.f32.mrb[0].mxu0
      %v1963 = vadd.f32 0.0, %v1962
      %v1964 = vpop.f32.mrb[0].mxu0
      %v1965 = vpop.f32.mrb[0].mxu0
      %v1966 = vadd.f32 0.0, %v1965
      %v1967 = vpop.f32.mrb[0].mxu0
      %1968 = vmatprep.mubr.bf16.mxu0 0
      %1969 = vmatmul.mubr.bf16.gmra.mrb[0].mxu0 %v1823
      %v1970 = vpop.f32.mrb[0].mxu0
      %v1971 = vadd.f32 0.0, %v1970
      %v1972 = vpop.f32.mrb[0].mxu0
      %v1973 = vpop.f32.mrb[0].mxu0
      %v1974 = vadd.f32 0.0, %v1973
      %v1975 = vpop.f32.mrb[0].mxu0
      %1976 = vmatprep.mubr.bf16.mxu0 0
      %1977 = vmatmul.mubr.bf16.gmra.mrb[0].mxu0 %v1831
      %v1978 = vpop.f32.mrb[0].mxu0
      %v1979 = vadd.f32 0.0, %v1978
      %v1980 = vpop.f32.mrb[0].mxu0
      %v1981 = vpop.f32.mrb[0].mxu0
      %v1982 = vadd.f32 0.0, %v1981
      %v1983 = vpop.f32.mrb[0].mxu0
      %1984 = vmatprep.mubr.bf16.mxu0 0
      %1985 = vmatmul.mubr.bf16.gmra.mrb[0].mxu0 %v1839
      %v1986 = vpop.f32.mrb[0].mxu0
      %v1987 = vadd.f32 0.0, %v1986
      %v1988 = vpop.f32.mrb[0].mxu0
      %v1989 = vpop.f32.mrb[0].mxu0
      %v1990 = vadd.f32 0.0, %v1989
      %v1991 = vpop.f32.mrb[0].mxu0
      %1992 = vmatprep.mubr.bf16.mxu0 0
      %1993 = vmatmul.mubr.bf16.gmra.mrb[0].mxu0 %v1847
      %v1994 = vpop.f32.mrb[0].mxu0
      %v1995 = vadd.f32 0.0, %v1994
      %v1996 = vpop.f32.mrb[0].mxu0
      %v1997 = vpop.f32.mrb[0].mxu0
      %v1998 = vadd.f32 0.0, %v1997
      %v1999 = vpop.f32.mrb[0].mxu0
      %2000 = vmatprep.mubr.bf16.mxu0 0
      %2001 = vmatmul.mubr.bf16.gmra.mrb[0].mxu0 %v1855
      %v2002 = vpop.f32.mrb[0].mxu0
      %v2003 = vadd.f32 0.0, %v2002
      %v2004 = vpop.f32.mrb[0].mxu0
      %v2005 = vpop.f32.mrb[0].mxu0
      %v2006 = vadd.f32 0.0, %v2005
      %v2007 = vpop.f32.mrb[0].mxu0
      %2008 = vdwg.mxu0
      %v2009 = vadd.f32 %v1754, %v1947
      %v2010 = vadd.f32 %v1755, %v1950
      %v2011 = vadd.f32 %v1756, %v1955
      %v2012 = vadd.f32 %v1757, %v1958
      %v2013 = vadd.f32 %v1758, %v1963
      %v2014 = vadd.f32 %v1759, %v1966
      %v2015 = vadd.f32 %v1760, %v1971
      %v2016 = vadd.f32 %v1761, %v1974
      %v2017 = vadd.f32 %v1762, %v1979
      %v2018 = vadd.f32 %v1763, %v1982
      %v2019 = vadd.f32 %v1764, %v1987
      %v2020 = vadd.f32 %v1765, %v1990
      %v2021 = vadd.f32 %v1766, %v1995
      %v2022 = vadd.f32 %v1767, %v1998
      %v2023 = vadd.f32 %v1768, %v2003
      %v2024 = vadd.f32 %v1769, %v2006
      %s2025 = scalar_lea.vmem %s315, 240
      %v2026 = vld [vmem:[%s2025] sm:$0xf]
      %v2027 = vld [vmem:[%s2025 + $0x4] sm:$0xf]
      %v2028 = vld [vmem:[%s2025 + $0x8] sm:$0xf]
      %v2029 = vld [vmem:[%s2025 + $0xc] sm:$0xf]
      %v2030 = vld [vmem:[%s2025 + $0x10] sm:$0xf]
      %v2031 = vld [vmem:[%s2025 + $0x14] sm:$0xf]
      %v2032 = vld [vmem:[%s2025 + $0x18] sm:$0xf]
      %v2033 = vld [vmem:[%s2025 + $0x1c] sm:$0xf]
      %v2034 = vld [vmem:[%s2025 + $0x20] sm:$0xf]
      %v2035 = vld [vmem:[%s2025 + $0x24] sm:$0xf]
      %v2036 = vld [vmem:[%s2025 + $0x28] sm:$0xf]
      %v2037 = vld [vmem:[%s2025 + $0x2c] sm:$0xf]
      %v2038 = vld [vmem:[%s2025 + $0x30] sm:$0xf]
      %v2039 = vld [vmem:[%s2025 + $0x34] sm:$0xf]
      %v2040 = vld [vmem:[%s2025 + $0x38] sm:$0xf]
      %v2041 = vld [vmem:[%s2025 + $0x3c] sm:$0xf]
      %v2042 = vunpack.c.l.bf16 %v2026
      %v2043 = vunpack.c.l.bf16 %v2027
      %v2044 = vunpack.c.l.bf16 %v2028
      %v2045 = vunpack.c.l.bf16 %v2029
      %v2046 = vunpack.c.l.bf16 %v2030
      %v2047 = vunpack.c.l.bf16 %v2031
      %v2048 = vunpack.c.l.bf16 %v2032
      %v2049 = vunpack.c.l.bf16 %v2033
      %v2050 = vunpack.c.l.bf16 %v2034
      %v2051 = vunpack.c.l.bf16 %v2035
      %v2052 = vunpack.c.l.bf16 %v2036
      %v2053 = vunpack.c.l.bf16 %v2037
      %v2054 = vunpack.c.l.bf16 %v2038
      %v2055 = vunpack.c.l.bf16 %v2039
      %v2056 = vunpack.c.l.bf16 %v2040
      %v2057 = vunpack.c.l.bf16 %v2041
      %v2058 = vpack.c.bf16 %v2043, %v2042
      %v2059 = vpack.c.bf16 %v2045, %v2044
      %v2060 = vpack.c.bf16 %v2047, %v2046
      %v2061 = vpack.c.bf16 %v2049, %v2048
      %v2062 = vpack.c.bf16 %v2051, %v2050
      %v2063 = vpack.c.bf16 %v2053, %v2052
      %v2064 = vpack.c.bf16 %v2055, %v2054
      %v2065 = vpack.c.bf16 %v2057, %v2056
      %s2066 = scalar_lea.vmem %s2, 256
      %v2067 = vld [vmem:[%s2066] sm:$0xf]
      %v2068 = vld [vmem:[%s2066 + $0x4] sm:$0xf]
      %v2069 = vld [vmem:[%s2066 + $0x8] sm:$0xf]
      %v2070 = vld [vmem:[%s2066 + $0xc] sm:$0xf]
      %v2071 = vld [vmem:[%s2066 + $0x10] sm:$0xf]
      %v2072 = vld [vmem:[%s2066 + $0x14] sm:$0xf]
      %v2073 = vld [vmem:[%s2066 + $0x18] sm:$0xf]
      %v2074 = vld [vmem:[%s2066 + $0x1c] sm:$0xf]
      %v2075 = vld [vmem:[%s2066 + $0x20] sm:$0xf]
      %v2076 = vld [vmem:[%s2066 + $0x24] sm:$0xf]
      %v2077 = vld [vmem:[%s2066 + $0x28] sm:$0xf]
      %v2078 = vld [vmem:[%s2066 + $0x2c] sm:$0xf]
      %v2079 = vld [vmem:[%s2066 + $0x30] sm:$0xf]
      %v2080 = vld [vmem:[%s2066 + $0x34] sm:$0xf]
      %v2081 = vld [vmem:[%s2066 + $0x38] sm:$0xf]
      %v2082 = vld [vmem:[%s2066 + $0x3c] sm:$0xf]
      %v2099 = vunpack.c.l.b16 %v2067
      %v2100 = vunpack.c.l.b16 %v2068
      %v2101 = vunpack.c.l.b16 %v2069
      %v2102 = vunpack.c.l.b16 %v2070
      %v2103 = vunpack.c.l.b16 %v2071
      %v2104 = vunpack.c.l.b16 %v2072
      %v2105 = vunpack.c.l.b16 %v2073
      %v2106 = vunpack.c.l.b16 %v2074
      %v2107 = vunpack.c.l.b16 %v2075
      %v2108 = vunpack.c.l.b16 %v2076
      %v2109 = vunpack.c.l.b16 %v2077
      %v2110 = vunpack.c.l.b16 %v2078
      %v2111 = vunpack.c.l.b16 %v2079
      %v2112 = vunpack.c.l.b16 %v2080
      %v2113 = vunpack.c.l.b16 %v2081
      %v2114 = vunpack.c.l.b16 %v2082
      %v2115 = vpack.c.b16 %v2100, %v2099
      %v2116 = vpack.c.b16 %v2102, %v2101
      %v2117 = vpack.c.b16 %v2104, %v2103
      %v2118 = vpack.c.b16 %v2106, %v2105
      %v2119 = vpack.c.b16 %v2108, %v2107
      %v2120 = vpack.c.b16 %v2110, %v2109
      %v2121 = vpack.c.b16 %v2112, %v2111
      %v2122 = vpack.c.b16 %v2114, %v2113
      %2131 = vmatprep.subr.bf16.mxu0 0
      %2132 = vmatpush1.bf16.msra.mxu0 %v2115
      %2133 = vmatprep.subr.bf16.mxu0 0
      %2134 = vmatpush1.bf16.msra.mxu0 %v2116
      %2135 = vmatprep.subr.bf16.mxu0 0
      %2136 = vmatpush1.bf16.msra.mxu0 %v2117
      %2137 = vmatprep.subr.bf16.mxu0 0
      %2138 = vmatpush1.bf16.msra.mxu0 %v2118
      %2139 = vmatprep.subr.bf16.mxu0 0
      %2140 = vmatpush1.bf16.msra.mxu0 %v2119
      %2141 = vmatprep.subr.bf16.mxu0 0
      %2142 = vmatpush1.bf16.msra.mxu0 %v2120
      %2143 = vmatprep.subr.bf16.mxu0 0
      %2144 = vmatpush1.bf16.msra.mxu0 %v2121
      %2145 = vmatprep.subr.bf16.mxu0 0
      %2146 = vmatpush1.bf16.msra.mxu0 %v2122
      %2147 = vmatprep.subr.bf16.mxu0 0
      %2148 = vmatpush1.bf16.msra.mxu0 0
      %2149 = vmatprep.subr.bf16.mxu0 0
      %2150 = vmatpush1.bf16.msra.mxu0 0
      %2151 = vmatprep.subr.bf16.mxu0 0
      %2152 = vmatpush1.bf16.msra.mxu0 0
      %2153 = vmatprep.subr.bf16.mxu0 0
      %2154 = vmatpush1.bf16.msra.mxu0 0
      %2155 = vmatprep.subr.bf16.mxu0 0
      %2156 = vmatpush1.bf16.msra.mxu0 0
      %2157 = vmatprep.subr.bf16.mxu0 0
      %2158 = vmatpush1.bf16.msra.mxu0 0
      %2159 = vmatprep.subr.bf16.mxu0 0
      %2160 = vmatpush1.bf16.msra.mxu0 0
      %2161 = vmatprep.subr.bf16.mxu0 0
      %2162 = vmatpush1.bf16.msra.mxu0 0
      %2163 = vmatprep.mubr.bf16.mxu0 0
      %2164 = vmatmul.mubr.bf16.gmra.mrb[0].mxu0 %v2058
      %v2165 = vpop.f32.mrb[0].mxu0
      %v2166 = vadd.f32 0.0, %v2165
      %v2167 = vpop.f32.mrb[0].mxu0
      %v2168 = vpop.f32.mrb[0].mxu0
      %v2169 = vadd.f32 0.0, %v2168
      %v2170 = vpop.f32.mrb[0].mxu0
      %2171 = vmatprep.mubr.bf16.mxu0 0
      %2172 = vmatmul.mubr.bf16.gmra.mrb[0].mxu0 %v2059
      %v2173 = vpop.f32.mrb[0].mxu0
      %v2174 = vadd.f32 0.0, %v2173
      %v2175 = vpop.f32.mrb[0].mxu0
      %v2176 = vpop.f32.mrb[0].mxu0
      %v2177 = vadd.f32 0.0, %v2176
      %v2178 = vpop.f32.mrb[0].mxu0
      %2179 = vmatprep.mubr.bf16.mxu0 0
      %2180 = vmatmul.mubr.bf16.gmra.mrb[0].mxu0 %v2060
      %v2181 = vpop.f32.mrb[0].mxu0
      %v2182 = vadd.f32 0.0, %v2181
      %v2183 = vpop.f32.mrb[0].mxu0
      %v2184 = vpop.f32.mrb[0].mxu0
      %v2185 = vadd.f32 0.0, %v2184
      %v2186 = vpop.f32.mrb[0].mxu0
      %2187 = vmatprep.mubr.bf16.mxu0 0
      %2188 = vmatmul.mubr.bf16.gmra.mrb[0].mxu0 %v2061
      %v2189 = vpop.f32.mrb[0].mxu0
      %v2190 = vadd.f32 0.0, %v2189
      %v2191 = vpop.f32.mrb[0].mxu0
      %v2192 = vpop.f32.mrb[0].mxu0
      %v2193 = vadd.f32 0.0, %v2192
      %v2194 = vpop.f32.mrb[0].mxu0
      %2195 = vmatprep.mubr.bf16.mxu0 0
      %2196 = vmatmul.mubr.bf16.gmra.mrb[0].mxu0 %v2062
      %v2197 = vpop.f32.mrb[0].mxu0
      %v2198 = vadd.f32 0.0, %v2197
      %v2199 = vpop.f32.mrb[0].mxu0
      %v2200 = vpop.f32.mrb[0].mxu0
      %v2201 = vadd.f32 0.0, %v2200
      %v2202 = vpop.f32.mrb[0].mxu0
      %2203 = vmatprep.mubr.bf16.mxu0 0
      %2204 = vmatmul.mubr.bf16.gmra.mrb[0].mxu0 %v2063
      %v2205 = vpop.f32.mrb[0].mxu0
      %v2206 = vadd.f32 0.0, %v2205
      %v2207 = vpop.f32.mrb[0].mxu0
      %v2208 = vpop.f32.mrb[0].mxu0
      %v2209 = vadd.f32 0.0, %v2208
      %v2210 = vpop.f32.mrb[0].mxu0
      %2211 = vmatprep.mubr.bf16.mxu0 0
      %2212 = vmatmul.mubr.bf16.gmra.mrb[0].mxu0 %v2064
      %v2213 = vpop.f32.mrb[0].mxu0
      %v2214 = vadd.f32 0.0, %v2213
      %v2215 = vpop.f32.mrb[0].mxu0
      %v2216 = vpop.f32.mrb[0].mxu0
      %v2217 = vadd.f32 0.0, %v2216
      %v2218 = vpop.f32.mrb[0].mxu0
      %2219 = vmatprep.mubr.bf16.mxu0 0
      %2220 = vmatmul.mubr.bf16.gmra.mrb[0].mxu0 %v2065
      %v2221 = vpop.f32.mrb[0].mxu0
      %v2222 = vadd.f32 0.0, %v2221
      %v2223 = vpop.f32.mrb[0].mxu0
      %v2224 = vpop.f32.mrb[0].mxu0
      %v2225 = vadd.f32 0.0, %v2224
      %v2226 = vpop.f32.mrb[0].mxu0
      %2227 = vdwg.mxu0
      %v2228 = vadd.f32 %v2009, %v2166
      %v2229 = vadd.f32 %v2010, %v2169
      %v2230 = vadd.f32 %v2011, %v2174
      %v2231 = vadd.f32 %v2012, %v2177
      %v2232 = vadd.f32 %v2013, %v2182
      %v2233 = vadd.f32 %v2014, %v2185
      %v2234 = vadd.f32 %v2015, %v2190
      %v2235 = vadd.f32 %v2016, %v2193
      %v2236 = vadd.f32 %v2017, %v2198
      %v2237 = vadd.f32 %v2018, %v2201
      %v2238 = vadd.f32 %v2019, %v2206
      %v2239 = vadd.f32 %v2020, %v2209
      %v2240 = vadd.f32 %v2021, %v2214
      %v2241 = vadd.f32 %v2022, %v2217
      %v2242 = vadd.f32 %v2023, %v2222
      %v2243 = vadd.f32 %v2024, %v2225
      %v2244 = vld [vmem:[%s3] sm:$0x1]
      %v2246 = vlaneseq
      %v2247 = vshrl.u32 %v2246, 7
      %v2248 = vsub.s32 0, %v2247
      %v2249 = vrot.slane %v2244, %v2248
      %v2251 = vadd.f32 %v2228, %v2249
      %v2252 = vadd.f32 %v2229, %v2249
      %v2253 = vadd.f32 %v2230, %v2249
      %v2254 = vadd.f32 %v2231, %v2249
      %v2255 = vadd.f32 %v2232, %v2249
      %v2256 = vadd.f32 %v2233, %v2249
      %v2257 = vadd.f32 %v2234, %v2249
      %v2258 = vadd.f32 %v2235, %v2249
      %v2259 = vadd.f32 %v2236, %v2249
      %v2260 = vadd.f32 %v2237, %v2249
      %v2261 = vadd.f32 %v2238, %v2249
      %v2262 = vadd.f32 %v2239, %v2249
      %v2263 = vadd.f32 %v2240, %v2249
      %v2264 = vadd.f32 %v2241, %v2249
      %v2265 = vadd.f32 %v2242, %v2249
      %v2266 = vadd.f32 %v2243, %v2249
      %v2267 = vmax.f32 %v2251, 0.0
      %v2268 = vmax.f32 %v2252, 0.0
      %v2269 = vmax.f32 %v2253, 0.0
      %v2270 = vmax.f32 %v2254, 0.0
      %v2271 = vmax.f32 %v2255, 0.0
      %v2272 = vmax.f32 %v2256, 0.0
      %v2273 = vmax.f32 %v2257, 0.0
      %v2274 = vmax.f32 %v2258, 0.0
      %v2275 = vmax.f32 %v2259, 0.0
      %v2276 = vmax.f32 %v2260, 0.0
      %v2277 = vmax.f32 %v2261, 0.0
      %v2278 = vmax.f32 %v2262, 0.0
      %v2279 = vmax.f32 %v2263, 0.0
      %v2280 = vmax.f32 %v2264, 0.0
      %v2281 = vmax.f32 %v2265, 0.0
      %v2282 = vmax.f32 %v2266, 0.0
      %v2283 = vpack.c.bf16 %v2268, %v2267
      %v2284 = vpack.c.bf16 %v2270, %v2269
      %v2285 = vpack.c.bf16 %v2272, %v2271
      %v2286 = vpack.c.bf16 %v2274, %v2273
      %v2287 = vpack.c.bf16 %v2276, %v2275
      %v2288 = vpack.c.bf16 %v2278, %v2277
      %v2289 = vpack.c.bf16 %v2280, %v2279
      %v2290 = vpack.c.bf16 %v2282, %v2281
      %v2291 = vld [vmem:[%s4] sm:$0xf]
      %v2292 = vld [vmem:[%s4 + $0x4] sm:$0xf]
      %v2293 = vld [vmem:[%s4 + $0x8] sm:$0xf]
      %v2294 = vld [vmem:[%s4 + $0xc] sm:$0xf]
      %v2295 = vld [vmem:[%s4 + $0x10] sm:$0xf]
      %v2296 = vld [vmem:[%s4 + $0x14] sm:$0xf]
      %v2297 = vld [vmem:[%s4 + $0x18] sm:$0xf]
      %v2298 = vld [vmem:[%s4 + $0x1c] sm:$0xf]
      %v2299 = vld [vmem:[%s4 + $0x20] sm:$0xf]
      %v2300 = vld [vmem:[%s4 + $0x24] sm:$0xf]
      %v2301 = vld [vmem:[%s4 + $0x28] sm:$0xf]
      %v2302 = vld [vmem:[%s4 + $0x2c] sm:$0xf]
      %v2303 = vld [vmem:[%s4 + $0x30] sm:$0xf]
      %v2304 = vld [vmem:[%s4 + $0x34] sm:$0xf]
      %v2305 = vld [vmem:[%s4 + $0x38] sm:$0xf]
      %v2306 = vld [vmem:[%s4 + $0x3c] sm:$0xf]
      %v2307 = vld [vmem:[%s5] sm:$0x1]
      %v2309 = vlaneseq
      %v2310 = vshrl.u32 %v2309, 7
      %v2311 = vsub.s32 0, %v2310
      %v2312 = vrot.slane %v2307, %v2311
      %v2330 = vunpack.c.l.b16 %v2291
      %v2331 = vunpack.c.l.b16 %v2292
      %v2332 = vunpack.c.l.b16 %v2293
      %v2333 = vunpack.c.l.b16 %v2294
      %v2334 = vunpack.c.l.b16 %v2295
      %v2335 = vunpack.c.l.b16 %v2296
      %v2336 = vunpack.c.l.b16 %v2297
      %v2337 = vunpack.c.l.b16 %v2298
      %v2338 = vunpack.c.l.b16 %v2299
      %v2339 = vunpack.c.l.b16 %v2300
      %v2340 = vunpack.c.l.b16 %v2301
      %v2341 = vunpack.c.l.b16 %v2302
      %v2342 = vunpack.c.l.b16 %v2303
      %v2343 = vunpack.c.l.b16 %v2304
      %v2344 = vunpack.c.l.b16 %v2305
      %v2345 = vunpack.c.l.b16 %v2306
      %v2346 = vpack.c.b16 %v2331, %v2330
      %v2347 = vpack.c.b16 %v2333, %v2332
      %v2348 = vpack.c.b16 %v2335, %v2334
      %v2349 = vpack.c.b16 %v2337, %v2336
      %v2350 = vpack.c.b16 %v2339, %v2338
      %v2351 = vpack.c.b16 %v2341, %v2340
      %v2352 = vpack.c.b16 %v2343, %v2342
      %v2353 = vpack.c.b16 %v2345, %v2344
      %2362 = vmatprep.subr.bf16.mxu0 0
      %2363 = vmatpush1.bf16.msra.mxu0 %v2346
      %2364 = vmatprep.subr.bf16.mxu0 0
      %2365 = vmatpush1.bf16.msra.mxu0 %v2347
      %2366 = vmatprep.subr.bf16.mxu0 0
      %2367 = vmatpush1.bf16.msra.mxu0 %v2348
      %2368 = vmatprep.subr.bf16.mxu0 0
      %2369 = vmatpush1.bf16.msra.mxu0 %v2349
      %2370 = vmatprep.subr.bf16.mxu0 0
      %2371 = vmatpush1.bf16.msra.mxu0 %v2350
      %2372 = vmatprep.subr.bf16.mxu0 0
      %2373 = vmatpush1.bf16.msra.mxu0 %v2351
      %2374 = vmatprep.subr.bf16.mxu0 0
      %2375 = vmatpush1.bf16.msra.mxu0 %v2352
      %2376 = vmatprep.subr.bf16.mxu0 0
      %2377 = vmatpush1.bf16.msra.mxu0 %v2353
      %2378 = vmatprep.subr.bf16.mxu0 0
      %2379 = vmatpush1.bf16.msra.mxu0 0
      %2380 = vmatprep.subr.bf16.mxu0 0
      %2381 = vmatpush1.bf16.msra.mxu0 0
      %2382 = vmatprep.subr.bf16.mxu0 0
      %2383 = vmatpush1.bf16.msra.mxu0 0
      %2384 = vmatprep.subr.bf16.mxu0 0
      %2385 = vmatpush1.bf16.msra.mxu0 0
      %2386 = vmatprep.subr.bf16.mxu0 0
      %2387 = vmatpush1.bf16.msra.mxu0 0
      %2388 = vmatprep.subr.bf16.mxu0 0
      %2389 = vmatpush1.bf16.msra.mxu0 0
      %2390 = vmatprep.subr.bf16.mxu0 0
      %2391 = vmatpush1.bf16.msra.mxu0 0
      %2392 = vmatprep.subr.bf16.mxu0 0
      %2393 = vmatpush1.bf16.msra.mxu0 0
      %2394 = vmatprep.mubr.bf16.mxu0 0
      %2395 = vmatmul.mubr.bf16.gmra.mrb[0].mxu0 %v2283
      %v2396 = vpop.f32.mrb[0].mxu0
      %v2397 = vadd.f32 %v2312, %v2396
      %v2398 = vpop.f32.mrb[0].mxu0
      %v2399 = vpop.f32.mrb[0].mxu0
      %v2400 = vadd.f32 %v2312, %v2399
      %v2401 = vpop.f32.mrb[0].mxu0
      %2402 = vmatprep.mubr.bf16.mxu0 0
      %2403 = vmatmul.mubr.bf16.gmra.mrb[0].mxu0 %v2284
      %v2404 = vpop.f32.mrb[0].mxu0
      %v2405 = vadd.f32 %v2312, %v2404
      %v2406 = vpop.f32.mrb[0].mxu0
      %v2407 = vpop.f32.mrb[0].mxu0
      %v2408 = vadd.f32 %v2312, %v2407
      %v2409 = vpop.f32.mrb[0].mxu0
      %2410 = vmatprep.mubr.bf16.mxu0 0
      %2411 = vmatmul.mubr.bf16.gmra.mrb[0].mxu0 %v2285
      %v2412 = vpop.f32.mrb[0].mxu0
      %v2413 = vadd.f32 %v2312, %v2412
      %v2414 = vpop.f32.mrb[0].mxu0
      %v2415 = vpop.f32.mrb[0].mxu0
      %v2416 = vadd.f32 %v2312, %v2415
      %v2417 = vpop.f32.mrb[0].mxu0
      %2418 = vmatprep.mubr.bf16.mxu0 0
      %2419 = vmatmul.mubr.bf16.gmra.mrb[0].mxu0 %v2286
      %v2420 = vpop.f32.mrb[0].mxu0
      %v2421 = vadd.f32 %v2312, %v2420
      %v2422 = vpop.f32.mrb[0].mxu0
      %v2423 = vpop.f32.mrb[0].mxu0
      %v2424 = vadd.f32 %v2312, %v2423
      %v2425 = vpop.f32.mrb[0].mxu0
      %2426 = vmatprep.mubr.bf16.mxu0 0
      %2427 = vmatmul.mubr.bf16.gmra.mrb[0].mxu0 %v2287
      %v2428 = vpop.f32.mrb[0].mxu0
      %v2429 = vadd.f32 %v2312, %v2428
      %v2430 = vpop.f32.mrb[0].mxu0
      %v2431 = vpop.f32.mrb[0].mxu0
      %v2432 = vadd.f32 %v2312, %v2431
      %v2433 = vpop.f32.mrb[0].mxu0
      %2434 = vmatprep.mubr.bf16.mxu0 0
      %2435 = vmatmul.mubr.bf16.gmra.mrb[0].mxu0 %v2288
      %v2436 = vpop.f32.mrb[0].mxu0
      %v2437 = vadd.f32 %v2312, %v2436
      %v2438 = vpop.f32.mrb[0].mxu0
      %v2439 = vpop.f32.mrb[0].mxu0
      %v2440 = vadd.f32 %v2312, %v2439
      %v2441 = vpop.f32.mrb[0].mxu0
      %2442 = vmatprep.mubr.bf16.mxu0 0
      %2443 = vmatmul.mubr.bf16.gmra.mrb[0].mxu0 %v2289
      %v2444 = vpop.f32.mrb[0].mxu0
      %v2445 = vadd.f32 %v2312, %v2444
      %v2446 = vpop.f32.mrb[0].mxu0
      %v2447 = vpop.f32.mrb[0].mxu0
      %v2448 = vadd.f32 %v2312, %v2447
      %v2449 = vpop.f32.mrb[0].mxu0
      %2450 = vmatprep.mubr.bf16.mxu0 0
      %2451 = vmatmul.mubr.bf16.gmra.mrb[0].mxu0 %v2290
      %v2452 = vpop.f32.mrb[0].mxu0
      %v2453 = vadd.f32 %v2312, %v2452
      %v2454 = vpop.f32.mrb[0].mxu0
      %v2455 = vpop.f32.mrb[0].mxu0
      %v2456 = vadd.f32 %v2312, %v2455
      %v2457 = vpop.f32.mrb[0].mxu0
      %2458 = vdwg.mxu0
      %v2459 = vld [vmem:[%s320] sm:$0xf]
      %v2460 = vld [vmem:[%s320 + $0x4] sm:$0xf]
      %v2461 = vld [vmem:[%s320 + $0x8] sm:$0xf]
      %v2462 = vld [vmem:[%s320 + $0xc] sm:$0xf]
      %v2463 = vld [vmem:[%s320 + $0x10] sm:$0xf]
      %v2464 = vld [vmem:[%s320 + $0x14] sm:$0xf]
      %v2465 = vld [vmem:[%s320 + $0x18] sm:$0xf]
      %v2466 = vld [vmem:[%s320 + $0x1c] sm:$0xf]
      %v2467 = vld [vmem:[%s320 + $0x20] sm:$0xf]
      %v2468 = vld [vmem:[%s320 + $0x24] sm:$0xf]
      %v2469 = vld [vmem:[%s320 + $0x28] sm:$0xf]
      %v2470 = vld [vmem:[%s320 + $0x2c] sm:$0xf]
      %v2471 = vld [vmem:[%s320 + $0x30] sm:$0xf]
      %v2472 = vld [vmem:[%s320 + $0x34] sm:$0xf]
      %v2473 = vld [vmem:[%s320 + $0x38] sm:$0xf]
      %v2474 = vld [vmem:[%s320 + $0x3c] sm:$0xf]
      %v2475 = vld [vmem:[%s6] sm:$0xf]
      %v2492 = vunpack.c.l.b16 %v2459
      %v2493 = vunpack.c.l.b16 %v2460
      %v2494 = vunpack.c.l.b16 %v2461
      %v2495 = vunpack.c.l.b16 %v2462
      %v2496 = vunpack.c.l.b16 %v2463
      %v2497 = vunpack.c.l.b16 %v2464
      %v2498 = vunpack.c.l.b16 %v2465
      %v2499 = vunpack.c.l.b16 %v2466
      %v2500 = vunpack.c.l.b16 %v2467
      %v2501 = vunpack.c.l.b16 %v2468
      %v2502 = vunpack.c.l.b16 %v2469
      %v2503 = vunpack.c.l.b16 %v2470
      %v2504 = vunpack.c.l.b16 %v2471
      %v2505 = vunpack.c.l.b16 %v2472
      %v2506 = vunpack.c.l.b16 %v2473
      %v2507 = vunpack.c.l.b16 %v2474
      %v2508 = vpack.c.b16 %v2493, %v2492
      %v2509 = vpack.c.b16 %v2495, %v2494
      %v2510 = vpack.c.b16 %v2497, %v2496
      %v2511 = vpack.c.b16 %v2499, %v2498
      %v2512 = vpack.c.b16 %v2501, %v2500
      %v2513 = vpack.c.b16 %v2503, %v2502
      %v2514 = vpack.c.b16 %v2505, %v2504
      %v2515 = vpack.c.b16 %v2507, %v2506
      %vm2516 = vcmask 64512
      %v2518 = vsel %vm2516, %v2508, 0
      %v2521 = vsel %vm2516, %v2509, 0
      %v2524 = vsel %vm2516, %v2510, 0
      %v2527 = vsel %vm2516, %v2511, 0
      %v2530 = vsel %vm2516, %v2512, 0
      %v2533 = vsel %vm2516, %v2513, 0
      %v2536 = vsel %vm2516, %v2514, 0
      %v2539 = vsel %vm2516, %v2515, 0
      %vm2541 = vcmask 1043456
      %v2543 = vsel %vm2541, %v2475, 0
      %2545 = vmatprep.subr.bf16.mxu0 0
      %2546 = vmatpush1.bf16.msra.mxu0 %v2543
      %2547 = vmatprep.subr.bf16.mxu0 0
      %2548 = vmatpush1.bf16.msra.mxu0 0
      %2549 = vmatprep.subr.bf16.mxu0 0
      %2550 = vmatpush1.bf16.msra.mxu0 0
      %2551 = vmatprep.subr.bf16.mxu0 0
      %2552 = vmatpush1.bf16.msra.mxu0 0
      %2553 = vmatprep.subr.bf16.mxu0 0
      %2554 = vmatpush1.bf16.msra.mxu0 0
      %2555 = vmatprep.subr.bf16.mxu0 0
      %2556 = vmatpush1.bf16.msra.mxu0 0
      %2557 = vmatprep.subr.bf16.mxu0 0
      %2558 = vmatpush1.bf16.msra.mxu0 0
      %2559 = vmatprep.subr.bf16.mxu0 0
      %2560 = vmatpush1.bf16.msra.mxu0 0
      %2561 = vmatprep.subr.bf16.mxu0 0
      %2562 = vmatpush1.bf16.msra.mxu0 0
      %2563 = vmatprep.subr.bf16.mxu0 0
      %2564 = vmatpush1.bf16.msra.mxu0 0
      %2565 = vmatprep.subr.bf16.mxu0 0
      %2566 = vmatpush1.bf16.msra.mxu0 0
      %2567 = vmatprep.subr.bf16.mxu0 0
      %2568 = vmatpush1.bf16.msra.mxu0 0
      %2569 = vmatprep.subr.bf16.mxu0 0
      %2570 = vmatpush1.bf16.msra.mxu0 0
      %2571 = vmatprep.subr.bf16.mxu0 0
      %2572 = vmatpush1.bf16.msra.mxu0 0
      %2573 = vmatprep.subr.bf16.mxu0 0
      %2574 = vmatpush1.bf16.msra.mxu0 0
      %2575 = vmatprep.subr.bf16.mxu0 0
      %2576 = vmatpush1.bf16.msra.mxu0 0
      %2577 = vmatprep.mubr.bf16.mxu0 0
      %2578 = vmatmul.mubr.bf16.gmra.mrb[0].mxu0 %v2518
      %v2579 = vpop.f32.mrb[0].mxu0
      %v2580 = vadd.f32 0.0, %v2579
      %v2581 = vpop.f32.mrb[0].mxu0
      %v2582 = vpop.f32.mrb[0].mxu0
      %v2583 = vadd.f32 0.0, %v2582
      %v2584 = vpop.f32.mrb[0].mxu0
      %2585 = vmatprep.mubr.bf16.mxu0 0
      %2586 = vmatmul.mubr.bf16.gmra.mrb[0].mxu0 %v2521
      %v2587 = vpop.f32.mrb[0].mxu0
      %v2588 = vadd.f32 0.0, %v2587
      %v2589 = vpop.f32.mrb[0].mxu0
      %v2590 = vpop.f32.mrb[0].mxu0
      %v2591 = vadd.f32 0.0, %v2590
      %v2592 = vpop.f32.mrb[0].mxu0
      %2593 = vmatprep.mubr.bf16.mxu0 0
      %2594 = vmatmul.mubr.bf16.gmra.mrb[0].mxu0 %v2524
      %v2595 = vpop.f32.mrb[0].mxu0
      %v2596 = vadd.f32 0.0, %v2595
      %v2597 = vpop.f32.mrb[0].mxu0
      %v2598 = vpop.f32.mrb[0].mxu0
      %v2599 = vadd.f32 0.0, %v2598
      %v2600 = vpop.f32.mrb[0].mxu0
      %2601 = vmatprep.mubr.bf16.mxu0 0
      %2602 = vmatmul.mubr.bf16.gmra.mrb[0].mxu0 %v2527
      %v2603 = vpop.f32.mrb[0].mxu0
      %v2604 = vadd.f32 0.0, %v2603
      %v2605 = vpop.f32.mrb[0].mxu0
      %v2606 = vpop.f32.mrb[0].mxu0
      %v2607 = vadd.f32 0.0, %v2606
      %v2608 = vpop.f32.mrb[0].mxu0
      %2609 = vmatprep.mubr.bf16.mxu0 0
      %2610 = vmatmul.mubr.bf16.gmra.mrb[0].mxu0 %v2530
      %v2611 = vpop.f32.mrb[0].mxu0
      %v2612 = vadd.f32 0.0, %v2611
      %v2613 = vpop.f32.mrb[0].mxu0
      %v2614 = vpop.f32.mrb[0].mxu0
      %v2615 = vadd.f32 0.0, %v2614
      %v2616 = vpop.f32.mrb[0].mxu0
      %2617 = vmatprep.mubr.bf16.mxu0 0
      %2618 = vmatmul.mubr.bf16.gmra.mrb[0].mxu0 %v2533
      %v2619 = vpop.f32.mrb[0].mxu0
      %v2620 = vadd.f32 0.0, %v2619
      %v2621 = vpop.f32.mrb[0].mxu0
      %v2622 = vpop.f32.mrb[0].mxu0
      %v2623 = vadd.f32 0.0, %v2622
      %v2624 = vpop.f32.mrb[0].mxu0
      %2625 = vmatprep.mubr.bf16.mxu0 0
      %2626 = vmatmul.mubr.bf16.gmra.mrb[0].mxu0 %v2536
      %v2627 = vpop.f32.mrb[0].mxu0
      %v2628 = vadd.f32 0.0, %v2627
      %v2629 = vpop.f32.mrb[0].mxu0
      %v2630 = vpop.f32.mrb[0].mxu0
      %v2631 = vadd.f32 0.0, %v2630
      %v2632 = vpop.f32.mrb[0].mxu0
      %2633 = vmatprep.mubr.bf16.mxu0 0
      %2634 = vmatmul.mubr.bf16.gmra.mrb[0].mxu0 %v2539
      %v2635 = vpop.f32.mrb[0].mxu0
      %v2636 = vadd.f32 0.0, %v2635
      %v2637 = vpop.f32.mrb[0].mxu0
      %v2638 = vpop.f32.mrb[0].mxu0
      %v2639 = vadd.f32 0.0, %v2638
      %v2640 = vpop.f32.mrb[0].mxu0
      %2641 = vdwg.mxu0
      %v2642 = vadd.f32 %v2397, %v2580
      %v2643 = vadd.f32 %v2400, %v2583
      %v2644 = vadd.f32 %v2405, %v2588
      %v2645 = vadd.f32 %v2408, %v2591
      %v2646 = vadd.f32 %v2413, %v2596
      %v2647 = vadd.f32 %v2416, %v2599
      %v2648 = vadd.f32 %v2421, %v2604
      %v2649 = vadd.f32 %v2424, %v2607
      %v2650 = vadd.f32 %v2429, %v2612
      %v2651 = vadd.f32 %v2432, %v2615
      %v2652 = vadd.f32 %v2437, %v2620
      %v2653 = vadd.f32 %v2440, %v2623
      %v2654 = vadd.f32 %v2445, %v2628
      %v2655 = vadd.f32 %v2448, %v2631
      %v2656 = vadd.f32 %v2453, %v2636
      %v2657 = vadd.f32 %v2456, %v2639
      %v2658 = vld [vmem:[%s7] sm:$0x1]
      %v2660 = vlaneseq
      %v2661 = vshrl.u32 %v2660, 7
      %v2662 = vsub.s32 0, %v2661
      %v2663 = vrot.slane %v2658, %v2662
      %v2665 = vadd.f32 %v2642, %v2663
      %v2666 = vadd.f32 %v2643, %v2663
      %v2667 = vadd.f32 %v2644, %v2663
      %v2668 = vadd.f32 %v2645, %v2663
      %v2669 = vadd.f32 %v2646, %v2663
      %v2670 = vadd.f32 %v2647, %v2663
      %v2671 = vadd.f32 %v2648, %v2663
      %v2672 = vadd.f32 %v2649, %v2663
      %v2673 = vadd.f32 %v2650, %v2663
      %v2674 = vadd.f32 %v2651, %v2663
      %v2675 = vadd.f32 %v2652, %v2663
      %v2676 = vadd.f32 %v2653, %v2663
      %v2677 = vadd.f32 %v2654, %v2663
      %v2678 = vadd.f32 %v2655, %v2663
      %v2679 = vadd.f32 %v2656, %v2663
      %v2680 = vadd.f32 %v2657, %v2663
      %v2681 = vmax.f32 %v2665, 0.0
      %v2682 = vmax.f32 %v2666, 0.0
      %v2683 = vmax.f32 %v2667, 0.0
      %v2684 = vmax.f32 %v2668, 0.0
      %v2685 = vmax.f32 %v2669, 0.0
      %v2686 = vmax.f32 %v2670, 0.0
      %v2687 = vmax.f32 %v2671, 0.0
      %v2688 = vmax.f32 %v2672, 0.0
      %v2689 = vmax.f32 %v2673, 0.0
      %v2690 = vmax.f32 %v2674, 0.0
      %v2691 = vmax.f32 %v2675, 0.0
      %v2692 = vmax.f32 %v2676, 0.0
      %v2693 = vmax.f32 %v2677, 0.0
      %v2694 = vmax.f32 %v2678, 0.0
      %v2695 = vmax.f32 %v2679, 0.0
      %v2696 = vmax.f32 %v2680, 0.0
      %v2697 = vpack.c.bf16 %v2682, %v2681
      %v2698 = vpack.c.bf16 %v2684, %v2683
      %v2699 = vpack.c.bf16 %v2686, %v2685
      %v2700 = vpack.c.bf16 %v2688, %v2687
      %v2701 = vpack.c.bf16 %v2690, %v2689
      %v2702 = vpack.c.bf16 %v2692, %v2691
      %v2703 = vpack.c.bf16 %v2694, %v2693
      %v2704 = vpack.c.bf16 %v2696, %v2695
      %v2713 = vunpack.c.l.b16 %v2697
      %v2714 = vunpack.c.h.b16 %v2697
      %v2715 = vunpack.c.l.b16 %v2698
      %v2716 = vunpack.c.h.b16 %v2698
      %v2717 = vunpack.c.l.b16 %v2699
      %v2718 = vunpack.c.h.b16 %v2699
      %v2719 = vunpack.c.l.b16 %v2700
      %v2720 = vunpack.c.h.b16 %v2700
      %v2721 = vunpack.c.l.b16 %v2701
      %v2722 = vunpack.c.h.b16 %v2701
      %v2723 = vunpack.c.l.b16 %v2702
      %v2724 = vunpack.c.h.b16 %v2702
      %v2725 = vunpack.c.l.b16 %v2703
      %v2726 = vunpack.c.h.b16 %v2703
      %v2727 = vunpack.c.l.b16 %v2704
      %v2728 = vunpack.c.h.b16 %v2704
      %v2729 = vpack.c.b16 %v2713, %v2713
      %v2730 = vpack.c.b16 %v2714, %v2714
      %v2731 = vpack.c.b16 %v2715, %v2715
      %v2732 = vpack.c.b16 %v2716, %v2716
      %v2733 = vpack.c.b16 %v2717, %v2717
      %v2734 = vpack.c.b16 %v2718, %v2718
      %v2735 = vpack.c.b16 %v2719, %v2719
      %v2736 = vpack.c.b16 %v2720, %v2720
      %v2737 = vpack.c.b16 %v2721, %v2721
      %v2738 = vpack.c.b16 %v2722, %v2722
      %v2739 = vpack.c.b16 %v2723, %v2723
      %v2740 = vpack.c.b16 %v2724, %v2724
      %v2741 = vpack.c.b16 %v2725, %v2725
      %v2742 = vpack.c.b16 %v2726, %v2726
      %v2743 = vpack.c.b16 %v2727, %v2727
      %v2744 = vpack.c.b16 %v2728, %v2728
      %2761 = vst [vmem:[%s325] sm:$0xf] %v2729
      %2762 = vst [vmem:[%s325 + $0x4] sm:$0xf] %v2730
      %2763 = vst [vmem:[%s325 + $0x8] sm:$0xf] %v2731
      %2764 = vst [vmem:[%s325 + $0xc] sm:$0xf] %v2732
      %2765 = vst [vmem:[%s325 + $0x10] sm:$0xf] %v2733
      %2766 = vst [vmem:[%s325 + $0x14] sm:$0xf] %v2734
      %2767 = vst [vmem:[%s325 + $0x18] sm:$0xf] %v2735
      %2768 = vst [vmem:[%s325 + $0x1c] sm:$0xf] %v2736
      %2769 = vst [vmem:[%s325 + $0x20] sm:$0xf] %v2737
      %2770 = vst [vmem:[%s325 + $0x24] sm:$0xf] %v2738
      %2771 = vst [vmem:[%s325 + $0x28] sm:$0xf] %v2739
      %2772 = vst [vmem:[%s325 + $0x2c] sm:$0xf] %v2740
      %2773 = vst [vmem:[%s325 + $0x30] sm:$0xf] %v2741
      %2774 = vst [vmem:[%s325 + $0x34] sm:$0xf] %v2742
      %2775 = vst [vmem:[%s325 + $0x38] sm:$0xf] %v2743
      %2776 = vst [vmem:[%s325 + $0x3c] sm:$0xf] %v2744
      %p2777 = scmp.lt.s32.totalorder %s19, 1
      %s2778 = scalar_select %p2777, %s19, 1
      %s2779 = smul.addr %s2778, 16
      %s2780 = smul.addr %s2779, 4
      %s2781 = scalar_lea.vmem %s8, %s2780
      // Predicated region
      $region53: #{bottleneck_forward.3} parent=51 // pred_check
        %p2782 = pneg %p215
      $region54: #{bottleneck_forward.3} parent=51 // pred_check_branch
        %2784 = sbr.rel (%p2782) target = $region56
      $region55: #{bottleneck_forward.3} parent=51 // pred_region
        _
      $region56: #{bottleneck_forward.3} parent=51 // pred_fallthru
        _
    $region52: #{bottleneck_forward.3} parent=5 // pred_fallthru
      _
    %p2785 = scmp.le.s32.totalorder 2, %s14
    // Predicated region
    $region57: #{bottleneck_forward.3} parent=5 // pred_check
      %p2786 = pneg %p2785
    $region58: #{bottleneck_forward.3} parent=5 // pred_check_branch
      %2788 = sbr.rel (%p2786) target = $region60
    $region59: #{bottleneck_forward.3} parent=5 // pred_region
      %s2789 = ssub.s32 %s14, 2
      // Predicated region
      $region61: #{bottleneck_forward.3} parent=59 // pred_check
        %p2790 = pneg %p221
      $region62: #{bottleneck_forward.3} parent=59 // pred_check_branch
        %2792 = sbr.rel (%p2790) target = $region64
      $region63: #{bottleneck_forward.3} parent=59 // pred_region
        %p2793 = scmp.lt.s32.totalorder %s20, 1
        %s2794 = scalar_select %p2793, %s20, 1
        %s2795 = smul.addr %s2794, 16
        %s2796 = smul.addr %s2795, 4
        %s2797 = scalar_lea.vmem %s8, %s2796
      $region64: #{bottleneck_forward.3} parent=59 // pred_fallthru
        _
    $region60: #{bottleneck_forward.3} parent=5 // pred_fallthru
      _
  $region6: #{bottleneck_forward.3} parent=0 // loop_footer
    %s18 = sadd.s32 1, %s14
  $region7: #{bottleneck_forward.3} parent=0 // loop_footer_branch
    %13 = sbr.rel target = $region3
  $region8: #{bottleneck_forward.3} parent=0 // loop_exit
    _

</llo_original>
